<compile_context>
chip_gen: v7x
topology: tpu7x:2x2x1
jax: 0.10.0
libtpu: 0.0.40
codegen_flags: <defaults>
</compile_context>

<pallas_src>
import functools

import jax
import jax.numpy as jnp
from jax.experimental import pallas as pl
from jax.experimental.pallas import tpu as pltpu


LANE = 128          # TPU lane width; all slabs / output are padded to multiples of this.
BF16_SUBLANE = 16   # bf16 sublane tile height; bf16-slab segments start at multiples of this.


def _round_up(a, b):
    return (a + b - 1) // b * b


def _layernorm(h, gamma, beta, eps=1e-5):
    # PyTorch LayerNorm: biased variance, eps inside rsqrt, affine applied after normalize.
    mu = jnp.mean(h, axis=-1, keepdims=True)
    var = jnp.mean((h - mu) * (h - mu), axis=-1, keepdims=True)
    return (h - mu) * jax.lax.rsqrt(var + eps) * gamma + beta


def _bf16_dot(a_f32, w_bf16):
    # Activations live in f32; cast only at the MXU input (weights are stored bf16).
    return jnp.dot(a_f32.astype(jnp.bfloat16), w_bf16, preferred_element_type=jnp.float32)


def logic_transformer_kernel(x_ref, bias_ref, b1_ref, wsm_ref, w1_ref, w2_ref, o_ref, *, cfg):
    d = cfg["d_model"]
    L = cfg["num_layers"]
    xs = cfg["x_size"]
    y_pad = cfg["y_pad"]

    def bvec(row, width=d):
        # one packed bias / LN vector, as a (1, width) f32 row (static slice of the bias slab)
        return bias_ref[row:row + 1, :width]

    # --- embedding: (B, XSize) @ (XSize, d_model) + b ---
    emb_w = wsm_ref[0:xs, :d]
    h = _bf16_dot(x_ref[...], emb_w) + bvec(0)

    # --- encoder layers, statically unrolled (all per-layer slices are static) ---
    for l in range(L):
        r = 1 + 6 * l
        # self-attention folded to one matmul (exact at seq_len == 1: softmax == 1)
        a0 = cfg["attn_w_row"] + l * cfg["attn_w_stride"]
        attn = _bf16_dot(h, wsm_ref[a0:a0 + d, :d]) + bvec(r + 0)
        h = _layernorm(h + attn, bvec(r + 1), bvec(r + 2))          # residual + norm1 (post-norm)

        # feed-forward: Linear -> ReLU -> Linear (w2 lane-dense, sliced per layer along lanes)
        f = jnp.maximum(_bf16_dot(h, w1_ref[l]) + b1_ref[l:l + 1, :], 0.0)
        f = _bf16_dot(f, w2_ref[:, l * d:(l + 1) * d]) + bvec(r + 3)
        if l == L - 1:
            # last layer's ln2 affine is folded into the output head on the host
            h = _layernorm(h + f, 1.0, 0.0)
        else:
            h = _layernorm(h + f, bvec(r + 4), bvec(r + 5))          # residual + norm2

    # --- output head, lane-dense padded: (B, d_model) @ (d_model, y_pad) + b ---
    out_w = wsm_ref[cfg["out_w_row"]:cfg["out_w_row"] + d, :y_pad]
    o_ref[...] = (_bf16_dot(h, out_w) + bvec(1 + 6 * L, y_pad)).astype(o_ref.dtype)


def prepare_params(params):
    """Host-side folding / packing / padding / bf16 casting.

    Returns (arrays, cfg): `arrays` is the pytree of device arrays passed through jit,
    `cfg` is a plain-python dict of static sizes / slab row offsets (closure constant).
    """
    emb_w = params["emb_w"]                                  # (XSize, d_model)
    XSize, d_model = emb_w.shape
    wv, bv, wo, bo = params["wv"], params["bv"], params["wo"], params["bo"]
    L = wv.shape[0]
    dim_ff = params["w1"].shape[-1]
    YSize = params["out_w"].shape[-1]

    # Fold attention (exact ONLY because seq_len == 1): out_proj(V) = h @ (Wv Wo) + (bv Wo + bo).
    w_attn = jnp.einsum("lij,ljk->lik", wv, wo)              # (L, d, d)
    b_attn = jnp.einsum("lrj,ljk->lrk", bv, wo) + bo         # (L, 1, d)

    # Fold the LAST layer's ln2 affine into the output head (exact):
    #   (n(z)*g + b) @ W + c == n(z) @ (diag(g) W) + (b @ W + c)
    g_last = params["ln2_g"][L - 1]                          # (1, d)
    b_last = params["ln2_b"][L - 1]                          # (1, d)
    out_w = params["out_w"] * g_last.T                       # (d, Y)
    out_b = b_last @ params["out_w"] + params["out_b"]       # (1, Y)

    y_pad = _round_up(max(YSize, LANE), LANE)                # lane-dense output width
    wpad = max(_round_up(d_model, LANE), y_pad)              # slab lane width

    def lane_pad(v, width=wpad):                             # (1, c) -> (1, width) f32
        return jnp.zeros((1, width), jnp.float32).at[:, :v.shape[-1]].set(v)

    # ---- bias slab: one f32 row per small vector -> a single DMA instead of ~13 ----
    rows = [lane_pad(params["emb_b"])]                                           # row 0
    for l in range(L):                                                           # rows 1+6l .. 6+6l
        rows += [lane_pad(b_attn[l]),
                 lane_pad(params["ln1_g"][l]), lane_pad(params["ln1_b"][l]),
                 lane_pad(params["b2"][l]),
                 lane_pad(params["ln2_g"][l]), lane_pad(params["ln2_b"][l])]     # last layer's
        # ln2 rows are kept for uniform indexing but unused (folded into the head).
    rows.append(lane_pad(out_b))                                                 # row 1+6L
    bias_slab = jnp.concatenate(rows, axis=0)                                    # (2+6L, wpad) f32

    # ---- small-weight slab (bf16): emb_w | w_attn[0..L-1] | out_w, 16-row aligned segments ----
    def seg(mat, n_rows):
        r, c = mat.shape
        return jnp.zeros((n_rows, wpad), jnp.float32).at[:r, :c].set(mat)

    x_rows = _round_up(XSize, BF16_SUBLANE)
    d_rows = _round_up(d_model, BF16_SUBLANE)
    out_w_p = jnp.zeros((d_model, y_pad), jnp.float32).at[:, :YSize].set(out_w)
    segs = [seg(emb_w, x_rows)]
    segs += [seg(w_attn[l], d_rows) for l in range(L)]
    segs.append(seg(out_w_p, d_rows))
    wsm = jnp.concatenate(segs, axis=0).astype(jnp.bfloat16)

    # ---- big FFN weights: w1 stacked (already lane-dense), w2 packed lane-dense (dim_ff, L*d) ----
    w1 = params["w1"].astype(jnp.bfloat16)                                  # (L, d, dim_ff)
    w2_dense = jnp.transpose(params["w2"], (1, 0, 2)).reshape(dim_ff, L * d_model)
    w2_dense = w2_dense.astype(jnp.bfloat16)                                # (dim_ff, L*d)
    b1 = params["b1"].reshape(L, dim_ff).astype(jnp.float32)                # (L, dim_ff)

    arrays = {"bias": bias_slab, "b1": b1, "wsm": wsm, "w1": w1, "w2": w2_dense}
    cfg = {
        "x_size": int(XSize), "d_model": int(d_model), "dim_ff": int(dim_ff),
        "num_layers": int(L), "y_size": int(YSize), "y_pad": int(y_pad),
        "attn_w_row": int(x_rows), "attn_w_stride": int(d_rows),
        "out_w_row": int(x_rows + L * d_rows),
    }
    return arrays, cfg


def logic_transformer_forward(x, arrays, *, cfg):
    """x: (B, XSize) f32 -> (B, YSize) f32. Whole forward is one flat grid-less pallas_call."""
    B = x.shape[0]
    d, dff, L, y_pad = cfg["d_model"], cfg["dim_ff"], cfg["num_layers"], cfg["y_pad"]

    args = (x, arrays["bias"], arrays["b1"], arrays["wsm"], arrays["w1"], arrays["w2"])

    flops = 2 * B * (cfg["x_size"] * d + L * (d * d + 2 * d * dff) + d * y_pad)
    bytes_accessed = sum(int(a.size) * a.dtype.itemsize for a in args) + B * y_pad * 4
    cost = pl.CostEstimate(flops=flops, transcendentals=2 * L * B, bytes_accessed=bytes_accessed)

    vmem = pl.BlockSpec(memory_space=pltpu.MemorySpace.VMEM)
    out_padded = pl.pallas_call(
        functools.partial(logic_transformer_kernel, cfg=cfg),
        out_shape=jax.ShapeDtypeStruct((B, y_pad), jnp.float32),
        in_specs=[vmem] * len(args),
        out_specs=vmem,
        compiler_params=pltpu.CompilerParams(vmem_limit_bytes=4 << 20),
        cost_estimate=cost,
    )(*args)
    return out_padded[:, :cfg["y_size"]]          # cfg["y_size"] is a static python int


def init_params(key, XSize, YSize, d_model=64, num_layers=2, dim_ff=2048):
    """Deterministic synthetic parameters (weights stored as (in, out), biases as row vectors)."""
    keys = jax.random.split(key, 16)
    k = iter(keys)
    scale = 0.02

    def w(kk, shape):
        return (scale * jax.random.normal(kk, shape)).astype(jnp.float32)

    return {
        "emb_w": w(next(k), (XSize, d_model)),
        "emb_b": w(next(k), (1, d_model)),
        "wv":    w(next(k), (num_layers, d_model, d_model)),
        "bv":    w(next(k), (num_layers, 1, d_model)),
        "wo":    w(next(k), (num_layers, d_model, d_model)),
        "bo":    w(next(k), (num_layers, 1, d_model)),
        "ln1_g": jnp.ones((num_layers, 1, d_model), jnp.float32),
        "ln1_b": jnp.zeros((num_layers, 1, d_model), jnp.float32),
        "w1":    w(next(k), (num_layers, d_model, dim_ff)),
        "b1":    w(next(k), (num_layers, 1, dim_ff)),
        "w2":    w(next(k), (num_layers, dim_ff, d_model)),
        "b2":    w(next(k), (num_layers, 1, d_model)),
        "ln2_g": jnp.ones((num_layers, 1, d_model), jnp.float32),
        "ln2_b": jnp.zeros((num_layers, 1, d_model), jnp.float32),
        "out_w": w(next(k), (d_model, YSize)),
        "out_b": w(next(k), (1, YSize)),
    }


def reference_forward(x, params):
    """Pure-JAX f32 mirror of the PyTorch math (unfolded attention), for correctness cross-check."""
    h = x @ params["emb_w"] + params["emb_b"]
    L = params["wv"].shape[0]
    for l in range(L):
        v = h @ params["wv"][l] + params["bv"][l]
        attn = v @ params["wo"][l] + params["bo"][l]
        h = _layernorm(h + attn, params["ln1_g"][l], params["ln1_b"][l])
        f = jnp.maximum(h @ params["w1"][l] + params["b1"][l], 0.0)
        f = f @ params["w2"][l] + params["b2"][l]
        h = _layernorm(h + f, params["ln2_g"][l], params["ln2_b"][l])
    return h @ params["out_w"] + params["out_b"]


if __name__ == "__main__":
    B, XSize, YSize = 8, 16, 8
    d_model, num_layers, dim_ff = 64, 2, 2048   # nhead has no mathematical effect at seq_len == 1

    key = jax.random.PRNGKey(0)
    k_x, k_p = jax.random.split(key)
    x = jax.random.normal(k_x, (B, XSize), dtype=jnp.float32)
    params = init_params(k_p, XSize, YSize, d_model=d_model,
                         num_layers=num_layers, dim_ff=dim_ff)

    arrays, cfg = prepare_params(params)        # host-side fold / pack / pad / bf16 cast, done once
    fwd = jax.jit(functools.partial(logic_transformer_forward, cfg=cfg))
    out = jax.block_until_ready(fwd(x, arrays))

    ref = reference_forward(x, params)          # full-f32 reference of the original module math
    assert out.shape == (B, YSize)
    # bf16 weight storage introduces small rounding differences vs the f32 reference.
    assert jnp.allclose(out, ref, atol=2e-2, rtol=2e-2), "Pallas kernel mismatch vs JAX reference"

    print("KERNEL_OK")
</pallas_src>

<mosaic_0001>
module attributes {stable_mosaic.version = 11 : i64} {
  func.func @logic_transformer_kernel(%arg0: memref<8x16xf32, #tpu.memory_space<vmem>>, %arg1: memref<14x128xf32, #tpu.memory_space<vmem>>, %arg2: memref<2x2048xf32, #tpu.memory_space<vmem>>, %arg3: memref<208x128xbf16, #tpu.memory_space<vmem>>, %arg4: memref<2x64x2048xbf16, #tpu.memory_space<vmem>>, %arg5: memref<2048x128xbf16, #tpu.memory_space<vmem>>, %arg6: memref<8x128xf32, #tpu.memory_space<vmem>>) attributes {dimension_semantics = [], scalar_prefetch = 0 : i64, scratch_operands = 0 : i64, tpu.core_type = #tpu.core_type<tc>} {
    %c0 = arith.constant 0 : index
    %c0_0 = arith.constant 0 : index
    %0 = vector.load %arg3[%c0, %c0_0] : memref<208x128xbf16, #tpu.memory_space<vmem>>, vector<16x64xbf16>
    %c0_1 = arith.constant 0 : index
    %c0_2 = arith.constant 0 : index
    %1 = vector.load %arg0[%c0_1, %c0_2] : memref<8x16xf32, #tpu.memory_space<vmem>>, vector<8x16xf32>
    %2 = arith.truncf %1 : vector<8x16xf32> to vector<8x16xbf16>
    %cst = arith.constant dense<0.000000e+00> : vector<8x64xf32>
    %3 = tpu.matmul %2, %0, %cst {dimension_numbers = #tpu.dot_dimension_numbers<[1], [0], [0], [1], [0, 0, 1, 1], [], []>} : vector<8x16xbf16>, vector<16x64xbf16>, vector<8x64xf32> -> vector<8x64xf32>
    %c0_3 = arith.constant 0 : index
    %c0_4 = arith.constant 0 : index
    %4 = vector.load %arg1[%c0_3, %c0_4] : memref<14x128xf32, #tpu.memory_space<vmem>>, vector<1x64xf32>
    %5 = vector.broadcast %4 : vector<1x64xf32> to vector<8x64xf32>
    %6 = arith.addf %3, %5 : vector<8x64xf32>
    %c16 = arith.constant 16 : index
    %c0_5 = arith.constant 0 : index
    %7 = vector.load %arg3[%c16, %c0_5] : memref<208x128xbf16, #tpu.memory_space<vmem>>, vector<64x64xbf16>
    %8 = arith.truncf %6 : vector<8x64xf32> to vector<8x64xbf16>
    %cst_6 = arith.constant dense<0.000000e+00> : vector<8x64xf32>
    %9 = tpu.matmul %8, %7, %cst_6 {dimension_numbers = #tpu.dot_dimension_numbers<[1], [0], [0], [1], [0, 0, 1, 1], [], []>} : vector<8x64xbf16>, vector<64x64xbf16>, vector<8x64xf32> -> vector<8x64xf32>
    %c1 = arith.constant 1 : index
    %c0_7 = arith.constant 0 : index
    %10 = vector.load %arg1[%c1, %c0_7] : memref<14x128xf32, #tpu.memory_space<vmem>>, vector<1x64xf32>
    %11 = vector.broadcast %10 : vector<1x64xf32> to vector<8x64xf32>
    %12 = arith.addf %9, %11 : vector<8x64xf32>
    %13 = arith.addf %6, %12 : vector<8x64xf32>
    %c2 = arith.constant 2 : index
    %c0_8 = arith.constant 0 : index
    %14 = vector.load %arg1[%c2, %c0_8] : memref<14x128xf32, #tpu.memory_space<vmem>>, vector<1x64xf32>
    %c3 = arith.constant 3 : index
    %c0_9 = arith.constant 0 : index
    %15 = vector.load %arg1[%c3, %c0_9] : memref<14x128xf32, #tpu.memory_space<vmem>>, vector<1x64xf32>
    %cst_10 = arith.constant dense<0.000000e+00> : vector<8xf32>
    %16 = vector.multi_reduction <add>, %13, %cst_10 [1] : vector<8x64xf32> to vector<8xf32>
    %17 = vector.shape_cast %16 : vector<8xf32> to vector<8x1xf32>
    %cst_11 = arith.constant 6.400000e+01 : f32
    %18 = vector.broadcast %cst_11 : f32 to vector<8x1xf32>
    %19 = arith.divf %17, %18 : vector<8x1xf32>
    %20 = vector.broadcast %19 : vector<8x1xf32> to vector<8x64xf32>
    %21 = arith.subf %13, %20 : vector<8x64xf32>
    %22 = vector.broadcast %19 : vector<8x1xf32> to vector<8x64xf32>
    %23 = arith.subf %13, %22 : vector<8x64xf32>
    %24 = arith.mulf %21, %23 : vector<8x64xf32>
    %cst_12 = arith.constant dense<0.000000e+00> : vector<8xf32>
    %25 = vector.multi_reduction <add>, %24, %cst_12 [1] : vector<8x64xf32> to vector<8xf32>
    %26 = vector.shape_cast %25 : vector<8xf32> to vector<8x1xf32>
    %cst_13 = arith.constant 6.400000e+01 : f32
    %27 = vector.broadcast %cst_13 : f32 to vector<8x1xf32>
    %28 = arith.divf %26, %27 : vector<8x1xf32>
    %29 = vector.broadcast %19 : vector<8x1xf32> to vector<8x64xf32>
    %30 = arith.subf %13, %29 : vector<8x64xf32>
    %cst_14 = arith.constant 9.99999974E-6 : f32
    %31 = vector.broadcast %cst_14 : f32 to vector<8x1xf32>
    %32 = arith.addf %28, %31 : vector<8x1xf32>
    %33 = math.rsqrt %32 : vector<8x1xf32>
    %34 = vector.broadcast %33 : vector<8x1xf32> to vector<8x64xf32>
    %35 = arith.mulf %30, %34 : vector<8x64xf32>
    %36 = vector.broadcast %14 : vector<1x64xf32> to vector<8x64xf32>
    %37 = arith.mulf %35, %36 : vector<8x64xf32>
    %38 = vector.broadcast %15 : vector<1x64xf32> to vector<8x64xf32>
    %39 = arith.addf %37, %38 : vector<8x64xf32>
    %c0_15 = arith.constant 0 : index
    %c0_16 = arith.constant 0 : index
    %c0_17 = arith.constant 0 : index
    %40 = vector.load %arg4[%c0_15, %c0_16, %c0_17] : memref<2x64x2048xbf16, #tpu.memory_space<vmem>>, vector<1x64x2048xbf16>
    %41 = vector.shape_cast %40 : vector<1x64x2048xbf16> to vector<64x2048xbf16>
    %42 = arith.truncf %39 : vector<8x64xf32> to vector<8x64xbf16>
    %cst_18 = arith.constant dense<0.000000e+00> : vector<8x2048xf32>
    %43 = tpu.matmul %42, %41, %cst_18 {dimension_numbers = #tpu.dot_dimension_numbers<[1], [0], [0], [1], [0, 0, 1, 1], [], []>} : vector<8x64xbf16>, vector<64x2048xbf16>, vector<8x2048xf32> -> vector<8x2048xf32>
    %c0_19 = arith.constant 0 : index
    %c0_20 = arith.constant 0 : index
    %44 = vector.load %arg2[%c0_19, %c0_20] : memref<2x2048xf32, #tpu.memory_space<vmem>>, vector<1x2048xf32>
    %45 = vector.broadcast %44 : vector<1x2048xf32> to vector<8x2048xf32>
    %46 = arith.addf %43, %45 : vector<8x2048xf32>
    %cst_21 = arith.constant 0.000000e+00 : f32
    %47 = vector.broadcast %cst_21 : f32 to vector<8x2048xf32>
    %48 = arith.maximumf %46, %47 : vector<8x2048xf32>
    %c0_22 = arith.constant 0 : index
    %c0_23 = arith.constant 0 : index
    %49 = vector.load %arg5[%c0_22, %c0_23] : memref<2048x128xbf16, #tpu.memory_space<vmem>>, vector<2048x64xbf16>
    %50 = arith.truncf %48 : vector<8x2048xf32> to vector<8x2048xbf16>
    %cst_24 = arith.constant dense<0.000000e+00> : vector<8x64xf32>
    %51 = tpu.matmul %50, %49, %cst_24 {dimension_numbers = #tpu.dot_dimension_numbers<[1], [0], [0], [1], [0, 0, 1, 1], [], []>} : vector<8x2048xbf16>, vector<2048x64xbf16>, vector<8x64xf32> -> vector<8x64xf32>
    %c4 = arith.constant 4 : index
    %c0_25 = arith.constant 0 : index
    %52 = vector.load %arg1[%c4, %c0_25] : memref<14x128xf32, #tpu.memory_space<vmem>>, vector<1x64xf32>
    %53 = vector.broadcast %52 : vector<1x64xf32> to vector<8x64xf32>
    %54 = arith.addf %51, %53 : vector<8x64xf32>
    %55 = arith.addf %39, %54 : vector<8x64xf32>
    %c5 = arith.constant 5 : index
    %c0_26 = arith.constant 0 : index
    %56 = vector.load %arg1[%c5, %c0_26] : memref<14x128xf32, #tpu.memory_space<vmem>>, vector<1x64xf32>
    %c6 = arith.constant 6 : index
    %c0_27 = arith.constant 0 : index
    %57 = vector.load %arg1[%c6, %c0_27] : memref<14x128xf32, #tpu.memory_space<vmem>>, vector<1x64xf32>
    %cst_28 = arith.constant dense<0.000000e+00> : vector<8xf32>
    %58 = vector.multi_reduction <add>, %55, %cst_28 [1] : vector<8x64xf32> to vector<8xf32>
    %59 = vector.shape_cast %58 : vector<8xf32> to vector<8x1xf32>
    %cst_29 = arith.constant 6.400000e+01 : f32
    %60 = vector.broadcast %cst_29 : f32 to vector<8x1xf32>
    %61 = arith.divf %59, %60 : vector<8x1xf32>
    %62 = vector.broadcast %61 : vector<8x1xf32> to vector<8x64xf32>
    %63 = arith.subf %55, %62 : vector<8x64xf32>
    %64 = vector.broadcast %61 : vector<8x1xf32> to vector<8x64xf32>
    %65 = arith.subf %55, %64 : vector<8x64xf32>
    %66 = arith.mulf %63, %65 : vector<8x64xf32>
    %cst_30 = arith.constant dense<0.000000e+00> : vector<8xf32>
    %67 = vector.multi_reduction <add>, %66, %cst_30 [1] : vector<8x64xf32> to vector<8xf32>
    %68 = vector.shape_cast %67 : vector<8xf32> to vector<8x1xf32>
    %cst_31 = arith.constant 6.400000e+01 : f32
    %69 = vector.broadcast %cst_31 : f32 to vector<8x1xf32>
    %70 = arith.divf %68, %69 : vector<8x1xf32>
    %71 = vector.broadcast %61 : vector<8x1xf32> to vector<8x64xf32>
    %72 = arith.subf %55, %71 : vector<8x64xf32>
    %cst_32 = arith.constant 9.99999974E-6 : f32
    %73 = vector.broadcast %cst_32 : f32 to vector<8x1xf32>
    %74 = arith.addf %70, %73 : vector<8x1xf32>
    %75 = math.rsqrt %74 : vector<8x1xf32>
    %76 = vector.broadcast %75 : vector<8x1xf32> to vector<8x64xf32>
    %77 = arith.mulf %72, %76 : vector<8x64xf32>
    %78 = vector.broadcast %56 : vector<1x64xf32> to vector<8x64xf32>
    %79 = arith.mulf %77, %78 : vector<8x64xf32>
    %80 = vector.broadcast %57 : vector<1x64xf32> to vector<8x64xf32>
    %81 = arith.addf %79, %80 : vector<8x64xf32>
    %c80 = arith.constant 80 : index
    %c0_33 = arith.constant 0 : index
    %82 = vector.load %arg3[%c80, %c0_33] : memref<208x128xbf16, #tpu.memory_space<vmem>>, vector<64x64xbf16>
    %83 = arith.truncf %81 : vector<8x64xf32> to vector<8x64xbf16>
    %cst_34 = arith.constant dense<0.000000e+00> : vector<8x64xf32>
    %84 = tpu.matmul %83, %82, %cst_34 {dimension_numbers = #tpu.dot_dimension_numbers<[1], [0], [0], [1], [0, 0, 1, 1], [], []>} : vector<8x64xbf16>, vector<64x64xbf16>, vector<8x64xf32> -> vector<8x64xf32>
    %c7 = arith.constant 7 : index
    %c0_35 = arith.constant 0 : index
    %85 = vector.load %arg1[%c7, %c0_35] : memref<14x128xf32, #tpu.memory_space<vmem>>, vector<1x64xf32>
    %86 = vector.broadcast %85 : vector<1x64xf32> to vector<8x64xf32>
    %87 = arith.addf %84, %86 : vector<8x64xf32>
    %88 = arith.addf %81, %87 : vector<8x64xf32>
    %c8 = arith.constant 8 : index
    %c0_36 = arith.constant 0 : index
    %89 = vector.load %arg1[%c8, %c0_36] : memref<14x128xf32, #tpu.memory_space<vmem>>, vector<1x64xf32>
    %c9 = arith.constant 9 : index
    %c0_37 = arith.constant 0 : index
    %90 = vector.load %arg1[%c9, %c0_37] : memref<14x128xf32, #tpu.memory_space<vmem>>, vector<1x64xf32>
    %cst_38 = arith.constant dense<0.000000e+00> : vector<8xf32>
    %91 = vector.multi_reduction <add>, %88, %cst_38 [1] : vector<8x64xf32> to vector<8xf32>
    %92 = vector.shape_cast %91 : vector<8xf32> to vector<8x1xf32>
    %cst_39 = arith.constant 6.400000e+01 : f32
    %93 = vector.broadcast %cst_39 : f32 to vector<8x1xf32>
    %94 = arith.divf %92, %93 : vector<8x1xf32>
    %95 = vector.broadcast %94 : vector<8x1xf32> to vector<8x64xf32>
    %96 = arith.subf %88, %95 : vector<8x64xf32>
    %97 = vector.broadcast %94 : vector<8x1xf32> to vector<8x64xf32>
    %98 = arith.subf %88, %97 : vector<8x64xf32>
    %99 = arith.mulf %96, %98 : vector<8x64xf32>
    %cst_40 = arith.constant dense<0.000000e+00> : vector<8xf32>
    %100 = vector.multi_reduction <add>, %99, %cst_40 [1] : vector<8x64xf32> to vector<8xf32>
    %101 = vector.shape_cast %100 : vector<8xf32> to vector<8x1xf32>
    %cst_41 = arith.constant 6.400000e+01 : f32
    %102 = vector.broadcast %cst_41 : f32 to vector<8x1xf32>
    %103 = arith.divf %101, %102 : vector<8x1xf32>
    %104 = vector.broadcast %94 : vector<8x1xf32> to vector<8x64xf32>
    %105 = arith.subf %88, %104 : vector<8x64xf32>
    %cst_42 = arith.constant 9.99999974E-6 : f32
    %106 = vector.broadcast %cst_42 : f32 to vector<8x1xf32>
    %107 = arith.addf %103, %106 : vector<8x1xf32>
    %108 = math.rsqrt %107 : vector<8x1xf32>
    %109 = vector.broadcast %108 : vector<8x1xf32> to vector<8x64xf32>
    %110 = arith.mulf %105, %109 : vector<8x64xf32>
    %111 = vector.broadcast %89 : vector<1x64xf32> to vector<8x64xf32>
    %112 = arith.mulf %110, %111 : vector<8x64xf32>
    %113 = vector.broadcast %90 : vector<1x64xf32> to vector<8x64xf32>
    %114 = arith.addf %112, %113 : vector<8x64xf32>
    %c1_43 = arith.constant 1 : index
    %c0_44 = arith.constant 0 : index
    %c0_45 = arith.constant 0 : index
    %115 = vector.load %arg4[%c1_43, %c0_44, %c0_45] : memref<2x64x2048xbf16, #tpu.memory_space<vmem>>, vector<1x64x2048xbf16>
    %116 = vector.shape_cast %115 : vector<1x64x2048xbf16> to vector<64x2048xbf16>
    %117 = arith.truncf %114 : vector<8x64xf32> to vector<8x64xbf16>
    %cst_46 = arith.constant dense<0.000000e+00> : vector<8x2048xf32>
    %118 = tpu.matmul %117, %116, %cst_46 {dimension_numbers = #tpu.dot_dimension_numbers<[1], [0], [0], [1], [0, 0, 1, 1], [], []>} : vector<8x64xbf16>, vector<64x2048xbf16>, vector<8x2048xf32> -> vector<8x2048xf32>
    %c1_47 = arith.constant 1 : index
    %c0_48 = arith.constant 0 : index
    %119 = vector.load %arg2[%c1_47, %c0_48] : memref<2x2048xf32, #tpu.memory_space<vmem>>, vector<1x2048xf32>
    %120 = vector.broadcast %119 : vector<1x2048xf32> to vector<8x2048xf32>
    %121 = arith.addf %118, %120 : vector<8x2048xf32>
    %cst_49 = arith.constant 0.000000e+00 : f32
    %122 = vector.broadcast %cst_49 : f32 to vector<8x2048xf32>
    %123 = arith.maximumf %121, %122 : vector<8x2048xf32>
    %c0_50 = arith.constant 0 : index
    %c64 = arith.constant 64 : index
    %124 = vector.load %arg5[%c0_50, %c64] : memref<2048x128xbf16, #tpu.memory_space<vmem>>, vector<2048x64xbf16>
    %125 = arith.truncf %123 : vector<8x2048xf32> to vector<8x2048xbf16>
    %cst_51 = arith.constant dense<0.000000e+00> : vector<8x64xf32>
    %126 = tpu.matmul %125, %124, %cst_51 {dimension_numbers = #tpu.dot_dimension_numbers<[1], [0], [0], [1], [0, 0, 1, 1], [], []>} : vector<8x2048xbf16>, vector<2048x64xbf16>, vector<8x64xf32> -> vector<8x64xf32>
    %c10 = arith.constant 10 : index
    %c0_52 = arith.constant 0 : index
    %127 = vector.load %arg1[%c10, %c0_52] : memref<14x128xf32, #tpu.memory_space<vmem>>, vector<1x64xf32>
    %128 = vector.broadcast %127 : vector<1x64xf32> to vector<8x64xf32>
    %129 = arith.addf %126, %128 : vector<8x64xf32>
    %130 = arith.addf %114, %129 : vector<8x64xf32>
    %cst_53 = arith.constant dense<0.000000e+00> : vector<8xf32>
    %131 = vector.multi_reduction <add>, %130, %cst_53 [1] : vector<8x64xf32> to vector<8xf32>
    %132 = vector.shape_cast %131 : vector<8xf32> to vector<8x1xf32>
    %cst_54 = arith.constant 6.400000e+01 : f32
    %133 = vector.broadcast %cst_54 : f32 to vector<8x1xf32>
    %134 = arith.divf %132, %133 : vector<8x1xf32>
    %135 = vector.broadcast %134 : vector<8x1xf32> to vector<8x64xf32>
    %136 = arith.subf %130, %135 : vector<8x64xf32>
    %137 = vector.broadcast %134 : vector<8x1xf32> to vector<8x64xf32>
    %138 = arith.subf %130, %137 : vector<8x64xf32>
    %139 = arith.mulf %136, %138 : vector<8x64xf32>
    %cst_55 = arith.constant dense<0.000000e+00> : vector<8xf32>
    %140 = vector.multi_reduction <add>, %139, %cst_55 [1] : vector<8x64xf32> to vector<8xf32>
    %141 = vector.shape_cast %140 : vector<8xf32> to vector<8x1xf32>
    %cst_56 = arith.constant 6.400000e+01 : f32
    %142 = vector.broadcast %cst_56 : f32 to vector<8x1xf32>
    %143 = arith.divf %141, %142 : vector<8x1xf32>
    %144 = vector.broadcast %134 : vector<8x1xf32> to vector<8x64xf32>
    %145 = arith.subf %130, %144 : vector<8x64xf32>
    %cst_57 = arith.constant 9.99999974E-6 : f32
    %146 = vector.broadcast %cst_57 : f32 to vector<8x1xf32>
    %147 = arith.addf %143, %146 : vector<8x1xf32>
    %148 = math.rsqrt %147 : vector<8x1xf32>
    %149 = vector.broadcast %148 : vector<8x1xf32> to vector<8x64xf32>
    %150 = arith.mulf %145, %149 : vector<8x64xf32>
    %cst_58 = arith.constant 1.000000e+00 : f32
    %151 = vector.broadcast %cst_58 : f32 to vector<8x64xf32>
    %152 = arith.mulf %150, %151 : vector<8x64xf32>
    %cst_59 = arith.constant 0.000000e+00 : f32
    %153 = vector.broadcast %cst_59 : f32 to vector<8x64xf32>
    %154 = arith.addf %152, %153 : vector<8x64xf32>
    %c144 = arith.constant 144 : index
    %c0_60 = arith.constant 0 : index
    %155 = vector.load %arg3[%c144, %c0_60] : memref<208x128xbf16, #tpu.memory_space<vmem>>, vector<64x128xbf16>
    %156 = arith.truncf %154 : vector<8x64xf32> to vector<8x64xbf16>
    %cst_61 = arith.constant dense<0.000000e+00> : vector<8x128xf32>
    %157 = tpu.matmul %156, %155, %cst_61 {dimension_numbers = #tpu.dot_dimension_numbers<[1], [0], [0], [1], [0, 0, 1, 1], [], []>} : vector<8x64xbf16>, vector<64x128xbf16>, vector<8x128xf32> -> vector<8x128xf32>
    %c13 = arith.constant 13 : index
    %c0_62 = arith.constant 0 : index
    %158 = vector.load %arg1[%c13, %c0_62] : memref<14x128xf32, #tpu.memory_space<vmem>>, vector<1x128xf32>
    %159 = vector.broadcast %158 : vector<1x128xf32> to vector<8x128xf32>
    %160 = arith.addf %157, %159 : vector<8x128xf32>
    %c0_63 = arith.constant 0 : index
    %c0_64 = arith.constant 0 : index
    %161 = vector.load %arg6[%c0_63, %c0_64] : memref<8x128xf32, #tpu.memory_space<vmem>>, vector<8x128xf32>
    tpu.vector_store %arg6[%c0_63, %c0_64], %160 {strides = array<i32>} : memref<8x128xf32, #tpu.memory_space<vmem>>, vector<8x128xf32>,
    return
  }
}

</mosaic_0001>

<llo_original>
// kernel: logic_transformer_forward.1
$region0: #{logic_transformer_forward.1}
  #allocation0 [shape = 'u32[]', space=smem, size = 0x4, offset = 0x4, fixed_abs, tag = 'smem constant byte address 0x4 - core index']
  #allocation1 [shape = 'u32[144,128]{1,0:T(1,128)}', space=vmem, size = 0x12000, scoped, tag = 'internal scratch']
  %s0 = inlined_call_operand.hbm [shape: f32[8,16], index: 0, kind: input, shape index: {}]
  %s1 = inlined_call_operand.hbm [shape: f32[14,128], index: 1, kind: input, shape index: {}]
  %s2 = inlined_call_operand.hbm [shape: f32[2,2048], index: 2, kind: input, shape index: {}]
  %s3 = inlined_call_operand.hbm [shape: bf16[208,128], index: 3, kind: input, shape index: {}]
  %s4 = inlined_call_operand.hbm [shape: bf16[2,64,2048], index: 4, kind: input, shape index: {}]
  %s5 = inlined_call_operand.hbm [shape: bf16[2048,128], index: 5, kind: input, shape index: {}]
  %s6 = inlined_call_operand.hbm [shape: f32[8,128], index: 6, kind: output, shape index: {}]
  %s7 = sld [smem:[#allocation0]]
  $region58: #{logic_transformer_forward.1} parent=0
    _
  %s9 = ssub.s32 1, %s7
  %s10 = scalar_select 0, %s9, %s7
  $region1: #{logic_transformer_forward.1} parent=0
    #allocation2 [shape = 'u8[4096]{0}', space=vmem, size = 0x1000, scoped, tag = 'input window, operand 0, single buffered']
    #allocation3 [shape = 's32[1]{0}', space=sflag, size = 0x4, scoped, tag = 'scoped memory for logic_transformer_forward.1']
    #allocation4 [shape = 's32[1]{0}', space=sflag, size = 0x4, scoped, tag = 'scoped memory for logic_transformer_forward.1']
    #allocation5 [shape = 'u8[8192]{0}', space=vmem, size = 0x2000, scoped, tag = 'input window, operand 1, single buffered']
    #allocation6 [shape = 's32[1]{0}', space=sflag, size = 0x4, scoped, tag = 'scoped memory for logic_transformer_forward.1']
    #allocation7 [shape = 'u8[16384]{0}', space=vmem, size = 0x4000, scoped, tag = 'input window, operand 2, single buffered']
    #allocation8 [shape = 'u8[53248]{0}', space=vmem, size = 0xd000, scoped, tag = 'input window, operand 3, single buffered']
    #allocation9 [shape = 's32[1]{0}', space=sflag, size = 0x4, scoped, tag = 'scoped memory for logic_transformer_forward.1']
    #allocation10 [shape = 'u8[524288]{0}', space=vmem, size = 0x80000, scoped, tag = 'input window, operand 4, single buffered']
    #allocation11 [shape = 'u8[524288]{0}', space=vmem, size = 0x80000, scoped, tag = 'input window, operand 5, single buffered']
    #allocation12 [shape = 's32[1]{0}', space=sflag, size = 0x4, scoped, tag = 'scoped memory for logic_transformer_forward.1']
    #allocation13 [shape = 'u8[4096]{0}', space=vmem, size = 0x1000, scoped, tag = 'output window, operand 0, single buffered']
    %11 = vsyncpa [#allocation3], 0
    %12 = vsyncpa [#allocation6], 0
    %13 = vsyncpa [#allocation9], 0
    %14 = vsyncpa [#allocation12], 0
    %15 = vsyncpa [#allocation4], 0
    // Predicated region
    $region2: #{logic_transformer_forward.1} parent=1 // pred_check
      _
    $region3: #{logic_transformer_forward.1} parent=1 // pred_check_branch
      %17 = sbr.rel (0) target = $region5
    $region4: #{logic_transformer_forward.1} parent=1 // pred_region
      %s19 = ssub.s32 128, 128
      %20 = vsyncadd [#allocation3], %s19
      %s22 = sshll.u32 [#allocation2], 4
      %s23 = int_to_ptr.vmem [resolvable:$true] %s22
      %25 = dma.hbm_to_vmem [thread:$0]  %s0, 128, %s23, [#allocation3]
    $region5: #{logic_transformer_forward.1} parent=1 // pred_fallthru
      _
    // Predicated region
    $region6: #{logic_transformer_forward.1} parent=1 // pred_check
      _
    $region7: #{logic_transformer_forward.1} parent=1 // pred_check_branch
      %27 = sbr.rel (0) target = $region9
    $region8: #{logic_transformer_forward.1} parent=1 // pred_region
      %s29 = ssub.s32 256, 256
      %30 = vsyncadd [#allocation6], %s29
      %s31 = sshll.u32 [#allocation5], 4
      %s32 = int_to_ptr.vmem [resolvable:$true] %s31
      %37 = dma.hbm_to_vmem [thread:$0]  %s1, 256, %s32, [#allocation6], 128, 128, 8
    $region9: #{logic_transformer_forward.1} parent=1 // pred_fallthru
      _
    // Predicated region
    $region10: #{logic_transformer_forward.1} parent=1 // pred_check
      _
    $region11: #{logic_transformer_forward.1} parent=1 // pred_check_branch
      %39 = sbr.rel (0) target = $region13
    $region12: #{logic_transformer_forward.1} parent=1 // pred_region
      %s41 = ssub.s32 512, 512
      %42 = vsyncadd [#allocation6], %s41
      %s44 = sshll.u32 [#allocation7], 4
      %s45 = int_to_ptr.vmem [resolvable:$true] %s44
      %47 = dma.hbm_to_vmem [thread:$0]  %s2, 512, %s45, [#allocation6]
    $region13: #{logic_transformer_forward.1} parent=1 // pred_fallthru
      _
    // Predicated region
    $region14: #{logic_transformer_forward.1} parent=1 // pred_check
      _
    $region15: #{logic_transformer_forward.1} parent=1 // pred_check_branch
      %49 = sbr.rel (0) target = $region17
    $region16: #{logic_transformer_forward.1} parent=1 // pred_region
      %s51 = ssub.s32 1664, 1664
      %52 = vsyncadd [#allocation9], %s51
      %s53 = sshll.u32 [#allocation8], 4
      %s54 = int_to_ptr.vmem [resolvable:$true] %s53
      %59 = dma.hbm_to_vmem [thread:$0]  %s3, 1664, %s54, [#allocation9], 64, 64, 4
    $region17: #{logic_transformer_forward.1} parent=1 // pred_fallthru
      _
    // Predicated region
    $region18: #{logic_transformer_forward.1} parent=1 // pred_check
      _
    $region19: #{logic_transformer_forward.1} parent=1 // pred_check_branch
      %61 = sbr.rel (0) target = $region21
    $region20: #{logic_transformer_forward.1} parent=1 // pred_region
      %s63 = ssub.s32 16384, 16384
      %64 = vsyncadd [#allocation9], %s63
      %s65 = sshll.u32 [#allocation10], 4
      %s66 = int_to_ptr.vmem [resolvable:$true] %s65
      %71 = dma.hbm_to_vmem [thread:$0]  %s4, 16384, %s66, [#allocation9], 1024, 1024, 64
    $region21: #{logic_transformer_forward.1} parent=1 // pred_fallthru
      _
    // Predicated region
    $region22: #{logic_transformer_forward.1} parent=1 // pred_check
      _
    $region23: #{logic_transformer_forward.1} parent=1 // pred_check_branch
      %73 = sbr.rel (0) target = $region25
    $region24: #{logic_transformer_forward.1} parent=1 // pred_region
      %s75 = ssub.s32 16384, 16384
      %76 = vsyncadd [#allocation12], %s75
      %s77 = sshll.u32 [#allocation11], 4
      %s78 = int_to_ptr.vmem [resolvable:$true] %s77
      %83 = dma.hbm_to_vmem [thread:$0]  %s5, 16384, %s78, [#allocation12], 64, 64, 4
    $region25: #{logic_transformer_forward.1} parent=1 // pred_fallthru
      _
    // Predicated region
    $region26: #{logic_transformer_forward.1} parent=1 // pred_check
      _
    $region27: #{logic_transformer_forward.1} parent=1 // pred_check_branch
      %85 = sbr.rel (0) target = $region29
    $region28: #{logic_transformer_forward.1} parent=1 // pred_region
      %86 = dma.done [#allocation3], 128
    $region29: #{logic_transformer_forward.1} parent=1 // pred_fallthru
      _
    // Predicated region
    $region30: #{logic_transformer_forward.1} parent=1 // pred_check
      _
    $region31: #{logic_transformer_forward.1} parent=1 // pred_check_branch
      %88 = sbr.rel (0) target = $region33
    $region32: #{logic_transformer_forward.1} parent=1 // pred_region
      %89 = dma.done [#allocation6], 256
    $region33: #{logic_transformer_forward.1} parent=1 // pred_fallthru
      _
    // Predicated region
    $region34: #{logic_transformer_forward.1} parent=1 // pred_check
      _
    $region35: #{logic_transformer_forward.1} parent=1 // pred_check_branch
      %91 = sbr.rel (0) target = $region37
    $region36: #{logic_transformer_forward.1} parent=1 // pred_region
      %92 = dma.done [#allocation6], 512
    $region37: #{logic_transformer_forward.1} parent=1 // pred_fallthru
      _
    // Predicated region
    $region38: #{logic_transformer_forward.1} parent=1 // pred_check
      _
    $region39: #{logic_transformer_forward.1} parent=1 // pred_check_branch
      %94 = sbr.rel (0) target = $region41
    $region40: #{logic_transformer_forward.1} parent=1 // pred_region
      %95 = dma.done [#allocation9], 1664
    $region41: #{logic_transformer_forward.1} parent=1 // pred_fallthru
      _
    // Predicated region
    $region42: #{logic_transformer_forward.1} parent=1 // pred_check
      _
    $region43: #{logic_transformer_forward.1} parent=1 // pred_check_branch
      %97 = sbr.rel (0) target = $region45
    $region44: #{logic_transformer_forward.1} parent=1 // pred_region
      %98 = dma.done [#allocation9], 16384
    $region45: #{logic_transformer_forward.1} parent=1 // pred_fallthru
      _
    // Predicated region
    $region46: #{logic_transformer_forward.1} parent=1 // pred_check
      _
    $region47: #{logic_transformer_forward.1} parent=1 // pred_check_branch
      %100 = sbr.rel (0) target = $region49
    $region48: #{logic_transformer_forward.1} parent=1 // pred_region
      %101 = dma.done [#allocation12], 16384
    $region49: #{logic_transformer_forward.1} parent=1 // pred_fallthru
      _
    %v103 = vld [vmem:[#allocation8] sm:$0xf]
    %v104 = vld [vmem:[#allocation8 + $0x4] sm:$0xf]
    %v105 = vld [vmem:[#allocation2] sm:$0xff]
    %v106 = vpack.c.bf16 %v105, %v105
    %v107 = vld [vmem:[#allocation5] sm:$0x1]
    %v108 = vlaneseq
    %v109 = vshrl.u32 %v108, 7
    %v110 = vsub.s32 0, %v109
    %v111 = vrot.slane %v107, %v110
    %v114 = vunpack.c.l.b16 %v103
    %v115 = vunpack.c.l.b16 %v104
    %v116 = vpack.c.b16 %v115, %v114
    %vm118 = vcmask 130048
    %v120 = vsel %vm118, %v106, 0
    %122 = vmatprep.subr.bf16.mxu0 0
    %123 = vmatpush1.bf16.msra.mxu0 %v116
    %124 = vmatprep.subr.bf16.mxu0 0
    %125 = vmatpush1.bf16.msra.mxu0 0
    %126 = vmatprep.subr.bf16.mxu0 0
    %127 = vmatpush1.bf16.msra.mxu0 0
    %128 = vmatprep.subr.bf16.mxu0 0
    %129 = vmatpush1.bf16.msra.mxu0 0
    %130 = vmatprep.subr.bf16.mxu0 0
    %131 = vmatpush1.bf16.msra.mxu0 0
    %132 = vmatprep.subr.bf16.mxu0 0
    %133 = vmatpush1.bf16.msra.mxu0 0
    %134 = vmatprep.subr.bf16.mxu0 0
    %135 = vmatpush1.bf16.msra.mxu0 0
    %136 = vmatprep.subr.bf16.mxu0 0
    %137 = vmatpush1.bf16.msra.mxu0 0
    %138 = vmatprep.subr.bf16.mxu0 0
    %139 = vmatpush1.bf16.msra.mxu0 0
    %140 = vmatprep.subr.bf16.mxu0 0
    %141 = vmatpush1.bf16.msra.mxu0 0
    %142 = vmatprep.subr.bf16.mxu0 0
    %143 = vmatpush1.bf16.msra.mxu0 0
    %144 = vmatprep.subr.bf16.mxu0 0
    %145 = vmatpush1.bf16.msra.mxu0 0
    %146 = vmatprep.subr.bf16.mxu0 0
    %147 = vmatpush1.bf16.msra.mxu0 0
    %148 = vmatprep.subr.bf16.mxu0 0
    %149 = vmatpush1.bf16.msra.mxu0 0
    %150 = vmatprep.subr.bf16.mxu0 0
    %151 = vmatpush1.bf16.msra.mxu0 0
    %152 = vmatprep.subr.bf16.mxu0 0
    %153 = vmatpush1.bf16.msra.mxu0 0
    %154 = vmatprep.mubr.bf16.mxu0 0
    %155 = vmatmul.mubr.bf16.gmra.mrb[0].mxu0 %v120
    %v156 = vpop.f32.mrb[0].mxu0
    %v157 = vadd.f32 %v111, %v156
    %v158 = vpop.f32.mrb[0].mxu0
    %v159 = vpop.f32.mrb[0].mxu0
    %v160 = vpop.f32.mrb[0].mxu0
    %161 = vdwg.mxu0
    %v162 = vld [vmem:[#allocation8 + $0x8] sm:$0xf]
    %v163 = vld [vmem:[#allocation8 + $0xc] sm:$0xf]
    %v164 = vld [vmem:[#allocation8 + $0x10] sm:$0xf]
    %v165 = vld [vmem:[#allocation8 + $0x14] sm:$0xf]
    %v166 = vld [vmem:[#allocation8 + $0x18] sm:$0xf]
    %v167 = vld [vmem:[#allocation8 + $0x1c] sm:$0xf]
    %v168 = vld [vmem:[#allocation8 + $0x20] sm:$0xf]
    %v169 = vld [vmem:[#allocation8 + $0x24] sm:$0xf]
    %v170 = vpack.c.bf16 %v157, %v157
    %v171 = vld [vmem:[#allocation5 + $0x1] sm:$0x1]
    %v172 = vlaneseq
    %v173 = vshrl.u32 %v172, 7
    %v174 = vsub.s32 0, %v173
    %v175 = vrot.slane %v171, %v174
    %v184 = vunpack.c.l.b16 %v162
    %v185 = vunpack.c.l.b16 %v163
    %v186 = vunpack.c.l.b16 %v164
    %v187 = vunpack.c.l.b16 %v165
    %v188 = vunpack.c.l.b16 %v166
    %v189 = vunpack.c.l.b16 %v167
    %v190 = vunpack.c.l.b16 %v168
    %v191 = vunpack.c.l.b16 %v169
    %v192 = vpack.c.b16 %v185, %v184
    %v193 = vpack.c.b16 %v187, %v186
    %v194 = vpack.c.b16 %v189, %v188
    %v195 = vpack.c.b16 %v191, %v190
    %vm200 = vcmask 523264
    %v202 = vsel %vm200, %v170, 0
    %204 = vmatprep.subr.bf16.mxu0 0
    %205 = vmatpush1.bf16.msra.mxu0 %v192
    %206 = vmatprep.subr.bf16.mxu0 0
    %207 = vmatpush1.bf16.msra.mxu0 %v193
    %208 = vmatprep.subr.bf16.mxu0 0
    %209 = vmatpush1.bf16.msra.mxu0 %v194
    %210 = vmatprep.subr.bf16.mxu0 0
    %211 = vmatpush1.bf16.msra.mxu0 %v195
    %212 = vmatprep.subr.bf16.mxu0 0
    %213 = vmatpush1.bf16.msra.mxu0 0
    %214 = vmatprep.subr.bf16.mxu0 0
    %215 = vmatpush1.bf16.msra.mxu0 0
    %216 = vmatprep.subr.bf16.mxu0 0
    %217 = vmatpush1.bf16.msra.mxu0 0
    %218 = vmatprep.subr.bf16.mxu0 0
    %219 = vmatpush1.bf16.msra.mxu0 0
    %220 = vmatprep.subr.bf16.mxu0 0
    %221 = vmatpush1.bf16.msra.mxu0 0
    %222 = vmatprep.subr.bf16.mxu0 0
    %223 = vmatpush1.bf16.msra.mxu0 0
    %224 = vmatprep.subr.bf16.mxu0 0
    %225 = vmatpush1.bf16.msra.mxu0 0
    %226 = vmatprep.subr.bf16.mxu0 0
    %227 = vmatpush1.bf16.msra.mxu0 0
    %228 = vmatprep.subr.bf16.mxu0 0
    %229 = vmatpush1.bf16.msra.mxu0 0
    %230 = vmatprep.subr.bf16.mxu0 0
    %231 = vmatpush1.bf16.msra.mxu0 0
    %232 = vmatprep.subr.bf16.mxu0 0
    %233 = vmatpush1.bf16.msra.mxu0 0
    %234 = vmatprep.subr.bf16.mxu0 0
    %235 = vmatpush1.bf16.msra.mxu0 0
    %236 = vmatprep.mubr.bf16.mxu0 0
    %237 = vmatmul.mubr.bf16.gmra.mrb[0].mxu0 %v202
    %v238 = vpop.f32.mrb[0].mxu0
    %v239 = vadd.f32 %v175, %v238
    %v240 = vpop.f32.mrb[0].mxu0
    %v241 = vpop.f32.mrb[0].mxu0
    %v242 = vpop.f32.mrb[0].mxu0
    %243 = vdwg.mxu0
    %v244 = vadd.f32 %v157, %v239
    %v245 = vld [vmem:[#allocation5 + $0x2] sm:$0x1]
    %v246 = vld [vmem:[#allocation5 + $0x3] sm:$0x1]
    %v247 = vsel %vm200, %v244, 0.0
    %248 = vadd.xlane.f32.xlu0 %v247
    %v249 = vpop.xlane.xlu0 %248
    %v250 = vrcp.pop 64.0
    %v251 = vmul.f32 %v249, %v250
    %v252 = vsub.f32 %v244, %v251
    %v253 = vmul.f32 %v252, %v252
    %v254 = vsel %vm200, %v253, 0.0
    %255 = vadd.xlane.f32.xlu0 %v254
    %v256 = vpop.xlane.xlu0 %255
    %v257 = vmul.f32 %v256, %v250
    %v258 = vadd.f32 %v257, 1e-05
    %v259 = vrsqrt.pop %v258
    %v260 = vmul.f32 %v252, %v259
    %v261 = vlaneseq
    %v262 = vshrl.u32 %v261, 7
    %v263 = vsub.s32 0, %v262
    %v264 = vrot.slane %v245, %v263
    %v265 = vmul.f32 %v260, %v264
    %v266 = vlaneseq
    %v267 = vshrl.u32 %v266, 7
    %v268 = vsub.s32 0, %v267
    %v269 = vrot.slane %v246, %v268
    %v270 = vadd.f32 %v265, %v269
    %v271 = vld [vmem:[#allocation10] sm:$0xff]
    %v272 = vld [vmem:[#allocation10 + $0x8] sm:$0xff]
    %v273 = vld [vmem:[#allocation10 + $0x10] sm:$0xff]
    %v274 = vld [vmem:[#allocation10 + $0x18] sm:$0xff]
    %v275 = vld [vmem:[#allocation10 + $0x20] sm:$0xff]
    %v276 = vld [vmem:[#allocation10 + $0x28] sm:$0xff]
    %v277 = vld [vmem:[#allocation10 + $0x30] sm:$0xff]
    %v278 = vld [vmem:[#allocation10 + $0x38] sm:$0xff]
    %v279 = vld [vmem:[#allocation10 + $0x40] sm:$0xff]
    %v280 = vld [vmem:[#allocation10 + $0x48] sm:$0xff]
    %v281 = vld [vmem:[#allocation10 + $0x50] sm:$0xff]
    %v282 = vld [vmem:[#allocation10 + $0x58] sm:$0xff]
    %v283 = vld [vmem:[#allocation10 + $0x60] sm:$0xff]
    %v284 = vld [vmem:[#allocation10 + $0x68] sm:$0xff]
    %v285 = vld [vmem:[#allocation10 + $0x70] sm:$0xff]
    %v286 = vld [vmem:[#allocation10 + $0x78] sm:$0xff]
    %v287 = vld [vmem:[#allocation10 + $0x80] sm:$0xff]
    %v288 = vld [vmem:[#allocation10 + $0x88] sm:$0xff]
    %v289 = vld [vmem:[#allocation10 + $0x90] sm:$0xff]
    %v290 = vld [vmem:[#allocation10 + $0x98] sm:$0xff]
    %v291 = vld [vmem:[#allocation10 + $0xa0] sm:$0xff]
    %v292 = vld [vmem:[#allocation10 + $0xa8] sm:$0xff]
    %v293 = vld [vmem:[#allocation10 + $0xb0] sm:$0xff]
    %v294 = vld [vmem:[#allocation10 + $0xb8] sm:$0xff]
    %v295 = vld [vmem:[#allocation10 + $0xc0] sm:$0xff]
    %v296 = vld [vmem:[#allocation10 + $0xc8] sm:$0xff]
    %v297 = vld [vmem:[#allocation10 + $0xd0] sm:$0xff]
    %v298 = vld [vmem:[#allocation10 + $0xd8] sm:$0xff]
    %v299 = vld [vmem:[#allocation10 + $0xe0] sm:$0xff]
    %v300 = vld [vmem:[#allocation10 + $0xe8] sm:$0xff]
    %v301 = vld [vmem:[#allocation10 + $0xf0] sm:$0xff]
    %v302 = vld [vmem:[#allocation10 + $0xf8] sm:$0xff]
    %v303 = vld [vmem:[#allocation10 + $0x100] sm:$0xff]
    %v304 = vld [vmem:[#allocation10 + $0x108] sm:$0xff]
    %v305 = vld [vmem:[#allocation10 + $0x110] sm:$0xff]
    %v306 = vld [vmem:[#allocation10 + $0x118] sm:$0xff]
    %v307 = vld [vmem:[#allocation10 + $0x120] sm:$0xff]
    %v308 = vld [vmem:[#allocation10 + $0x128] sm:$0xff]
    %v309 = vld [vmem:[#allocation10 + $0x130] sm:$0xff]
    %v310 = vld [vmem:[#allocation10 + $0x138] sm:$0xff]
    %v311 = vld [vmem:[#allocation10 + $0x140] sm:$0xff]
    %v312 = vld [vmem:[#allocation10 + $0x148] sm:$0xff]
    %v313 = vld [vmem:[#allocation10 + $0x150] sm:$0xff]
    %v314 = vld [vmem:[#allocation10 + $0x158] sm:$0xff]
    %v315 = vld [vmem:[#allocation10 + $0x160] sm:$0xff]
    %v316 = vld [vmem:[#allocation10 + $0x168] sm:$0xff]
    %v317 = vld [vmem:[#allocation10 + $0x170] sm:$0xff]
    %v318 = vld [vmem:[#allocation10 + $0x178] sm:$0xff]
    %v319 = vld [vmem:[#allocation10 + $0x180] sm:$0xff]
    %v320 = vld [vmem:[#allocation10 + $0x188] sm:$0xff]
    %v321 = vld [vmem:[#allocation10 + $0x190] sm:$0xff]
    %v322 = vld [vmem:[#allocation10 + $0x198] sm:$0xff]
    %v323 = vld [vmem:[#allocation10 + $0x1a0] sm:$0xff]
    %v324 = vld [vmem:[#allocation10 + $0x1a8] sm:$0xff]
    %v325 = vld [vmem:[#allocation10 + $0x1b0] sm:$0xff]
    %v326 = vld [vmem:[#allocation10 + $0x1b8] sm:$0xff]
    %v327 = vld [vmem:[#allocation10 + $0x1c0] sm:$0xff]
    %v328 = vld [vmem:[#allocation10 + $0x1c8] sm:$0xff]
    %v329 = vld [vmem:[#allocation10 + $0x1d0] sm:$0xff]
    %v330 = vld [vmem:[#allocation10 + $0x1d8] sm:$0xff]
    %v331 = vld [vmem:[#allocation10 + $0x1e0] sm:$0xff]
    %v332 = vld [vmem:[#allocation10 + $0x1e8] sm:$0xff]
    %v333 = vld [vmem:[#allocation10 + $0x1f0] sm:$0xff]
    %v334 = vld [vmem:[#allocation10 + $0x1f8] sm:$0xff]
    %v335 = vpack.c.bf16 %v270, %v270
    %v336 = vld [vmem:[#allocation7] ss:$2 sm:$0xff]
    %s337 = scalar_lea.vmem [#allocation7], 16
    %v338 = vld [vmem:[%s337] ss:$2 sm:$0xff]
    %v341 = vlaneseq
    %v342 = vshrl.u32 %v341, 7
    %v343 = vsub.s32 0, %v342
    %v344 = vrot.slane %v336, %v343
    %v345 = vlaneseq
    %v346 = vshrl.u32 %v345, 7
    %v347 = vsub.s32 1, %v346
    %v348 = vrot.slane %v336, %v347
    %v349 = vlaneseq
    %v350 = vshrl.u32 %v349, 7
    %v351 = vsub.s32 2, %v350
    %v352 = vrot.slane %v336, %v351
    %v353 = vlaneseq
    %v354 = vshrl.u32 %v353, 7
    %v355 = vsub.s32 3, %v354
    %v356 = vrot.slane %v336, %v355
    %v357 = vlaneseq
    %v358 = vshrl.u32 %v357, 7
    %v359 = vsub.s32 4, %v358
    %v360 = vrot.slane %v336, %v359
    %v361 = vlaneseq
    %v362 = vshrl.u32 %v361, 7
    %v363 = vsub.s32 5, %v362
    %v364 = vrot.slane %v336, %v363
    %v365 = vlaneseq
    %v366 = vshrl.u32 %v365, 7
    %v367 = vsub.s32 6, %v366
    %v368 = vrot.slane %v336, %v367
    %v369 = vlaneseq
    %v370 = vshrl.u32 %v369, 7
    %v371 = vsub.s32 7, %v370
    %v372 = vrot.slane %v336, %v371
    %v373 = vlaneseq
    %v374 = vshrl.u32 %v373, 7
    %v375 = vsub.s32 0, %v374
    %v376 = vrot.slane %v338, %v375
    %v377 = vlaneseq
    %v378 = vshrl.u32 %v377, 7
    %v379 = vsub.s32 1, %v378
    %v380 = vrot.slane %v338, %v379
    %v381 = vlaneseq
    %v382 = vshrl.u32 %v381, 7
    %v383 = vsub.s32 2, %v382
    %v384 = vrot.slane %v338, %v383
    %v385 = vlaneseq
    %v386 = vshrl.u32 %v385, 7
    %v387 = vsub.s32 3, %v386
    %v388 = vrot.slane %v338, %v387
    %v389 = vlaneseq
    %v390 = vshrl.u32 %v389, 7
    %v391 = vsub.s32 4, %v390
    %v392 = vrot.slane %v338, %v391
    %v393 = vlaneseq
    %v394 = vshrl.u32 %v393, 7
    %v395 = vsub.s32 5, %v394
    %v396 = vrot.slane %v338, %v395
    %v397 = vlaneseq
    %v398 = vshrl.u32 %v397, 7
    %v399 = vsub.s32 6, %v398
    %v400 = vrot.slane %v338, %v399
    %v401 = vlaneseq
    %v402 = vshrl.u32 %v401, 7
    %v403 = vsub.s32 7, %v402
    %v404 = vrot.slane %v338, %v403
    %v485 = vunpack.c.l.b16 %v271
    %v486 = vunpack.c.h.b16 %v271
    %v487 = vunpack.c.l.b16 %v272
    %v488 = vunpack.c.h.b16 %v272
    %v489 = vunpack.c.l.b16 %v273
    %v490 = vunpack.c.h.b16 %v273
    %v491 = vunpack.c.l.b16 %v274
    %v492 = vunpack.c.h.b16 %v274
    %v493 = vunpack.c.l.b16 %v275
    %v494 = vunpack.c.h.b16 %v275
    %v495 = vunpack.c.l.b16 %v276
    %v496 = vunpack.c.h.b16 %v276
    %v497 = vunpack.c.l.b16 %v277
    %v498 = vunpack.c.h.b16 %v277
    %v499 = vunpack.c.l.b16 %v278
    %v500 = vunpack.c.h.b16 %v278
    %v501 = vunpack.c.l.b16 %v279
    %v502 = vunpack.c.h.b16 %v279
    %v503 = vunpack.c.l.b16 %v280
    %v504 = vunpack.c.h.b16 %v280
    %v505 = vunpack.c.l.b16 %v281
    %v506 = vunpack.c.h.b16 %v281
    %v507 = vunpack.c.l.b16 %v282
    %v508 = vunpack.c.h.b16 %v282
    %v509 = vunpack.c.l.b16 %v283
    %v510 = vunpack.c.h.b16 %v283
    %v511 = vunpack.c.l.b16 %v284
    %v512 = vunpack.c.h.b16 %v284
    %v513 = vunpack.c.l.b16 %v285
    %v514 = vunpack.c.h.b16 %v285
    %v515 = vunpack.c.l.b16 %v286
    %v516 = vunpack.c.h.b16 %v286
    %v517 = vunpack.c.l.b16 %v287
    %v518 = vunpack.c.h.b16 %v287
    %v519 = vunpack.c.l.b16 %v288
    %v520 = vunpack.c.h.b16 %v288
    %v521 = vunpack.c.l.b16 %v289
    %v522 = vunpack.c.h.b16 %v289
    %v523 = vunpack.c.l.b16 %v290
    %v524 = vunpack.c.h.b16 %v290
    %v525 = vunpack.c.l.b16 %v291
    %v526 = vunpack.c.h.b16 %v291
    %v527 = vunpack.c.l.b16 %v292
    %v528 = vunpack.c.h.b16 %v292
    %v529 = vunpack.c.l.b16 %v293
    %v530 = vunpack.c.h.b16 %v293
    %v531 = vunpack.c.l.b16 %v294
    %v532 = vunpack.c.h.b16 %v294
    %v533 = vunpack.c.l.b16 %v295
    %v534 = vunpack.c.h.b16 %v295
    %v535 = vunpack.c.l.b16 %v296
    %v536 = vunpack.c.h.b16 %v296
    %v537 = vunpack.c.l.b16 %v297
    %v538 = vunpack.c.h.b16 %v297
    %v539 = vunpack.c.l.b16 %v298
    %v540 = vunpack.c.h.b16 %v298
    %v541 = vunpack.c.l.b16 %v299
    %v542 = vunpack.c.h.b16 %v299
    %v543 = vunpack.c.l.b16 %v300
    %v544 = vunpack.c.h.b16 %v300
    %v545 = vunpack.c.l.b16 %v301
    %v546 = vunpack.c.h.b16 %v301
    %v547 = vunpack.c.l.b16 %v302
    %v548 = vunpack.c.h.b16 %v302
    %v549 = vunpack.c.l.b16 %v303
    %v550 = vunpack.c.h.b16 %v303
    %v551 = vunpack.c.l.b16 %v304
    %v552 = vunpack.c.h.b16 %v304
    %v553 = vunpack.c.l.b16 %v305
    %v554 = vunpack.c.h.b16 %v305
    %v555 = vunpack.c.l.b16 %v306
    %v556 = vunpack.c.h.b16 %v306
    %v557 = vunpack.c.l.b16 %v307
    %v558 = vunpack.c.h.b16 %v307
    %v559 = vunpack.c.l.b16 %v308
    %v560 = vunpack.c.h.b16 %v308
    %v561 = vunpack.c.l.b16 %v309
    %v562 = vunpack.c.h.b16 %v309
    %v563 = vunpack.c.l.b16 %v310
    %v564 = vunpack.c.h.b16 %v310
    %v565 = vunpack.c.l.b16 %v311
    %v566 = vunpack.c.h.b16 %v311
    %v567 = vunpack.c.l.b16 %v312
    %v568 = vunpack.c.h.b16 %v312
    %v569 = vunpack.c.l.b16 %v313
    %v570 = vunpack.c.h.b16 %v313
    %v571 = vunpack.c.l.b16 %v314
    %v572 = vunpack.c.h.b16 %v314
    %v573 = vunpack.c.l.b16 %v315
    %v574 = vunpack.c.h.b16 %v315
    %v575 = vunpack.c.l.b16 %v316
    %v576 = vunpack.c.h.b16 %v316
    %v577 = vunpack.c.l.b16 %v317
    %v578 = vunpack.c.h.b16 %v317
    %v579 = vunpack.c.l.b16 %v318
    %v580 = vunpack.c.h.b16 %v318
    %v581 = vunpack.c.l.b16 %v319
    %v582 = vunpack.c.h.b16 %v319
    %v583 = vunpack.c.l.b16 %v320
    %v584 = vunpack.c.h.b16 %v320
    %v585 = vunpack.c.l.b16 %v321
    %v586 = vunpack.c.h.b16 %v321
    %v587 = vunpack.c.l.b16 %v322
    %v588 = vunpack.c.h.b16 %v322
    %v589 = vunpack.c.l.b16 %v323
    %v590 = vunpack.c.h.b16 %v323
    %v591 = vunpack.c.l.b16 %v324
    %v592 = vunpack.c.h.b16 %v324
    %v593 = vunpack.c.l.b16 %v325
    %v594 = vunpack.c.h.b16 %v325
    %v595 = vunpack.c.l.b16 %v326
    %v596 = vunpack.c.h.b16 %v326
    %v597 = vunpack.c.l.b16 %v327
    %v598 = vunpack.c.h.b16 %v327
    %v599 = vunpack.c.l.b16 %v328
    %v600 = vunpack.c.h.b16 %v328
    %v601 = vunpack.c.l.b16 %v329
    %v602 = vunpack.c.h.b16 %v329
    %v603 = vunpack.c.l.b16 %v330
    %v604 = vunpack.c.h.b16 %v330
    %v605 = vunpack.c.l.b16 %v331
    %v606 = vunpack.c.h.b16 %v331
    %v607 = vunpack.c.l.b16 %v332
    %v608 = vunpack.c.h.b16 %v332
    %v609 = vunpack.c.l.b16 %v333
    %v610 = vunpack.c.h.b16 %v333
    %v611 = vunpack.c.l.b16 %v334
    %v612 = vunpack.c.h.b16 %v334
    %v613 = vpack.c.b16 %v501, %v485
    %v614 = vpack.c.b16 %v502, %v486
    %v615 = vpack.c.b16 %v503, %v487
    %v616 = vpack.c.b16 %v504, %v488
    %v617 = vpack.c.b16 %v505, %v489
    %v618 = vpack.c.b16 %v506, %v490
    %v619 = vpack.c.b16 %v507, %v491
    %v620 = vpack.c.b16 %v508, %v492
    %v621 = vpack.c.b16 %v509, %v493
    %v622 = vpack.c.b16 %v510, %v494
    %v623 = vpack.c.b16 %v511, %v495
    %v624 = vpack.c.b16 %v512, %v496
    %v625 = vpack.c.b16 %v513, %v497
    %v626 = vpack.c.b16 %v514, %v498
    %v627 = vpack.c.b16 %v515, %v499
    %v628 = vpack.c.b16 %v516, %v500
    %v629 = vpack.c.b16 %v533, %v517
    %v630 = vpack.c.b16 %v534, %v518
    %v631 = vpack.c.b16 %v535, %v519
    %v632 = vpack.c.b16 %v536, %v520
    %v633 = vpack.c.b16 %v537, %v521
    %v634 = vpack.c.b16 %v538, %v522
    %v635 = vpack.c.b16 %v539, %v523
    %v636 = vpack.c.b16 %v540, %v524
    %v637 = vpack.c.b16 %v541, %v525
    %v638 = vpack.c.b16 %v542, %v526
    %v639 = vpack.c.b16 %v543, %v527
    %v640 = vpack.c.b16 %v544, %v528
    %v641 = vpack.c.b16 %v545, %v529
    %v642 = vpack.c.b16 %v546, %v530
    %v643 = vpack.c.b16 %v547, %v531
    %v644 = vpack.c.b16 %v548, %v532
    %v645 = vpack.c.b16 %v565, %v549
    %v646 = vpack.c.b16 %v566, %v550
    %v647 = vpack.c.b16 %v567, %v551
    %v648 = vpack.c.b16 %v568, %v552
    %v649 = vpack.c.b16 %v569, %v553
    %v650 = vpack.c.b16 %v570, %v554
    %v651 = vpack.c.b16 %v571, %v555
    %v652 = vpack.c.b16 %v572, %v556
    %v653 = vpack.c.b16 %v573, %v557
    %v654 = vpack.c.b16 %v574, %v558
    %v655 = vpack.c.b16 %v575, %v559
    %v656 = vpack.c.b16 %v576, %v560
    %v657 = vpack.c.b16 %v577, %v561
    %v658 = vpack.c.b16 %v578, %v562
    %v659 = vpack.c.b16 %v579, %v563
    %v660 = vpack.c.b16 %v580, %v564
    %v661 = vpack.c.b16 %v597, %v581
    %v662 = vpack.c.b16 %v598, %v582
    %v663 = vpack.c.b16 %v599, %v583
    %v664 = vpack.c.b16 %v600, %v584
    %v665 = vpack.c.b16 %v601, %v585
    %v666 = vpack.c.b16 %v602, %v586
    %v667 = vpack.c.b16 %v603, %v587
    %v668 = vpack.c.b16 %v604, %v588
    %v669 = vpack.c.b16 %v605, %v589
    %v670 = vpack.c.b16 %v606, %v590
    %v671 = vpack.c.b16 %v607, %v591
    %v672 = vpack.c.b16 %v608, %v592
    %v673 = vpack.c.b16 %v609, %v593
    %v674 = vpack.c.b16 %v610, %v594
    %v675 = vpack.c.b16 %v611, %v595
    %v676 = vpack.c.b16 %v612, %v596
    %v742 = vsel %vm200, %v335, 0
    %744 = vmatprep.subr.bf16.mxu0 %v614
    %745 = vmatpush1.bf16.msra.mxu0 %v613
    %746 = vmatprep.subr.bf16.mxu0 %v630
    %747 = vmatpush1.bf16.msra.mxu0 %v629
    %748 = vmatprep.subr.bf16.mxu0 %v646
    %749 = vmatpush1.bf16.msra.mxu0 %v645
    %750 = vmatprep.subr.bf16.mxu0 %v662
    %751 = vmatpush1.bf16.msra.mxu0 %v661
    %752 = vmatprep.subr.bf16.mxu0 0
    %753 = vmatpush1.bf16.msra.mxu0 0
    %754 = vmatprep.subr.bf16.mxu0 0
    %755 = vmatpush1.bf16.msra.mxu0 0
    %756 = vmatprep.subr.bf16.mxu0 0
    %757 = vmatpush1.bf16.msra.mxu0 0
    %758 = vmatprep.subr.bf16.mxu0 0
    %759 = vmatpush1.bf16.msra.mxu0 0
    %760 = vmatprep.subr.bf16.mxu0 0
    %761 = vmatpush1.bf16.msra.mxu0 0
    %762 = vmatprep.subr.bf16.mxu0 0
    %763 = vmatpush1.bf16.msra.mxu0 0
    %764 = vmatprep.subr.bf16.mxu0 0
    %765 = vmatpush1.bf16.msra.mxu0 0
    %766 = vmatprep.subr.bf16.mxu0 0
    %767 = vmatpush1.bf16.msra.mxu0 0
    %768 = vmatprep.subr.bf16.mxu0 0
    %769 = vmatpush1.bf16.msra.mxu0 0
    %770 = vmatprep.subr.bf16.mxu0 0
    %771 = vmatpush1.bf16.msra.mxu0 0
    %772 = vmatprep.subr.bf16.mxu0 0
    %773 = vmatpush1.bf16.msra.mxu0 0
    %774 = vmatprep.subr.bf16.mxu0 0
    %775 = vmatpush1.bf16.msra.mxu0 0
    %776 = vmatprep.mubr.bf16.mxu0 0
    %777 = vmatmul.mubr.bf16.gmra.mrb[0].mxu0 %v742
    %v778 = vpop.f32.mrb[0].mxu0
    %v779 = vadd.f32 %v344, %v778
    %v780 = vpop.f32.mrb[0].mxu0
    %v781 = vadd.f32 %v348, %v780
    %v782 = vpop.f32.mrb[0].mxu0
    %v783 = vpop.f32.mrb[0].mxu0
    %784 = vdwg.mxu0
    %785 = vmatprep.subr.bf16.mxu0 %v616
    %786 = vmatpush1.bf16.msra.mxu0 %v615
    %787 = vmatprep.subr.bf16.mxu0 %v632
    %788 = vmatpush1.bf16.msra.mxu0 %v631
    %789 = vmatprep.subr.bf16.mxu0 %v648
    %790 = vmatpush1.bf16.msra.mxu0 %v647
    %791 = vmatprep.subr.bf16.mxu0 %v664
    %792 = vmatpush1.bf16.msra.mxu0 %v663
    %793 = vmatprep.subr.bf16.mxu0 0
    %794 = vmatpush1.bf16.msra.mxu0 0
    %795 = vmatprep.subr.bf16.mxu0 0
    %796 = vmatpush1.bf16.msra.mxu0 0
    %797 = vmatprep.subr.bf16.mxu0 0
    %798 = vmatpush1.bf16.msra.mxu0 0
    %799 = vmatprep.subr.bf16.mxu0 0
    %800 = vmatpush1.bf16.msra.mxu0 0
    %801 = vmatprep.subr.bf16.mxu0 0
    %802 = vmatpush1.bf16.msra.mxu0 0
    %803 = vmatprep.subr.bf16.mxu0 0
    %804 = vmatpush1.bf16.msra.mxu0 0
    %805 = vmatprep.subr.bf16.mxu0 0
    %806 = vmatpush1.bf16.msra.mxu0 0
    %807 = vmatprep.subr.bf16.mxu0 0
    %808 = vmatpush1.bf16.msra.mxu0 0
    %809 = vmatprep.subr.bf16.mxu0 0
    %810 = vmatpush1.bf16.msra.mxu0 0
    %811 = vmatprep.subr.bf16.mxu0 0
    %812 = vmatpush1.bf16.msra.mxu0 0
    %813 = vmatprep.subr.bf16.mxu0 0
    %814 = vmatpush1.bf16.msra.mxu0 0
    %815 = vmatprep.subr.bf16.mxu0 0
    %816 = vmatpush1.bf16.msra.mxu0 0
    %817 = vmatprep.mubr.bf16.mxu0 0
    %818 = vmatmul.mubr.bf16.gmra.mrb[0].mxu0 %v742
    %v819 = vpop.f32.mrb[0].mxu0
    %v820 = vadd.f32 %v352, %v819
    %v821 = vpop.f32.mrb[0].mxu0
    %v822 = vadd.f32 %v356, %v821
    %v823 = vpop.f32.mrb[0].mxu0
    %v824 = vpop.f32.mrb[0].mxu0
    %825 = vdwg.mxu0
    %826 = vmatprep.subr.bf16.mxu0 %v618
    %827 = vmatpush1.bf16.msra.mxu0 %v617
    %828 = vmatprep.subr.bf16.mxu0 %v634
    %829 = vmatpush1.bf16.msra.mxu0 %v633
    %830 = vmatprep.subr.bf16.mxu0 %v650
    %831 = vmatpush1.bf16.msra.mxu0 %v649
    %832 = vmatprep.subr.bf16.mxu0 %v666
    %833 = vmatpush1.bf16.msra.mxu0 %v665
    %834 = vmatprep.subr.bf16.mxu0 0
    %835 = vmatpush1.bf16.msra.mxu0 0
    %836 = vmatprep.subr.bf16.mxu0 0
    %837 = vmatpush1.bf16.msra.mxu0 0
    %838 = vmatprep.subr.bf16.mxu0 0
    %839 = vmatpush1.bf16.msra.mxu0 0
    %840 = vmatprep.subr.bf16.mxu0 0
    %841 = vmatpush1.bf16.msra.mxu0 0
    %842 = vmatprep.subr.bf16.mxu0 0
    %843 = vmatpush1.bf16.msra.mxu0 0
    %844 = vmatprep.subr.bf16.mxu0 0
    %845 = vmatpush1.bf16.msra.mxu0 0
    %846 = vmatprep.subr.bf16.mxu0 0
    %847 = vmatpush1.bf16.msra.mxu0 0
    %848 = vmatprep.subr.bf16.mxu0 0
    %849 = vmatpush1.bf16.msra.mxu0 0
    %850 = vmatprep.subr.bf16.mxu0 0
    %851 = vmatpush1.bf16.msra.mxu0 0
    %852 = vmatprep.subr.bf16.mxu0 0
    %853 = vmatpush1.bf16.msra.mxu0 0
    %854 = vmatprep.subr.bf16.mxu0 0
    %855 = vmatpush1.bf16.msra.mxu0 0
    %856 = vmatprep.subr.bf16.mxu0 0
    %857 = vmatpush1.bf16.msra.mxu0 0
    %858 = vmatprep.mubr.bf16.mxu0 0
    %859 = vmatmul.mubr.bf16.gmra.mrb[0].mxu0 %v742
    %v860 = vpop.f32.mrb[0].mxu0
    %v861 = vadd.f32 %v360, %v860
    %v862 = vpop.f32.mrb[0].mxu0
    %v863 = vadd.f32 %v364, %v862
    %v864 = vpop.f32.mrb[0].mxu0
    %v865 = vpop.f32.mrb[0].mxu0
    %866 = vdwg.mxu0
    %867 = vmatprep.subr.bf16.mxu0 %v620
    %868 = vmatpush1.bf16.msra.mxu0 %v619
    %869 = vmatprep.subr.bf16.mxu0 %v636
    %870 = vmatpush1.bf16.msra.mxu0 %v635
    %871 = vmatprep.subr.bf16.mxu0 %v652
    %872 = vmatpush1.bf16.msra.mxu0 %v651
    %873 = vmatprep.subr.bf16.mxu0 %v668
    %874 = vmatpush1.bf16.msra.mxu0 %v667
    %875 = vmatprep.subr.bf16.mxu0 0
    %876 = vmatpush1.bf16.msra.mxu0 0
    %877 = vmatprep.subr.bf16.mxu0 0
    %878 = vmatpush1.bf16.msra.mxu0 0
    %879 = vmatprep.subr.bf16.mxu0 0
    %880 = vmatpush1.bf16.msra.mxu0 0
    %881 = vmatprep.subr.bf16.mxu0 0
    %882 = vmatpush1.bf16.msra.mxu0 0
    %883 = vmatprep.subr.bf16.mxu0 0
    %884 = vmatpush1.bf16.msra.mxu0 0
    %885 = vmatprep.subr.bf16.mxu0 0
    %886 = vmatpush1.bf16.msra.mxu0 0
    %887 = vmatprep.subr.bf16.mxu0 0
    %888 = vmatpush1.bf16.msra.mxu0 0
    %889 = vmatprep.subr.bf16.mxu0 0
    %890 = vmatpush1.bf16.msra.mxu0 0
    %891 = vmatprep.subr.bf16.mxu0 0
    %892 = vmatpush1.bf16.msra.mxu0 0
    %893 = vmatprep.subr.bf16.mxu0 0
    %894 = vmatpush1.bf16.msra.mxu0 0
    %895 = vmatprep.subr.bf16.mxu0 0
    %896 = vmatpush1.bf16.msra.mxu0 0
    %897 = vmatprep.subr.bf16.mxu0 0
    %898 = vmatpush1.bf16.msra.mxu0 0
    %899 = vmatprep.mubr.bf16.mxu0 0
    %900 = vmatmul.mubr.bf16.gmra.mrb[0].mxu0 %v742
    %v901 = vpop.f32.mrb[0].mxu0
    %v902 = vadd.f32 %v368, %v901
    %v903 = vpop.f32.mrb[0].mxu0
    %v904 = vadd.f32 %v372, %v903
    %v905 = vpop.f32.mrb[0].mxu0
    %v906 = vpop.f32.mrb[0].mxu0
    %907 = vdwg.mxu0
    %908 = vmatprep.subr.bf16.mxu0 %v622
    %909 = vmatpush1.bf16.msra.mxu0 %v621
    %910 = vmatprep.subr.bf16.mxu0 %v638
    %911 = vmatpush1.bf16.msra.mxu0 %v637
    %912 = vmatprep.subr.bf16.mxu0 %v654
    %913 = vmatpush1.bf16.msra.mxu0 %v653
    %914 = vmatprep.subr.bf16.mxu0 %v670
    %915 = vmatpush1.bf16.msra.mxu0 %v669
    %916 = vmatprep.subr.bf16.mxu0 0
    %917 = vmatpush1.bf16.msra.mxu0 0
    %918 = vmatprep.subr.bf16.mxu0 0
    %919 = vmatpush1.bf16.msra.mxu0 0
    %920 = vmatprep.subr.bf16.mxu0 0
    %921 = vmatpush1.bf16.msra.mxu0 0
    %922 = vmatprep.subr.bf16.mxu0 0
    %923 = vmatpush1.bf16.msra.mxu0 0
    %924 = vmatprep.subr.bf16.mxu0 0
    %925 = vmatpush1.bf16.msra.mxu0 0
    %926 = vmatprep.subr.bf16.mxu0 0
    %927 = vmatpush1.bf16.msra.mxu0 0
    %928 = vmatprep.subr.bf16.mxu0 0
    %929 = vmatpush1.bf16.msra.mxu0 0
    %930 = vmatprep.subr.bf16.mxu0 0
    %931 = vmatpush1.bf16.msra.mxu0 0
    %932 = vmatprep.subr.bf16.mxu0 0
    %933 = vmatpush1.bf16.msra.mxu0 0
    %934 = vmatprep.subr.bf16.mxu0 0
    %935 = vmatpush1.bf16.msra.mxu0 0
    %936 = vmatprep.subr.bf16.mxu0 0
    %937 = vmatpush1.bf16.msra.mxu0 0
    %938 = vmatprep.subr.bf16.mxu0 0
    %939 = vmatpush1.bf16.msra.mxu0 0
    %940 = vmatprep.mubr.bf16.mxu0 0
    %941 = vmatmul.mubr.bf16.gmra.mrb[0].mxu0 %v742
    %v942 = vpop.f32.mrb[0].mxu0
    %v943 = vadd.f32 %v376, %v942
    %v944 = vpop.f32.mrb[0].mxu0
    %v945 = vadd.f32 %v380, %v944
    %v946 = vpop.f32.mrb[0].mxu0
    %v947 = vpop.f32.mrb[0].mxu0
    %948 = vdwg.mxu0
    %949 = vmatprep.subr.bf16.mxu0 %v624
    %950 = vmatpush1.bf16.msra.mxu0 %v623
    %951 = vmatprep.subr.bf16.mxu0 %v640
    %952 = vmatpush1.bf16.msra.mxu0 %v639
    %953 = vmatprep.subr.bf16.mxu0 %v656
    %954 = vmatpush1.bf16.msra.mxu0 %v655
    %955 = vmatprep.subr.bf16.mxu0 %v672
    %956 = vmatpush1.bf16.msra.mxu0 %v671
    %957 = vmatprep.subr.bf16.mxu0 0
    %958 = vmatpush1.bf16.msra.mxu0 0
    %959 = vmatprep.subr.bf16.mxu0 0
    %960 = vmatpush1.bf16.msra.mxu0 0
    %961 = vmatprep.subr.bf16.mxu0 0
    %962 = vmatpush1.bf16.msra.mxu0 0
    %963 = vmatprep.subr.bf16.mxu0 0
    %964 = vmatpush1.bf16.msra.mxu0 0
    %965 = vmatprep.subr.bf16.mxu0 0
    %966 = vmatpush1.bf16.msra.mxu0 0
    %967 = vmatprep.subr.bf16.mxu0 0
    %968 = vmatpush1.bf16.msra.mxu0 0
    %969 = vmatprep.subr.bf16.mxu0 0
    %970 = vmatpush1.bf16.msra.mxu0 0
    %971 = vmatprep.subr.bf16.mxu0 0
    %972 = vmatpush1.bf16.msra.mxu0 0
    %973 = vmatprep.subr.bf16.mxu0 0
    %974 = vmatpush1.bf16.msra.mxu0 0
    %975 = vmatprep.subr.bf16.mxu0 0
    %976 = vmatpush1.bf16.msra.mxu0 0
    %977 = vmatprep.subr.bf16.mxu0 0
    %978 = vmatpush1.bf16.msra.mxu0 0
    %979 = vmatprep.subr.bf16.mxu0 0
    %980 = vmatpush1.bf16.msra.mxu0 0
    %981 = vmatprep.mubr.bf16.mxu0 0
    %982 = vmatmul.mubr.bf16.gmra.mrb[0].mxu0 %v742
    %v983 = vpop.f32.mrb[0].mxu0
    %v984 = vadd.f32 %v384, %v983
    %v985 = vpop.f32.mrb[0].mxu0
    %v986 = vadd.f32 %v388, %v985
    %v987 = vpop.f32.mrb[0].mxu0
    %v988 = vpop.f32.mrb[0].mxu0
    %989 = vdwg.mxu0
    %990 = vmatprep.subr.bf16.mxu0 %v626
    %991 = vmatpush1.bf16.msra.mxu0 %v625
    %992 = vmatprep.subr.bf16.mxu0 %v642
    %993 = vmatpush1.bf16.msra.mxu0 %v641
    %994 = vmatprep.subr.bf16.mxu0 %v658
    %995 = vmatpush1.bf16.msra.mxu0 %v657
    %996 = vmatprep.subr.bf16.mxu0 %v674
    %997 = vmatpush1.bf16.msra.mxu0 %v673
    %998 = vmatprep.subr.bf16.mxu0 0
    %999 = vmatpush1.bf16.msra.mxu0 0
    %1000 = vmatprep.subr.bf16.mxu0 0
    %1001 = vmatpush1.bf16.msra.mxu0 0
    %1002 = vmatprep.subr.bf16.mxu0 0
    %1003 = vmatpush1.bf16.msra.mxu0 0
    %1004 = vmatprep.subr.bf16.mxu0 0
    %1005 = vmatpush1.bf16.msra.mxu0 0
    %1006 = vmatprep.subr.bf16.mxu0 0
    %1007 = vmatpush1.bf16.msra.mxu0 0
    %1008 = vmatprep.subr.bf16.mxu0 0
    %1009 = vmatpush1.bf16.msra.mxu0 0
    %1010 = vmatprep.subr.bf16.mxu0 0
    %1011 = vmatpush1.bf16.msra.mxu0 0
    %1012 = vmatprep.subr.bf16.mxu0 0
    %1013 = vmatpush1.bf16.msra.mxu0 0
    %1014 = vmatprep.subr.bf16.mxu0 0
    %1015 = vmatpush1.bf16.msra.mxu0 0
    %1016 = vmatprep.subr.bf16.mxu0 0
    %1017 = vmatpush1.bf16.msra.mxu0 0
    %1018 = vmatprep.subr.bf16.mxu0 0
    %1019 = vmatpush1.bf16.msra.mxu0 0
    %1020 = vmatprep.subr.bf16.mxu0 0
    %1021 = vmatpush1.bf16.msra.mxu0 0
    %1022 = vmatprep.mubr.bf16.mxu0 0
    %1023 = vmatmul.mubr.bf16.gmra.mrb[0].mxu0 %v742
    %v1024 = vpop.f32.mrb[0].mxu0
    %v1025 = vadd.f32 %v392, %v1024
    %v1026 = vpop.f32.mrb[0].mxu0
    %v1027 = vadd.f32 %v396, %v1026
    %v1028 = vpop.f32.mrb[0].mxu0
    %v1029 = vpop.f32.mrb[0].mxu0
    %1030 = vdwg.mxu0
    %1031 = vmatprep.subr.bf16.mxu0 %v628
    %1032 = vmatpush1.bf16.msra.mxu0 %v627
    %1033 = vmatprep.subr.bf16.mxu0 %v644
    %1034 = vmatpush1.bf16.msra.mxu0 %v643
    %1035 = vmatprep.subr.bf16.mxu0 %v660
    %1036 = vmatpush1.bf16.msra.mxu0 %v659
    %1037 = vmatprep.subr.bf16.mxu0 %v676
    %1038 = vmatpush1.bf16.msra.mxu0 %v675
    %1039 = vmatprep.subr.bf16.mxu0 0
    %1040 = vmatpush1.bf16.msra.mxu0 0
    %1041 = vmatprep.subr.bf16.mxu0 0
    %1042 = vmatpush1.bf16.msra.mxu0 0
    %1043 = vmatprep.subr.bf16.mxu0 0
    %1044 = vmatpush1.bf16.msra.mxu0 0
    %1045 = vmatprep.subr.bf16.mxu0 0
    %1046 = vmatpush1.bf16.msra.mxu0 0
    %1047 = vmatprep.subr.bf16.mxu0 0
    %1048 = vmatpush1.bf16.msra.mxu0 0
    %1049 = vmatprep.subr.bf16.mxu0 0
    %1050 = vmatpush1.bf16.msra.mxu0 0
    %1051 = vmatprep.subr.bf16.mxu0 0
    %1052 = vmatpush1.bf16.msra.mxu0 0
    %1053 = vmatprep.subr.bf16.mxu0 0
    %1054 = vmatpush1.bf16.msra.mxu0 0
    %1055 = vmatprep.subr.bf16.mxu0 0
    %1056 = vmatpush1.bf16.msra.mxu0 0
    %1057 = vmatprep.subr.bf16.mxu0 0
    %1058 = vmatpush1.bf16.msra.mxu0 0
    %1059 = vmatprep.subr.bf16.mxu0 0
    %1060 = vmatpush1.bf16.msra.mxu0 0
    %1061 = vmatprep.subr.bf16.mxu0 0
    %1062 = vmatpush1.bf16.msra.mxu0 0
    %1063 = vmatprep.mubr.bf16.mxu0 0
    %1064 = vmatmul.mubr.bf16.gmra.mrb[0].mxu0 %v742
    %v1065 = vpop.f32.mrb[0].mxu0
    %v1066 = vadd.f32 %v400, %v1065
    %v1067 = vpop.f32.mrb[0].mxu0
    %v1068 = vadd.f32 %v404, %v1067
    %v1069 = vpop.f32.mrb[0].mxu0
    %v1070 = vpop.f32.mrb[0].mxu0
    %1071 = vdwg.mxu0
    %v1072 = vmax.f32 %v779, 0.0
    %v1073 = vmax.f32 %v781, 0.0
    %v1074 = vmax.f32 %v820, 0.0
    %v1075 = vmax.f32 %v822, 0.0
    %v1076 = vmax.f32 %v861, 0.0
    %v1077 = vmax.f32 %v863, 0.0
    %v1078 = vmax.f32 %v902, 0.0
    %v1079 = vmax.f32 %v904, 0.0
    %v1080 = vmax.f32 %v943, 0.0
    %v1081 = vmax.f32 %v945, 0.0
    %v1082 = vmax.f32 %v984, 0.0
    %v1083 = vmax.f32 %v986, 0.0
    %v1084 = vmax.f32 %v1025, 0.0
    %v1085 = vmax.f32 %v1027, 0.0
    %v1086 = vmax.f32 %v1066, 0.0
    %v1087 = vmax.f32 %v1068, 0.0
    %v1088 = vld [vmem:[#allocation11] sm:$0xf]
    %v1089 = vld [vmem:[#allocation11 + $0x4] sm:$0xf]
    %v1090 = vld [vmem:[#allocation11 + $0x8] sm:$0xf]
    %v1091 = vld [vmem:[#allocation11 + $0xc] sm:$0xf]
    %v1092 = vld [vmem:[#allocation11 + $0x10] sm:$0xf]
    %v1093 = vld [vmem:[#allocation11 + $0x14] sm:$0xf]
    %v1094 = vld [vmem:[#allocation11 + $0x18] sm:$0xf]
    %v1095 = vld [vmem:[#allocation11 + $0x1c] sm:$0xf]
    %v1096 = vld [vmem:[#allocation11 + $0x20] sm:$0xf]
    %v1097 = vld [vmem:[#allocation11 + $0x24] sm:$0xf]
    %v1098 = vld [vmem:[#allocation11 + $0x28] sm:$0xf]
    %v1099 = vld [vmem:[#allocation11 + $0x2c] sm:$0xf]
    %v1100 = vld [vmem:[#allocation11 + $0x30] sm:$0xf]
    %v1101 = vld [vmem:[#allocation11 + $0x34] sm:$0xf]
    %v1102 = vld [vmem:[#allocation11 + $0x38] sm:$0xf]
    %v1103 = vld [vmem:[#allocation11 + $0x3c] sm:$0xf]
    %v1104 = vld [vmem:[#allocation11 + $0x40] sm:$0xf]
    %v1105 = vld [vmem:[#allocation11 + $0x44] sm:$0xf]
    %v1106 = vld [vmem:[#allocation11 + $0x48] sm:$0xf]
    %v1107 = vld [vmem:[#allocation11 + $0x4c] sm:$0xf]
    %v1108 = vld [vmem:[#allocation11 + $0x50] sm:$0xf]
    %v1109 = vld [vmem:[#allocation11 + $0x54] sm:$0xf]
    %v1110 = vld [vmem:[#allocation11 + $0x58] sm:$0xf]
    %v1111 = vld [vmem:[#allocation11 + $0x5c] sm:$0xf]
    %v1112 = vld [vmem:[#allocation11 + $0x60] sm:$0xf]
    %v1113 = vld [vmem:[#allocation11 + $0x64] sm:$0xf]
    %v1114 = vld [vmem:[#allocation11 + $0x68] sm:$0xf]
    %v1115 = vld [vmem:[#allocation11 + $0x6c] sm:$0xf]
    %v1116 = vld [vmem:[#allocation11 + $0x70] sm:$0xf]
    %v1117 = vld [vmem:[#allocation11 + $0x74] sm:$0xf]
    %v1118 = vld [vmem:[#allocation11 + $0x78] sm:$0xf]
    %v1119 = vld [vmem:[#allocation11 + $0x7c] sm:$0xf]
    %v1120 = vld [vmem:[#allocation11 + $0x80] sm:$0xf]
    %v1121 = vld [vmem:[#allocation11 + $0x84] sm:$0xf]
    %v1122 = vld [vmem:[#allocation11 + $0x88] sm:$0xf]
    %v1123 = vld [vmem:[#allocation11 + $0x8c] sm:$0xf]
    %v1124 = vld [vmem:[#allocation11 + $0x90] sm:$0xf]
    %v1125 = vld [vmem:[#allocation11 + $0x94] sm:$0xf]
    %v1126 = vld [vmem:[#allocation11 + $0x98] sm:$0xf]
    %v1127 = vld [vmem:[#allocation11 + $0x9c] sm:$0xf]
    %v1128 = vld [vmem:[#allocation11 + $0xa0] sm:$0xf]
    %v1129 = vld [vmem:[#allocation11 + $0xa4] sm:$0xf]
    %v1130 = vld [vmem:[#allocation11 + $0xa8] sm:$0xf]
    %v1131 = vld [vmem:[#allocation11 + $0xac] sm:$0xf]
    %v1132 = vld [vmem:[#allocation11 + $0xb0] sm:$0xf]
    %v1133 = vld [vmem:[#allocation11 + $0xb4] sm:$0xf]
    %v1134 = vld [vmem:[#allocation11 + $0xb8] sm:$0xf]
    %v1135 = vld [vmem:[#allocation11 + $0xbc] sm:$0xf]
    %v1136 = vld [vmem:[#allocation11 + $0xc0] sm:$0xf]
    %v1137 = vld [vmem:[#allocation11 + $0xc4] sm:$0xf]
    %v1138 = vld [vmem:[#allocation11 + $0xc8] sm:$0xf]
    %v1139 = vld [vmem:[#allocation11 + $0xcc] sm:$0xf]
    %v1140 = vld [vmem:[#allocation11 + $0xd0] sm:$0xf]
    %v1141 = vld [vmem:[#allocation11 + $0xd4] sm:$0xf]
    %v1142 = vld [vmem:[#allocation11 + $0xd8] sm:$0xf]
    %v1143 = vld [vmem:[#allocation11 + $0xdc] sm:$0xf]
    %v1144 = vld [vmem:[#allocation11 + $0xe0] sm:$0xf]
    %v1145 = vld [vmem:[#allocation11 + $0xe4] sm:$0xf]
    %v1146 = vld [vmem:[#allocation11 + $0xe8] sm:$0xf]
    %v1147 = vld [vmem:[#allocation11 + $0xec] sm:$0xf]
    %v1148 = vld [vmem:[#allocation11 + $0xf0] sm:$0xf]
    %v1149 = vld [vmem:[#allocation11 + $0xf4] sm:$0xf]
    %v1150 = vld [vmem:[#allocation11 + $0xf8] sm:$0xf]
    %v1151 = vld [vmem:[#allocation11 + $0xfc] sm:$0xf]
    %v1152 = vld [vmem:[#allocation11 + $0x100] sm:$0xf]
    %v1153 = vld [vmem:[#allocation11 + $0x104] sm:$0xf]
    %v1154 = vld [vmem:[#allocation11 + $0x108] sm:$0xf]
    %v1155 = vld [vmem:[#allocation11 + $0x10c] sm:$0xf]
    %v1156 = vld [vmem:[#allocation11 + $0x110] sm:$0xf]
    %v1157 = vld [vmem:[#allocation11 + $0x114] sm:$0xf]
    %v1158 = vld [vmem:[#allocation11 + $0x118] sm:$0xf]
    %v1159 = vld [vmem:[#allocation11 + $0x11c] sm:$0xf]
    %v1160 = vld [vmem:[#allocation11 + $0x120] sm:$0xf]
    %v1161 = vld [vmem:[#allocation11 + $0x124] sm:$0xf]
    %v1162 = vld [vmem:[#allocation11 + $0x128] sm:$0xf]
    %v1163 = vld [vmem:[#allocation11 + $0x12c] sm:$0xf]
    %v1164 = vld [vmem:[#allocation11 + $0x130] sm:$0xf]
    %v1165 = vld [vmem:[#allocation11 + $0x134] sm:$0xf]
    %v1166 = vld [vmem:[#allocation11 + $0x138] sm:$0xf]
    %v1167 = vld [vmem:[#allocation11 + $0x13c] sm:$0xf]
    %v1168 = vld [vmem:[#allocation11 + $0x140] sm:$0xf]
    %v1169 = vld [vmem:[#allocation11 + $0x144] sm:$0xf]
    %v1170 = vld [vmem:[#allocation11 + $0x148] sm:$0xf]
    %v1171 = vld [vmem:[#allocation11 + $0x14c] sm:$0xf]
    %v1172 = vld [vmem:[#allocation11 + $0x150] sm:$0xf]
    %v1173 = vld [vmem:[#allocation11 + $0x154] sm:$0xf]
    %v1174 = vld [vmem:[#allocation11 + $0x158] sm:$0xf]
    %v1175 = vld [vmem:[#allocation11 + $0x15c] sm:$0xf]
    %v1176 = vld [vmem:[#allocation11 + $0x160] sm:$0xf]
    %v1177 = vld [vmem:[#allocation11 + $0x164] sm:$0xf]
    %v1178 = vld [vmem:[#allocation11 + $0x168] sm:$0xf]
    %v1179 = vld [vmem:[#allocation11 + $0x16c] sm:$0xf]
    %v1180 = vld [vmem:[#allocation11 + $0x170] sm:$0xf]
    %v1181 = vld [vmem:[#allocation11 + $0x174] sm:$0xf]
    %v1182 = vld [vmem:[#allocation11 + $0x178] sm:$0xf]
    %v1183 = vld [vmem:[#allocation11 + $0x17c] sm:$0xf]
    %v1184 = vld [vmem:[#allocation11 + $0x180] sm:$0xf]
    %v1185 = vld [vmem:[#allocation11 + $0x184] sm:$0xf]
    %v1186 = vld [vmem:[#allocation11 + $0x188] sm:$0xf]
    %v1187 = vld [vmem:[#allocation11 + $0x18c] sm:$0xf]
    %v1188 = vld [vmem:[#allocation11 + $0x190] sm:$0xf]
    %v1189 = vld [vmem:[#allocation11 + $0x194] sm:$0xf]
    %v1190 = vld [vmem:[#allocation11 + $0x198] sm:$0xf]
    %v1191 = vld [vmem:[#allocation11 + $0x19c] sm:$0xf]
    %v1192 = vld [vmem:[#allocation11 + $0x1a0] sm:$0xf]
    %v1193 = vld [vmem:[#allocation11 + $0x1a4] sm:$0xf]
    %v1194 = vld [vmem:[#allocation11 + $0x1a8] sm:$0xf]
    %v1195 = vld [vmem:[#allocation11 + $0x1ac] sm:$0xf]
    %v1196 = vld [vmem:[#allocation11 + $0x1b0] sm:$0xf]
    %v1197 = vld [vmem:[#allocation11 + $0x1b4] sm:$0xf]
    %v1198 = vld [vmem:[#allocation11 + $0x1b8] sm:$0xf]
    %v1199 = vld [vmem:[#allocation11 + $0x1bc] sm:$0xf]
    %v1200 = vld [vmem:[#allocation11 + $0x1c0] sm:$0xf]
    %v1201 = vld [vmem:[#allocation11 + $0x1c4] sm:$0xf]
    %v1202 = vld [vmem:[#allocation11 + $0x1c8] sm:$0xf]
    %v1203 = vld [vmem:[#allocation11 + $0x1cc] sm:$0xf]
    %v1204 = vld [vmem:[#allocation11 + $0x1d0] sm:$0xf]
    %v1205 = vld [vmem:[#allocation11 + $0x1d4] sm:$0xf]
    %v1206 = vld [vmem:[#allocation11 + $0x1d8] sm:$0xf]
    %v1207 = vld [vmem:[#allocation11 + $0x1dc] sm:$0xf]
    %v1208 = vld [vmem:[#allocation11 + $0x1e0] sm:$0xf]
    %v1209 = vld [vmem:[#allocation11 + $0x1e4] sm:$0xf]
    %v1210 = vld [vmem:[#allocation11 + $0x1e8] sm:$0xf]
    %v1211 = vld [vmem:[#allocation11 + $0x1ec] sm:$0xf]
    %v1212 = vld [vmem:[#allocation11 + $0x1f0] sm:$0xf]
    %v1213 = vld [vmem:[#allocation11 + $0x1f4] sm:$0xf]
    %v1214 = vld [vmem:[#allocation11 + $0x1f8] sm:$0xf]
    %v1215 = vld [vmem:[#allocation11 + $0x1fc] sm:$0xf]
    %v1216 = vld [vmem:[#allocation11 + $0x200] sm:$0xf]
    %v1217 = vld [vmem:[#allocation11 + $0x204] sm:$0xf]
    %v1218 = vld [vmem:[#allocation11 + $0x208] sm:$0xf]
    %v1219 = vld [vmem:[#allocation11 + $0x20c] sm:$0xf]
    %v1220 = vld [vmem:[#allocation11 + $0x210] sm:$0xf]
    %v1221 = vld [vmem:[#allocation11 + $0x214] sm:$0xf]
    %v1222 = vld [vmem:[#allocation11 + $0x218] sm:$0xf]
    %v1223 = vld [vmem:[#allocation11 + $0x21c] sm:$0xf]
    %v1224 = vld [vmem:[#allocation11 + $0x220] sm:$0xf]
    %v1225 = vld [vmem:[#allocation11 + $0x224] sm:$0xf]
    %v1226 = vld [vmem:[#allocation11 + $0x228] sm:$0xf]
    %v1227 = vld [vmem:[#allocation11 + $0x22c] sm:$0xf]
    %v1228 = vld [vmem:[#allocation11 + $0x230] sm:$0xf]
    %v1229 = vld [vmem:[#allocation11 + $0x234] sm:$0xf]
    %v1230 = vld [vmem:[#allocation11 + $0x238] sm:$0xf]
    %v1231 = vld [vmem:[#allocation11 + $0x23c] sm:$0xf]
    %v1232 = vld [vmem:[#allocation11 + $0x240] sm:$0xf]
    %v1233 = vld [vmem:[#allocation11 + $0x244] sm:$0xf]
    %v1234 = vld [vmem:[#allocation11 + $0x248] sm:$0xf]
    %v1235 = vld [vmem:[#allocation11 + $0x24c] sm:$0xf]
    %v1236 = vld [vmem:[#allocation11 + $0x250] sm:$0xf]
    %v1237 = vld [vmem:[#allocation11 + $0x254] sm:$0xf]
    %v1238 = vld [vmem:[#allocation11 + $0x258] sm:$0xf]
    %v1239 = vld [vmem:[#allocation11 + $0x25c] sm:$0xf]
    %v1240 = vld [vmem:[#allocation11 + $0x260] sm:$0xf]
    %v1241 = vld [vmem:[#allocation11 + $0x264] sm:$0xf]
    %v1242 = vld [vmem:[#allocation11 + $0x268] sm:$0xf]
    %v1243 = vld [vmem:[#allocation11 + $0x26c] sm:$0xf]
    %v1244 = vld [vmem:[#allocation11 + $0x270] sm:$0xf]
    %v1245 = vld [vmem:[#allocation11 + $0x274] sm:$0xf]
    %v1246 = vld [vmem:[#allocation11 + $0x278] sm:$0xf]
    %v1247 = vld [vmem:[#allocation11 + $0x27c] sm:$0xf]
    %v1248 = vld [vmem:[#allocation11 + $0x280] sm:$0xf]
    %v1249 = vld [vmem:[#allocation11 + $0x284] sm:$0xf]
    %v1250 = vld [vmem:[#allocation11 + $0x288] sm:$0xf]
    %v1251 = vld [vmem:[#allocation11 + $0x28c] sm:$0xf]
    %v1252 = vld [vmem:[#allocation11 + $0x290] sm:$0xf]
    %v1253 = vld [vmem:[#allocation11 + $0x294] sm:$0xf]
    %v1254 = vld [vmem:[#allocation11 + $0x298] sm:$0xf]
    %v1255 = vld [vmem:[#allocation11 + $0x29c] sm:$0xf]
    %v1256 = vld [vmem:[#allocation11 + $0x2a0] sm:$0xf]
    %v1257 = vld [vmem:[#allocation11 + $0x2a4] sm:$0xf]
    %v1258 = vld [vmem:[#allocation11 + $0x2a8] sm:$0xf]
    %v1259 = vld [vmem:[#allocation11 + $0x2ac] sm:$0xf]
    %v1260 = vld [vmem:[#allocation11 + $0x2b0] sm:$0xf]
    %v1261 = vld [vmem:[#allocation11 + $0x2b4] sm:$0xf]
    %v1262 = vld [vmem:[#allocation11 + $0x2b8] sm:$0xf]
    %v1263 = vld [vmem:[#allocation11 + $0x2bc] sm:$0xf]
    %v1264 = vld [vmem:[#allocation11 + $0x2c0] sm:$0xf]
    %v1265 = vld [vmem:[#allocation11 + $0x2c4] sm:$0xf]
    %v1266 = vld [vmem:[#allocation11 + $0x2c8] sm:$0xf]
    %v1267 = vld [vmem:[#allocation11 + $0x2cc] sm:$0xf]
    %v1268 = vld [vmem:[#allocation11 + $0x2d0] sm:$0xf]
    %v1269 = vld [vmem:[#allocation11 + $0x2d4] sm:$0xf]
    %v1270 = vld [vmem:[#allocation11 + $0x2d8] sm:$0xf]
    %v1271 = vld [vmem:[#allocation11 + $0x2dc] sm:$0xf]
    %v1272 = vld [vmem:[#allocation11 + $0x2e0] sm:$0xf]
    %v1273 = vld [vmem:[#allocation11 + $0x2e4] sm:$0xf]
    %v1274 = vld [vmem:[#allocation11 + $0x2e8] sm:$0xf]
    %v1275 = vld [vmem:[#allocation11 + $0x2ec] sm:$0xf]
    %v1276 = vld [vmem:[#allocation11 + $0x2f0] sm:$0xf]
    %v1277 = vld [vmem:[#allocation11 + $0x2f4] sm:$0xf]
    %v1278 = vld [vmem:[#allocation11 + $0x2f8] sm:$0xf]
    %v1279 = vld [vmem:[#allocation11 + $0x2fc] sm:$0xf]
    %v1280 = vld [vmem:[#allocation11 + $0x300] sm:$0xf]
    %v1281 = vld [vmem:[#allocation11 + $0x304] sm:$0xf]
    %v1282 = vld [vmem:[#allocation11 + $0x308] sm:$0xf]
    %v1283 = vld [vmem:[#allocation11 + $0x30c] sm:$0xf]
    %v1284 = vld [vmem:[#allocation11 + $0x310] sm:$0xf]
    %v1285 = vld [vmem:[#allocation11 + $0x314] sm:$0xf]
    %v1286 = vld [vmem:[#allocation11 + $0x318] sm:$0xf]
    %v1287 = vld [vmem:[#allocation11 + $0x31c] sm:$0xf]
    %v1288 = vld [vmem:[#allocation11 + $0x320] sm:$0xf]
    %v1289 = vld [vmem:[#allocation11 + $0x324] sm:$0xf]
    %v1290 = vld [vmem:[#allocation11 + $0x328] sm:$0xf]
    %v1291 = vld [vmem:[#allocation11 + $0x32c] sm:$0xf]
    %v1292 = vld [vmem:[#allocation11 + $0x330] sm:$0xf]
    %v1293 = vld [vmem:[#allocation11 + $0x334] sm:$0xf]
    %v1294 = vld [vmem:[#allocation11 + $0x338] sm:$0xf]
    %v1295 = vld [vmem:[#allocation11 + $0x33c] sm:$0xf]
    %v1296 = vld [vmem:[#allocation11 + $0x340] sm:$0xf]
    %v1297 = vld [vmem:[#allocation11 + $0x344] sm:$0xf]
    %v1298 = vld [vmem:[#allocation11 + $0x348] sm:$0xf]
    %v1299 = vld [vmem:[#allocation11 + $0x34c] sm:$0xf]
    %v1300 = vld [vmem:[#allocation11 + $0x350] sm:$0xf]
    %v1301 = vld [vmem:[#allocation11 + $0x354] sm:$0xf]
    %v1302 = vld [vmem:[#allocation11 + $0x358] sm:$0xf]
    %v1303 = vld [vmem:[#allocation11 + $0x35c] sm:$0xf]
    %v1304 = vld [vmem:[#allocation11 + $0x360] sm:$0xf]
    %v1305 = vld [vmem:[#allocation11 + $0x364] sm:$0xf]
    %v1306 = vld [vmem:[#allocation11 + $0x368] sm:$0xf]
    %v1307 = vld [vmem:[#allocation11 + $0x36c] sm:$0xf]
    %v1308 = vld [vmem:[#allocation11 + $0x370] sm:$0xf]
    %v1309 = vld [vmem:[#allocation11 + $0x374] sm:$0xf]
    %v1310 = vld [vmem:[#allocation11 + $0x378] sm:$0xf]
    %v1311 = vld [vmem:[#allocation11 + $0x37c] sm:$0xf]
    %v1312 = vld [vmem:[#allocation11 + $0x380] sm:$0xf]
    %v1313 = vld [vmem:[#allocation11 + $0x384] sm:$0xf]
    %v1314 = vld [vmem:[#allocation11 + $0x388] sm:$0xf]
    %v1315 = vld [vmem:[#allocation11 + $0x38c] sm:$0xf]
    %v1316 = vld [vmem:[#allocation11 + $0x390] sm:$0xf]
    %v1317 = vld [vmem:[#allocation11 + $0x394] sm:$0xf]
    %v1318 = vld [vmem:[#allocation11 + $0x398] sm:$0xf]
    %v1319 = vld [vmem:[#allocation11 + $0x39c] sm:$0xf]
    %v1320 = vld [vmem:[#allocation11 + $0x3a0] sm:$0xf]
    %v1321 = vld [vmem:[#allocation11 + $0x3a4] sm:$0xf]
    %v1322 = vld [vmem:[#allocation11 + $0x3a8] sm:$0xf]
    %v1323 = vld [vmem:[#allocation11 + $0x3ac] sm:$0xf]
    %v1324 = vld [vmem:[#allocation11 + $0x3b0] sm:$0xf]
    %v1325 = vld [vmem:[#allocation11 + $0x3b4] sm:$0xf]
    %v1326 = vld [vmem:[#allocation11 + $0x3b8] sm:$0xf]
    %v1327 = vld [vmem:[#allocation11 + $0x3bc] sm:$0xf]
    %v1328 = vld [vmem:[#allocation11 + $0x3c0] sm:$0xf]
    %v1329 = vld [vmem:[#allocation11 + $0x3c4] sm:$0xf]
    %v1330 = vld [vmem:[#allocation11 + $0x3c8] sm:$0xf]
    %v1331 = vld [vmem:[#allocation11 + $0x3cc] sm:$0xf]
    %v1332 = vld [vmem:[#allocation11 + $0x3d0] sm:$0xf]
    %v1333 = vld [vmem:[#allocation11 + $0x3d4] sm:$0xf]
    %v1334 = vld [vmem:[#allocation11 + $0x3d8] sm:$0xf]
    %v1335 = vld [vmem:[#allocation11 + $0x3dc] sm:$0xf]
    %v1336 = vld [vmem:[#allocation11 + $0x3e0] sm:$0xf]
    %v1337 = vld [vmem:[#allocation11 + $0x3e4] sm:$0xf]
    %v1338 = vld [vmem:[#allocation11 + $0x3e8] sm:$0xf]
    %v1339 = vld [vmem:[#allocation11 + $0x3ec] sm:$0xf]
    %v1340 = vld [vmem:[#allocation11 + $0x3f0] sm:$0xf]
    %v1341 = vld [vmem:[#allocation11 + $0x3f4] sm:$0xf]
    %v1342 = vld [vmem:[#allocation11 + $0x3f8] sm:$0xf]
    %v1343 = vld [vmem:[#allocation11 + $0x3fc] sm:$0xf]
    %v1344 = vpack.c.bf16 %v1072, %v1072
    %v1345 = vpack.c.bf16 %v1073, %v1073
    %v1346 = vpack.c.bf16 %v1074, %v1074
    %v1347 = vpack.c.bf16 %v1075, %v1075
    %v1348 = vpack.c.bf16 %v1076, %v1076
    %v1349 = vpack.c.bf16 %v1077, %v1077
    %v1350 = vpack.c.bf16 %v1078, %v1078
    %v1351 = vpack.c.bf16 %v1079, %v1079
    %v1352 = vpack.c.bf16 %v1080, %v1080
    %v1353 = vpack.c.bf16 %v1081, %v1081
    %v1354 = vpack.c.bf16 %v1082, %v1082
    %v1355 = vpack.c.bf16 %v1083, %v1083
    %v1356 = vpack.c.bf16 %v1084, %v1084
    %v1357 = vpack.c.bf16 %v1085, %v1085
    %v1358 = vpack.c.bf16 %v1086, %v1086
    %v1359 = vpack.c.bf16 %v1087, %v1087
    %v1360 = vld [vmem:[#allocation5 + $0x4] sm:$0x1]
    %v1361 = vlaneseq
    %v1362 = vshrl.u32 %v1361, 7
    %v1363 = vsub.s32 0, %v1362
    %v1364 = vrot.slane %v1360, %v1363
    %v1621 = vunpack.c.l.b16 %v1088
    %v1622 = vunpack.c.l.b16 %v1089
    %v1623 = vunpack.c.l.b16 %v1090
    %v1624 = vunpack.c.l.b16 %v1091
    %v1625 = vunpack.c.l.b16 %v1092
    %v1626 = vunpack.c.l.b16 %v1093
    %v1627 = vunpack.c.l.b16 %v1094
    %v1628 = vunpack.c.l.b16 %v1095
    %v1629 = vunpack.c.l.b16 %v1096
    %v1630 = vunpack.c.l.b16 %v1097
    %v1631 = vunpack.c.l.b16 %v1098
    %v1632 = vunpack.c.l.b16 %v1099
    %v1633 = vunpack.c.l.b16 %v1100
    %v1634 = vunpack.c.l.b16 %v1101
    %v1635 = vunpack.c.l.b16 %v1102
    %v1636 = vunpack.c.l.b16 %v1103
    %v1637 = vunpack.c.l.b16 %v1104
    %v1638 = vunpack.c.l.b16 %v1105
    %v1639 = vunpack.c.l.b16 %v1106
    %v1640 = vunpack.c.l.b16 %v1107
    %v1641 = vunpack.c.l.b16 %v1108
    %v1642 = vunpack.c.l.b16 %v1109
    %v1643 = vunpack.c.l.b16 %v1110
    %v1644 = vunpack.c.l.b16 %v1111
    %v1645 = vunpack.c.l.b16 %v1112
    %v1646 = vunpack.c.l.b16 %v1113
    %v1647 = vunpack.c.l.b16 %v1114
    %v1648 = vunpack.c.l.b16 %v1115
    %v1649 = vunpack.c.l.b16 %v1116
    %v1650 = vunpack.c.l.b16 %v1117
    %v1651 = vunpack.c.l.b16 %v1118
    %v1652 = vunpack.c.l.b16 %v1119
    %v1653 = vunpack.c.l.b16 %v1120
    %v1654 = vunpack.c.l.b16 %v1121
    %v1655 = vunpack.c.l.b16 %v1122
    %v1656 = vunpack.c.l.b16 %v1123
    %v1657 = vunpack.c.l.b16 %v1124
    %v1658 = vunpack.c.l.b16 %v1125
    %v1659 = vunpack.c.l.b16 %v1126
    %v1660 = vunpack.c.l.b16 %v1127
    %v1661 = vunpack.c.l.b16 %v1128
    %v1662 = vunpack.c.l.b16 %v1129
    %v1663 = vunpack.c.l.b16 %v1130
    %v1664 = vunpack.c.l.b16 %v1131
    %v1665 = vunpack.c.l.b16 %v1132
    %v1666 = vunpack.c.l.b16 %v1133
    %v1667 = vunpack.c.l.b16 %v1134
    %v1668 = vunpack.c.l.b16 %v1135
    %v1669 = vunpack.c.l.b16 %v1136
    %v1670 = vunpack.c.l.b16 %v1137
    %v1671 = vunpack.c.l.b16 %v1138
    %v1672 = vunpack.c.l.b16 %v1139
    %v1673 = vunpack.c.l.b16 %v1140
    %v1674 = vunpack.c.l.b16 %v1141
    %v1675 = vunpack.c.l.b16 %v1142
    %v1676 = vunpack.c.l.b16 %v1143
    %v1677 = vunpack.c.l.b16 %v1144
    %v1678 = vunpack.c.l.b16 %v1145
    %v1679 = vunpack.c.l.b16 %v1146
    %v1680 = vunpack.c.l.b16 %v1147
    %v1681 = vunpack.c.l.b16 %v1148
    %v1682 = vunpack.c.l.b16 %v1149
    %v1683 = vunpack.c.l.b16 %v1150
    %v1684 = vunpack.c.l.b16 %v1151
    %v1685 = vunpack.c.l.b16 %v1152
    %v1686 = vunpack.c.l.b16 %v1153
    %v1687 = vunpack.c.l.b16 %v1154
    %v1688 = vunpack.c.l.b16 %v1155
    %v1689 = vunpack.c.l.b16 %v1156
    %v1690 = vunpack.c.l.b16 %v1157
    %v1691 = vunpack.c.l.b16 %v1158
    %v1692 = vunpack.c.l.b16 %v1159
    %v1693 = vunpack.c.l.b16 %v1160
    %v1694 = vunpack.c.l.b16 %v1161
    %v1695 = vunpack.c.l.b16 %v1162
    %v1696 = vunpack.c.l.b16 %v1163
    %v1697 = vunpack.c.l.b16 %v1164
    %v1698 = vunpack.c.l.b16 %v1165
    %v1699 = vunpack.c.l.b16 %v1166
    %v1700 = vunpack.c.l.b16 %v1167
    %v1701 = vunpack.c.l.b16 %v1168
    %v1702 = vunpack.c.l.b16 %v1169
    %v1703 = vunpack.c.l.b16 %v1170
    %v1704 = vunpack.c.l.b16 %v1171
    %v1705 = vunpack.c.l.b16 %v1172
    %v1706 = vunpack.c.l.b16 %v1173
    %v1707 = vunpack.c.l.b16 %v1174
    %v1708 = vunpack.c.l.b16 %v1175
    %v1709 = vunpack.c.l.b16 %v1176
    %v1710 = vunpack.c.l.b16 %v1177
    %v1711 = vunpack.c.l.b16 %v1178
    %v1712 = vunpack.c.l.b16 %v1179
    %v1713 = vunpack.c.l.b16 %v1180
    %v1714 = vunpack.c.l.b16 %v1181
    %v1715 = vunpack.c.l.b16 %v1182
    %v1716 = vunpack.c.l.b16 %v1183
    %v1717 = vunpack.c.l.b16 %v1184
    %v1718 = vunpack.c.l.b16 %v1185
    %v1719 = vunpack.c.l.b16 %v1186
    %v1720 = vunpack.c.l.b16 %v1187
    %v1721 = vunpack.c.l.b16 %v1188
    %v1722 = vunpack.c.l.b16 %v1189
    %v1723 = vunpack.c.l.b16 %v1190
    %v1724 = vunpack.c.l.b16 %v1191
    %v1725 = vunpack.c.l.b16 %v1192
    %v1726 = vunpack.c.l.b16 %v1193
    %v1727 = vunpack.c.l.b16 %v1194
    %v1728 = vunpack.c.l.b16 %v1195
    %v1729 = vunpack.c.l.b16 %v1196
    %v1730 = vunpack.c.l.b16 %v1197
    %v1731 = vunpack.c.l.b16 %v1198
    %v1732 = vunpack.c.l.b16 %v1199
    %v1733 = vunpack.c.l.b16 %v1200
    %v1734 = vunpack.c.l.b16 %v1201
    %v1735 = vunpack.c.l.b16 %v1202
    %v1736 = vunpack.c.l.b16 %v1203
    %v1737 = vunpack.c.l.b16 %v1204
    %v1738 = vunpack.c.l.b16 %v1205
    %v1739 = vunpack.c.l.b16 %v1206
    %v1740 = vunpack.c.l.b16 %v1207
    %v1741 = vunpack.c.l.b16 %v1208
    %v1742 = vunpack.c.l.b16 %v1209
    %v1743 = vunpack.c.l.b16 %v1210
    %v1744 = vunpack.c.l.b16 %v1211
    %v1745 = vunpack.c.l.b16 %v1212
    %v1746 = vunpack.c.l.b16 %v1213
    %v1747 = vunpack.c.l.b16 %v1214
    %v1748 = vunpack.c.l.b16 %v1215
    %v1749 = vunpack.c.l.b16 %v1216
    %v1750 = vunpack.c.l.b16 %v1217
    %v1751 = vunpack.c.l.b16 %v1218
    %v1752 = vunpack.c.l.b16 %v1219
    %v1753 = vunpack.c.l.b16 %v1220
    %v1754 = vunpack.c.l.b16 %v1221
    %v1755 = vunpack.c.l.b16 %v1222
    %v1756 = vunpack.c.l.b16 %v1223
    %v1757 = vunpack.c.l.b16 %v1224
    %v1758 = vunpack.c.l.b16 %v1225
    %v1759 = vunpack.c.l.b16 %v1226
    %v1760 = vunpack.c.l.b16 %v1227
    %v1761 = vunpack.c.l.b16 %v1228
    %v1762 = vunpack.c.l.b16 %v1229
    %v1763 = vunpack.c.l.b16 %v1230
    %v1764 = vunpack.c.l.b16 %v1231
    %v1765 = vunpack.c.l.b16 %v1232
    %v1766 = vunpack.c.l.b16 %v1233
    %v1767 = vunpack.c.l.b16 %v1234
    %v1768 = vunpack.c.l.b16 %v1235
    %v1769 = vunpack.c.l.b16 %v1236
    %v1770 = vunpack.c.l.b16 %v1237
    %v1771 = vunpack.c.l.b16 %v1238
    %v1772 = vunpack.c.l.b16 %v1239
    %v1773 = vunpack.c.l.b16 %v1240
    %v1774 = vunpack.c.l.b16 %v1241
    %v1775 = vunpack.c.l.b16 %v1242
    %v1776 = vunpack.c.l.b16 %v1243
    %v1777 = vunpack.c.l.b16 %v1244
    %v1778 = vunpack.c.l.b16 %v1245
    %v1779 = vunpack.c.l.b16 %v1246
    %v1780 = vunpack.c.l.b16 %v1247
    %v1781 = vunpack.c.l.b16 %v1248
    %v1782 = vunpack.c.l.b16 %v1249
    %v1783 = vunpack.c.l.b16 %v1250
    %v1784 = vunpack.c.l.b16 %v1251
    %v1785 = vunpack.c.l.b16 %v1252
    %v1786 = vunpack.c.l.b16 %v1253
    %v1787 = vunpack.c.l.b16 %v1254
    %v1788 = vunpack.c.l.b16 %v1255
    %v1789 = vunpack.c.l.b16 %v1256
    %v1790 = vunpack.c.l.b16 %v1257
    %v1791 = vunpack.c.l.b16 %v1258
    %v1792 = vunpack.c.l.b16 %v1259
    %v1793 = vunpack.c.l.b16 %v1260
    %v1794 = vunpack.c.l.b16 %v1261
    %v1795 = vunpack.c.l.b16 %v1262
    %v1796 = vunpack.c.l.b16 %v1263
    %v1797 = vunpack.c.l.b16 %v1264
    %v1798 = vunpack.c.l.b16 %v1265
    %v1799 = vunpack.c.l.b16 %v1266
    %v1800 = vunpack.c.l.b16 %v1267
    %v1801 = vunpack.c.l.b16 %v1268
    %v1802 = vunpack.c.l.b16 %v1269
    %v1803 = vunpack.c.l.b16 %v1270
    %v1804 = vunpack.c.l.b16 %v1271
    %v1805 = vunpack.c.l.b16 %v1272
    %v1806 = vunpack.c.l.b16 %v1273
    %v1807 = vunpack.c.l.b16 %v1274
    %v1808 = vunpack.c.l.b16 %v1275
    %v1809 = vunpack.c.l.b16 %v1276
    %v1810 = vunpack.c.l.b16 %v1277
    %v1811 = vunpack.c.l.b16 %v1278
    %v1812 = vunpack.c.l.b16 %v1279
    %v1813 = vunpack.c.l.b16 %v1280
    %v1814 = vunpack.c.l.b16 %v1281
    %v1815 = vunpack.c.l.b16 %v1282
    %v1816 = vunpack.c.l.b16 %v1283
    %v1817 = vunpack.c.l.b16 %v1284
    %v1818 = vunpack.c.l.b16 %v1285
    %v1819 = vunpack.c.l.b16 %v1286
    %v1820 = vunpack.c.l.b16 %v1287
    %v1821 = vunpack.c.l.b16 %v1288
    %v1822 = vunpack.c.l.b16 %v1289
    %v1823 = vunpack.c.l.b16 %v1290
    %v1824 = vunpack.c.l.b16 %v1291
    %v1825 = vunpack.c.l.b16 %v1292
    %v1826 = vunpack.c.l.b16 %v1293
    %v1827 = vunpack.c.l.b16 %v1294
    %v1828 = vunpack.c.l.b16 %v1295
    %v1829 = vunpack.c.l.b16 %v1296
    %v1830 = vunpack.c.l.b16 %v1297
    %v1831 = vunpack.c.l.b16 %v1298
    %v1832 = vunpack.c.l.b16 %v1299
    %v1833 = vunpack.c.l.b16 %v1300
    %v1834 = vunpack.c.l.b16 %v1301
    %v1835 = vunpack.c.l.b16 %v1302
    %v1836 = vunpack.c.l.b16 %v1303
    %v1837 = vunpack.c.l.b16 %v1304
    %v1838 = vunpack.c.l.b16 %v1305
    %v1839 = vunpack.c.l.b16 %v1306
    %v1840 = vunpack.c.l.b16 %v1307
    %v1841 = vunpack.c.l.b16 %v1308
    %v1842 = vunpack.c.l.b16 %v1309
    %v1843 = vunpack.c.l.b16 %v1310
    %v1844 = vunpack.c.l.b16 %v1311
    %v1845 = vunpack.c.l.b16 %v1312
    %v1846 = vunpack.c.l.b16 %v1313
    %v1847 = vunpack.c.l.b16 %v1314
    %v1848 = vunpack.c.l.b16 %v1315
    %v1849 = vunpack.c.l.b16 %v1316
    %v1850 = vunpack.c.l.b16 %v1317
    %v1851 = vunpack.c.l.b16 %v1318
    %v1852 = vunpack.c.l.b16 %v1319
    %v1853 = vunpack.c.l.b16 %v1320
    %v1854 = vunpack.c.l.b16 %v1321
    %v1855 = vunpack.c.l.b16 %v1322
    %v1856 = vunpack.c.l.b16 %v1323
    %v1857 = vunpack.c.l.b16 %v1324
    %v1858 = vunpack.c.l.b16 %v1325
    %v1859 = vunpack.c.l.b16 %v1326
    %v1860 = vunpack.c.l.b16 %v1327
    %v1861 = vunpack.c.l.b16 %v1328
    %v1862 = vunpack.c.l.b16 %v1329
    %v1863 = vunpack.c.l.b16 %v1330
    %v1864 = vunpack.c.l.b16 %v1331
    %v1865 = vunpack.c.l.b16 %v1332
    %v1866 = vunpack.c.l.b16 %v1333
    %v1867 = vunpack.c.l.b16 %v1334
    %v1868 = vunpack.c.l.b16 %v1335
    %v1869 = vunpack.c.l.b16 %v1336
    %v1870 = vunpack.c.l.b16 %v1337
    %v1871 = vunpack.c.l.b16 %v1338
    %v1872 = vunpack.c.l.b16 %v1339
    %v1873 = vunpack.c.l.b16 %v1340
    %v1874 = vunpack.c.l.b16 %v1341
    %v1875 = vunpack.c.l.b16 %v1342
    %v1876 = vunpack.c.l.b16 %v1343
    %v1877 = vpack.c.b16 %v1622, %v1621
    %v1878 = vpack.c.b16 %v1624, %v1623
    %v1879 = vpack.c.b16 %v1626, %v1625
    %v1880 = vpack.c.b16 %v1628, %v1627
    %v1881 = vpack.c.b16 %v1630, %v1629
    %v1882 = vpack.c.b16 %v1632, %v1631
    %v1883 = vpack.c.b16 %v1634, %v1633
    %v1884 = vpack.c.b16 %v1636, %v1635
    %v1885 = vpack.c.b16 %v1638, %v1637
    %v1886 = vpack.c.b16 %v1640, %v1639
    %v1887 = vpack.c.b16 %v1642, %v1641
    %v1888 = vpack.c.b16 %v1644, %v1643
    %v1889 = vpack.c.b16 %v1646, %v1645
    %v1890 = vpack.c.b16 %v1648, %v1647
    %v1891 = vpack.c.b16 %v1650, %v1649
    %v1892 = vpack.c.b16 %v1652, %v1651
    %v1893 = vpack.c.b16 %v1654, %v1653
    %v1894 = vpack.c.b16 %v1656, %v1655
    %v1895 = vpack.c.b16 %v1658, %v1657
    %v1896 = vpack.c.b16 %v1660, %v1659
    %v1897 = vpack.c.b16 %v1662, %v1661
    %v1898 = vpack.c.b16 %v1664, %v1663
    %v1899 = vpack.c.b16 %v1666, %v1665
    %v1900 = vpack.c.b16 %v1668, %v1667
    %v1901 = vpack.c.b16 %v1670, %v1669
    %v1902 = vpack.c.b16 %v1672, %v1671
    %v1903 = vpack.c.b16 %v1674, %v1673
    %v1904 = vpack.c.b16 %v1676, %v1675
    %v1905 = vpack.c.b16 %v1678, %v1677
    %v1906 = vpack.c.b16 %v1680, %v1679
    %v1907 = vpack.c.b16 %v1682, %v1681
    %v1908 = vpack.c.b16 %v1684, %v1683
    %v1909 = vpack.c.b16 %v1686, %v1685
    %v1910 = vpack.c.b16 %v1688, %v1687
    %v1911 = vpack.c.b16 %v1690, %v1689
    %v1912 = vpack.c.b16 %v1692, %v1691
    %v1913 = vpack.c.b16 %v1694, %v1693
    %v1914 = vpack.c.b16 %v1696, %v1695
    %v1915 = vpack.c.b16 %v1698, %v1697
    %v1916 = vpack.c.b16 %v1700, %v1699
    %v1917 = vpack.c.b16 %v1702, %v1701
    %v1918 = vpack.c.b16 %v1704, %v1703
    %v1919 = vpack.c.b16 %v1706, %v1705
    %v1920 = vpack.c.b16 %v1708, %v1707
    %v1921 = vpack.c.b16 %v1710, %v1709
    %v1922 = vpack.c.b16 %v1712, %v1711
    %v1923 = vpack.c.b16 %v1714, %v1713
    %v1924 = vpack.c.b16 %v1716, %v1715
    %v1925 = vpack.c.b16 %v1718, %v1717
    %v1926 = vpack.c.b16 %v1720, %v1719
    %v1927 = vpack.c.b16 %v1722, %v1721
    %v1928 = vpack.c.b16 %v1724, %v1723
    %v1929 = vpack.c.b16 %v1726, %v1725
    %v1930 = vpack.c.b16 %v1728, %v1727
    %v1931 = vpack.c.b16 %v1730, %v1729
    %v1932 = vpack.c.b16 %v1732, %v1731
    %v1933 = vpack.c.b16 %v1734, %v1733
    %v1934 = vpack.c.b16 %v1736, %v1735
    %v1935 = vpack.c.b16 %v1738, %v1737
    %v1936 = vpack.c.b16 %v1740, %v1739
    %v1937 = vpack.c.b16 %v1742, %v1741
    %v1938 = vpack.c.b16 %v1744, %v1743
    %v1939 = vpack.c.b16 %v1746, %v1745
    %v1940 = vpack.c.b16 %v1748, %v1747
    %v1941 = vpack.c.b16 %v1750, %v1749
    %v1942 = vpack.c.b16 %v1752, %v1751
    %v1943 = vpack.c.b16 %v1754, %v1753
    %v1944 = vpack.c.b16 %v1756, %v1755
    %v1945 = vpack.c.b16 %v1758, %v1757
    %v1946 = vpack.c.b16 %v1760, %v1759
    %v1947 = vpack.c.b16 %v1762, %v1761
    %v1948 = vpack.c.b16 %v1764, %v1763
    %v1949 = vpack.c.b16 %v1766, %v1765
    %v1950 = vpack.c.b16 %v1768, %v1767
    %v1951 = vpack.c.b16 %v1770, %v1769
    %v1952 = vpack.c.b16 %v1772, %v1771
    %v1953 = vpack.c.b16 %v1774, %v1773
    %v1954 = vpack.c.b16 %v1776, %v1775
    %v1955 = vpack.c.b16 %v1778, %v1777
    %v1956 = vpack.c.b16 %v1780, %v1779
    %v1957 = vpack.c.b16 %v1782, %v1781
    %v1958 = vpack.c.b16 %v1784, %v1783
    %v1959 = vpack.c.b16 %v1786, %v1785
    %v1960 = vpack.c.b16 %v1788, %v1787
    %v1961 = vpack.c.b16 %v1790, %v1789
    %v1962 = vpack.c.b16 %v1792, %v1791
    %v1963 = vpack.c.b16 %v1794, %v1793
    %v1964 = vpack.c.b16 %v1796, %v1795
    %v1965 = vpack.c.b16 %v1798, %v1797
    %v1966 = vpack.c.b16 %v1800, %v1799
    %v1967 = vpack.c.b16 %v1802, %v1801
    %v1968 = vpack.c.b16 %v1804, %v1803
    %v1969 = vpack.c.b16 %v1806, %v1805
    %v1970 = vpack.c.b16 %v1808, %v1807
    %v1971 = vpack.c.b16 %v1810, %v1809
    %v1972 = vpack.c.b16 %v1812, %v1811
    %v1973 = vpack.c.b16 %v1814, %v1813
    %v1974 = vpack.c.b16 %v1816, %v1815
    %v1975 = vpack.c.b16 %v1818, %v1817
    %v1976 = vpack.c.b16 %v1820, %v1819
    %v1977 = vpack.c.b16 %v1822, %v1821
    %v1978 = vpack.c.b16 %v1824, %v1823
    %v1979 = vpack.c.b16 %v1826, %v1825
    %v1980 = vpack.c.b16 %v1828, %v1827
    %v1981 = vpack.c.b16 %v1830, %v1829
    %v1982 = vpack.c.b16 %v1832, %v1831
    %v1983 = vpack.c.b16 %v1834, %v1833
    %v1984 = vpack.c.b16 %v1836, %v1835
    %v1985 = vpack.c.b16 %v1838, %v1837
    %v1986 = vpack.c.b16 %v1840, %v1839
    %v1987 = vpack.c.b16 %v1842, %v1841
    %v1988 = vpack.c.b16 %v1844, %v1843
    %v1989 = vpack.c.b16 %v1846, %v1845
    %v1990 = vpack.c.b16 %v1848, %v1847
    %v1991 = vpack.c.b16 %v1850, %v1849
    %v1992 = vpack.c.b16 %v1852, %v1851
    %v1993 = vpack.c.b16 %v1854, %v1853
    %v1994 = vpack.c.b16 %v1856, %v1855
    %v1995 = vpack.c.b16 %v1858, %v1857
    %v1996 = vpack.c.b16 %v1860, %v1859
    %v1997 = vpack.c.b16 %v1862, %v1861
    %v1998 = vpack.c.b16 %v1864, %v1863
    %v1999 = vpack.c.b16 %v1866, %v1865
    %v2000 = vpack.c.b16 %v1868, %v1867
    %v2001 = vpack.c.b16 %v1870, %v1869
    %v2002 = vpack.c.b16 %v1872, %v1871
    %v2003 = vpack.c.b16 %v1874, %v1873
    %v2004 = vpack.c.b16 %v1876, %v1875
    %2133 = vmatprep.subr.bf16.mxu0 0
    %2134 = vmatpush1.bf16.msra.mxu0 %v1877
    %2135 = vmatprep.subr.bf16.mxu0 0
    %2136 = vmatpush1.bf16.msra.mxu0 %v1878
    %2137 = vmatprep.subr.bf16.mxu0 0
    %2138 = vmatpush1.bf16.msra.mxu0 %v1879
    %2139 = vmatprep.subr.bf16.mxu0 0
    %2140 = vmatpush1.bf16.msra.mxu0 %v1880
    %2141 = vmatprep.subr.bf16.mxu0 0
    %2142 = vmatpush1.bf16.msra.mxu0 %v1881
    %2143 = vmatprep.subr.bf16.mxu0 0
    %2144 = vmatpush1.bf16.msra.mxu0 %v1882
    %2145 = vmatprep.subr.bf16.mxu0 0
    %2146 = vmatpush1.bf16.msra.mxu0 %v1883
    %2147 = vmatprep.subr.bf16.mxu0 0
    %2148 = vmatpush1.bf16.msra.mxu0 %v1884
    %2149 = vmatprep.subr.bf16.mxu0 0
    %2150 = vmatpush1.bf16.msra.mxu0 %v1885
    %2151 = vmatprep.subr.bf16.mxu0 0
    %2152 = vmatpush1.bf16.msra.mxu0 %v1886
    %2153 = vmatprep.subr.bf16.mxu0 0
    %2154 = vmatpush1.bf16.msra.mxu0 %v1887
    %2155 = vmatprep.subr.bf16.mxu0 0
    %2156 = vmatpush1.bf16.msra.mxu0 %v1888
    %2157 = vmatprep.subr.bf16.mxu0 0
    %2158 = vmatpush1.bf16.msra.mxu0 %v1889
    %2159 = vmatprep.subr.bf16.mxu0 0
    %2160 = vmatpush1.bf16.msra.mxu0 %v1890
    %2161 = vmatprep.subr.bf16.mxu0 0
    %2162 = vmatpush1.bf16.msra.mxu0 %v1891
    %2163 = vmatprep.subr.bf16.mxu0 0
    %2164 = vmatpush1.bf16.msra.mxu0 %v1892
    %2165 = vmatprep.mubr.bf16.mxu0 %v1345
    %2166 = vmatmul.mubr.bf16.gmra.mrb[0].mxu0 %v1344
    %v2167 = vpop.f32.mrb[0].mxu0
    %v2168 = vadd.f32 %v1364, %v2167
    %v2169 = vpop.f32.mrb[0].mxu0
    %v2170 = vpop.f32.mrb[0].mxu0
    %v2171 = vpop.f32.mrb[0].mxu0
    %2172 = vdwg.mxu0
    %2173 = vmatprep.subr.bf16.mxu0 0
    %2174 = vmatpush1.bf16.msra.mxu0 %v1893
    %2175 = vmatprep.subr.bf16.mxu0 0
    %2176 = vmatpush1.bf16.msra.mxu0 %v1894
    %2177 = vmatprep.subr.bf16.mxu0 0
    %2178 = vmatpush1.bf16.msra.mxu0 %v1895
    %2179 = vmatprep.subr.bf16.mxu0 0
    %2180 = vmatpush1.bf16.msra.mxu0 %v1896
    %2181 = vmatprep.subr.bf16.mxu0 0
    %2182 = vmatpush1.bf16.msra.mxu0 %v1897
    %2183 = vmatprep.subr.bf16.mxu0 0
    %2184 = vmatpush1.bf16.msra.mxu0 %v1898
    %2185 = vmatprep.subr.bf16.mxu0 0
    %2186 = vmatpush1.bf16.msra.mxu0 %v1899
    %2187 = vmatprep.subr.bf16.mxu0 0
    %2188 = vmatpush1.bf16.msra.mxu0 %v1900
    %2189 = vmatprep.subr.bf16.mxu0 0
    %2190 = vmatpush1.bf16.msra.mxu0 %v1901
    %2191 = vmatprep.subr.bf16.mxu0 0
    %2192 = vmatpush1.bf16.msra.mxu0 %v1902
    %2193 = vmatprep.subr.bf16.mxu0 0
    %2194 = vmatpush1.bf16.msra.mxu0 %v1903
    %2195 = vmatprep.subr.bf16.mxu0 0
    %2196 = vmatpush1.bf16.msra.mxu0 %v1904
    %2197 = vmatprep.subr.bf16.mxu0 0
    %2198 = vmatpush1.bf16.msra.mxu0 %v1905
    %2199 = vmatprep.subr.bf16.mxu0 0
    %2200 = vmatpush1.bf16.msra.mxu0 %v1906
    %2201 = vmatprep.subr.bf16.mxu0 0
    %2202 = vmatpush1.bf16.msra.mxu0 %v1907
    %2203 = vmatprep.subr.bf16.mxu0 0
    %2204 = vmatpush1.bf16.msra.mxu0 %v1908
    %2205 = vmatprep.mubr.bf16.mxu0 %v1347
    %2206 = vmatmul.mubr.bf16.gmra.mrb[0].mxu0 %v1346
    %v2207 = vpop.f32.mrb[0].mxu0
    %v2208 = vadd.f32 %v2168, %v2207
    %v2209 = vpop.f32.mrb[0].mxu0
    %v2210 = vpop.f32.mrb[0].mxu0
    %v2211 = vpop.f32.mrb[0].mxu0
    %2212 = vdwg.mxu0
    %2213 = vmatprep.subr.bf16.mxu0 0
    %2214 = vmatpush1.bf16.msra.mxu0 %v1909
    %2215 = vmatprep.subr.bf16.mxu0 0
    %2216 = vmatpush1.bf16.msra.mxu0 %v1910
    %2217 = vmatprep.subr.bf16.mxu0 0
    %2218 = vmatpush1.bf16.msra.mxu0 %v1911
    %2219 = vmatprep.subr.bf16.mxu0 0
    %2220 = vmatpush1.bf16.msra.mxu0 %v1912
    %2221 = vmatprep.subr.bf16.mxu0 0
    %2222 = vmatpush1.bf16.msra.mxu0 %v1913
    %2223 = vmatprep.subr.bf16.mxu0 0
    %2224 = vmatpush1.bf16.msra.mxu0 %v1914
    %2225 = vmatprep.subr.bf16.mxu0 0
    %2226 = vmatpush1.bf16.msra.mxu0 %v1915
    %2227 = vmatprep.subr.bf16.mxu0 0
    %2228 = vmatpush1.bf16.msra.mxu0 %v1916
    %2229 = vmatprep.subr.bf16.mxu0 0
    %2230 = vmatpush1.bf16.msra.mxu0 %v1917
    %2231 = vmatprep.subr.bf16.mxu0 0
    %2232 = vmatpush1.bf16.msra.mxu0 %v1918
    %2233 = vmatprep.subr.bf16.mxu0 0
    %2234 = vmatpush1.bf16.msra.mxu0 %v1919
    %2235 = vmatprep.subr.bf16.mxu0 0
    %2236 = vmatpush1.bf16.msra.mxu0 %v1920
    %2237 = vmatprep.subr.bf16.mxu0 0
    %2238 = vmatpush1.bf16.msra.mxu0 %v1921
    %2239 = vmatprep.subr.bf16.mxu0 0
    %2240 = vmatpush1.bf16.msra.mxu0 %v1922
    %2241 = vmatprep.subr.bf16.mxu0 0
    %2242 = vmatpush1.bf16.msra.mxu0 %v1923
    %2243 = vmatprep.subr.bf16.mxu0 0
    %2244 = vmatpush1.bf16.msra.mxu0 %v1924
    %2245 = vmatprep.mubr.bf16.mxu0 %v1349
    %2246 = vmatmul.mubr.bf16.gmra.mrb[0].mxu0 %v1348
    %v2247 = vpop.f32.mrb[0].mxu0
    %v2248 = vadd.f32 %v2208, %v2247
    %v2249 = vpop.f32.mrb[0].mxu0
    %v2250 = vpop.f32.mrb[0].mxu0
    %v2251 = vpop.f32.mrb[0].mxu0
    %2252 = vdwg.mxu0
    %2253 = vmatprep.subr.bf16.mxu0 0
    %2254 = vmatpush1.bf16.msra.mxu0 %v1925
    %2255 = vmatprep.subr.bf16.mxu0 0
    %2256 = vmatpush1.bf16.msra.mxu0 %v1926
    %2257 = vmatprep.subr.bf16.mxu0 0
    %2258 = vmatpush1.bf16.msra.mxu0 %v1927
    %2259 = vmatprep.subr.bf16.mxu0 0
    %2260 = vmatpush1.bf16.msra.mxu0 %v1928
    %2261 = vmatprep.subr.bf16.mxu0 0
    %2262 = vmatpush1.bf16.msra.mxu0 %v1929
    %2263 = vmatprep.subr.bf16.mxu0 0
    %2264 = vmatpush1.bf16.msra.mxu0 %v1930
    %2265 = vmatprep.subr.bf16.mxu0 0
    %2266 = vmatpush1.bf16.msra.mxu0 %v1931
    %2267 = vmatprep.subr.bf16.mxu0 0
    %2268 = vmatpush1.bf16.msra.mxu0 %v1932
    %2269 = vmatprep.subr.bf16.mxu0 0
    %2270 = vmatpush1.bf16.msra.mxu0 %v1933
    %2271 = vmatprep.subr.bf16.mxu0 0
    %2272 = vmatpush1.bf16.msra.mxu0 %v1934
    %2273 = vmatprep.subr.bf16.mxu0 0
    %2274 = vmatpush1.bf16.msra.mxu0 %v1935
    %2275 = vmatprep.subr.bf16.mxu0 0
    %2276 = vmatpush1.bf16.msra.mxu0 %v1936
    %2277 = vmatprep.subr.bf16.mxu0 0
    %2278 = vmatpush1.bf16.msra.mxu0 %v1937
    %2279 = vmatprep.subr.bf16.mxu0 0
    %2280 = vmatpush1.bf16.msra.mxu0 %v1938
    %2281 = vmatprep.subr.bf16.mxu0 0
    %2282 = vmatpush1.bf16.msra.mxu0 %v1939
    %2283 = vmatprep.subr.bf16.mxu0 0
    %2284 = vmatpush1.bf16.msra.mxu0 %v1940
    %2285 = vmatprep.mubr.bf16.mxu0 %v1351
    %2286 = vmatmul.mubr.bf16.gmra.mrb[0].mxu0 %v1350
    %v2287 = vpop.f32.mrb[0].mxu0
    %v2288 = vadd.f32 %v2248, %v2287
    %v2289 = vpop.f32.mrb[0].mxu0
    %v2290 = vpop.f32.mrb[0].mxu0
    %v2291 = vpop.f32.mrb[0].mxu0
    %2292 = vdwg.mxu0
    %2293 = vmatprep.subr.bf16.mxu0 0
    %2294 = vmatpush1.bf16.msra.mxu0 %v1941
    %2295 = vmatprep.subr.bf16.mxu0 0
    %2296 = vmatpush1.bf16.msra.mxu0 %v1942
    %2297 = vmatprep.subr.bf16.mxu0 0
    %2298 = vmatpush1.bf16.msra.mxu0 %v1943
    %2299 = vmatprep.subr.bf16.mxu0 0
    %2300 = vmatpush1.bf16.msra.mxu0 %v1944
    %2301 = vmatprep.subr.bf16.mxu0 0
    %2302 = vmatpush1.bf16.msra.mxu0 %v1945
    %2303 = vmatprep.subr.bf16.mxu0 0
    %2304 = vmatpush1.bf16.msra.mxu0 %v1946
    %2305 = vmatprep.subr.bf16.mxu0 0
    %2306 = vmatpush1.bf16.msra.mxu0 %v1947
    %2307 = vmatprep.subr.bf16.mxu0 0
    %2308 = vmatpush1.bf16.msra.mxu0 %v1948
    %2309 = vmatprep.subr.bf16.mxu0 0
    %2310 = vmatpush1.bf16.msra.mxu0 %v1949
    %2311 = vmatprep.subr.bf16.mxu0 0
    %2312 = vmatpush1.bf16.msra.mxu0 %v1950
    %2313 = vmatprep.subr.bf16.mxu0 0
    %2314 = vmatpush1.bf16.msra.mxu0 %v1951
    %2315 = vmatprep.subr.bf16.mxu0 0
    %2316 = vmatpush1.bf16.msra.mxu0 %v1952
    %2317 = vmatprep.subr.bf16.mxu0 0
    %2318 = vmatpush1.bf16.msra.mxu0 %v1953
    %2319 = vmatprep.subr.bf16.mxu0 0
    %2320 = vmatpush1.bf16.msra.mxu0 %v1954
    %2321 = vmatprep.subr.bf16.mxu0 0
    %2322 = vmatpush1.bf16.msra.mxu0 %v1955
    %2323 = vmatprep.subr.bf16.mxu0 0
    %2324 = vmatpush1.bf16.msra.mxu0 %v1956
    %2325 = vmatprep.mubr.bf16.mxu0 %v1353
    %2326 = vmatmul.mubr.bf16.gmra.mrb[0].mxu0 %v1352
    %v2327 = vpop.f32.mrb[0].mxu0
    %v2328 = vadd.f32 %v2288, %v2327
    %v2329 = vpop.f32.mrb[0].mxu0
    %v2330 = vpop.f32.mrb[0].mxu0
    %v2331 = vpop.f32.mrb[0].mxu0
    %2332 = vdwg.mxu0
    %2333 = vmatprep.subr.bf16.mxu0 0
    %2334 = vmatpush1.bf16.msra.mxu0 %v1957
    %2335 = vmatprep.subr.bf16.mxu0 0
    %2336 = vmatpush1.bf16.msra.mxu0 %v1958
    %2337 = vmatprep.subr.bf16.mxu0 0
    %2338 = vmatpush1.bf16.msra.mxu0 %v1959
    %2339 = vmatprep.subr.bf16.mxu0 0
    %2340 = vmatpush1.bf16.msra.mxu0 %v1960
    %2341 = vmatprep.subr.bf16.mxu0 0
    %2342 = vmatpush1.bf16.msra.mxu0 %v1961
    %2343 = vmatprep.subr.bf16.mxu0 0
    %2344 = vmatpush1.bf16.msra.mxu0 %v1962
    %2345 = vmatprep.subr.bf16.mxu0 0
    %2346 = vmatpush1.bf16.msra.mxu0 %v1963
    %2347 = vmatprep.subr.bf16.mxu0 0
    %2348 = vmatpush1.bf16.msra.mxu0 %v1964
    %2349 = vmatprep.subr.bf16.mxu0 0
    %2350 = vmatpush1.bf16.msra.mxu0 %v1965
    %2351 = vmatprep.subr.bf16.mxu0 0
    %2352 = vmatpush1.bf16.msra.mxu0 %v1966
    %2353 = vmatprep.subr.bf16.mxu0 0
    %2354 = vmatpush1.bf16.msra.mxu0 %v1967
    %2355 = vmatprep.subr.bf16.mxu0 0
    %2356 = vmatpush1.bf16.msra.mxu0 %v1968
    %2357 = vmatprep.subr.bf16.mxu0 0
    %2358 = vmatpush1.bf16.msra.mxu0 %v1969
    %2359 = vmatprep.subr.bf16.mxu0 0
    %2360 = vmatpush1.bf16.msra.mxu0 %v1970
    %2361 = vmatprep.subr.bf16.mxu0 0
    %2362 = vmatpush1.bf16.msra.mxu0 %v1971
    %2363 = vmatprep.subr.bf16.mxu0 0
    %2364 = vmatpush1.bf16.msra.mxu0 %v1972
    %2365 = vmatprep.mubr.bf16.mxu0 %v1355
    %2366 = vmatmul.mubr.bf16.gmra.mrb[0].mxu0 %v1354
    %v2367 = vpop.f32.mrb[0].mxu0
    %v2368 = vadd.f32 %v2328, %v2367
    %v2369 = vpop.f32.mrb[0].mxu0
    %v2370 = vpop.f32.mrb[0].mxu0
    %v2371 = vpop.f32.mrb[0].mxu0
    %2372 = vdwg.mxu0
    %2373 = vmatprep.subr.bf16.mxu0 0
    %2374 = vmatpush1.bf16.msra.mxu0 %v1973
    %2375 = vmatprep.subr.bf16.mxu0 0
    %2376 = vmatpush1.bf16.msra.mxu0 %v1974
    %2377 = vmatprep.subr.bf16.mxu0 0
    %2378 = vmatpush1.bf16.msra.mxu0 %v1975
    %2379 = vmatprep.subr.bf16.mxu0 0
    %2380 = vmatpush1.bf16.msra.mxu0 %v1976
    %2381 = vmatprep.subr.bf16.mxu0 0
    %2382 = vmatpush1.bf16.msra.mxu0 %v1977
    %2383 = vmatprep.subr.bf16.mxu0 0
    %2384 = vmatpush1.bf16.msra.mxu0 %v1978
    %2385 = vmatprep.subr.bf16.mxu0 0
    %2386 = vmatpush1.bf16.msra.mxu0 %v1979
    %2387 = vmatprep.subr.bf16.mxu0 0
    %2388 = vmatpush1.bf16.msra.mxu0 %v1980
    %2389 = vmatprep.subr.bf16.mxu0 0
    %2390 = vmatpush1.bf16.msra.mxu0 %v1981
    %2391 = vmatprep.subr.bf16.mxu0 0
    %2392 = vmatpush1.bf16.msra.mxu0 %v1982
    %2393 = vmatprep.subr.bf16.mxu0 0
    %2394 = vmatpush1.bf16.msra.mxu0 %v1983
    %2395 = vmatprep.subr.bf16.mxu0 0
    %2396 = vmatpush1.bf16.msra.mxu0 %v1984
    %2397 = vmatprep.subr.bf16.mxu0 0
    %2398 = vmatpush1.bf16.msra.mxu0 %v1985
    %2399 = vmatprep.subr.bf16.mxu0 0
    %2400 = vmatpush1.bf16.msra.mxu0 %v1986
    %2401 = vmatprep.subr.bf16.mxu0 0
    %2402 = vmatpush1.bf16.msra.mxu0 %v1987
    %2403 = vmatprep.subr.bf16.mxu0 0
    %2404 = vmatpush1.bf16.msra.mxu0 %v1988
    %2405 = vmatprep.mubr.bf16.mxu0 %v1357
    %2406 = vmatmul.mubr.bf16.gmra.mrb[0].mxu0 %v1356
    %v2407 = vpop.f32.mrb[0].mxu0
    %v2408 = vadd.f32 %v2368, %v2407
    %v2409 = vpop.f32.mrb[0].mxu0
    %v2410 = vpop.f32.mrb[0].mxu0
    %v2411 = vpop.f32.mrb[0].mxu0
    %2412 = vdwg.mxu0
    %2413 = vmatprep.subr.bf16.mxu0 0
    %2414 = vmatpush1.bf16.msra.mxu0 %v1989
    %2415 = vmatprep.subr.bf16.mxu0 0
    %2416 = vmatpush1.bf16.msra.mxu0 %v1990
    %2417 = vmatprep.subr.bf16.mxu0 0
    %2418 = vmatpush1.bf16.msra.mxu0 %v1991
    %2419 = vmatprep.subr.bf16.mxu0 0
    %2420 = vmatpush1.bf16.msra.mxu0 %v1992
    %2421 = vmatprep.subr.bf16.mxu0 0
    %2422 = vmatpush1.bf16.msra.mxu0 %v1993
    %2423 = vmatprep.subr.bf16.mxu0 0
    %2424 = vmatpush1.bf16.msra.mxu0 %v1994
    %2425 = vmatprep.subr.bf16.mxu0 0
    %2426 = vmatpush1.bf16.msra.mxu0 %v1995
    %2427 = vmatprep.subr.bf16.mxu0 0
    %2428 = vmatpush1.bf16.msra.mxu0 %v1996
    %2429 = vmatprep.subr.bf16.mxu0 0
    %2430 = vmatpush1.bf16.msra.mxu0 %v1997
    %2431 = vmatprep.subr.bf16.mxu0 0
    %2432 = vmatpush1.bf16.msra.mxu0 %v1998
    %2433 = vmatprep.subr.bf16.mxu0 0
    %2434 = vmatpush1.bf16.msra.mxu0 %v1999
    %2435 = vmatprep.subr.bf16.mxu0 0
    %2436 = vmatpush1.bf16.msra.mxu0 %v2000
    %2437 = vmatprep.subr.bf16.mxu0 0
    %2438 = vmatpush1.bf16.msra.mxu0 %v2001
    %2439 = vmatprep.subr.bf16.mxu0 0
    %2440 = vmatpush1.bf16.msra.mxu0 %v2002
    %2441 = vmatprep.subr.bf16.mxu0 0
    %2442 = vmatpush1.bf16.msra.mxu0 %v2003
    %2443 = vmatprep.subr.bf16.mxu0 0
    %2444 = vmatpush1.bf16.msra.mxu0 %v2004
    %2445 = vmatprep.mubr.bf16.mxu0 %v1359
    %2446 = vmatmul.mubr.bf16.gmra.mrb[0].mxu0 %v1358
    %v2447 = vpop.f32.mrb[0].mxu0
    %v2448 = vadd.f32 %v2408, %v2447
    %v2449 = vpop.f32.mrb[0].mxu0
    %v2450 = vpop.f32.mrb[0].mxu0
    %v2451 = vpop.f32.mrb[0].mxu0
    %2452 = vdwg.mxu0
    %v2453 = vadd.f32 %v270, %v2448
    %v2454 = vld [vmem:[#allocation5 + $0x5] sm:$0x1]
    %v2455 = vld [vmem:[#allocation5 + $0x6] sm:$0x1]
    %v2456 = vsel %vm200, %v2453, 0.0
    %2457 = vadd.xlane.f32.xlu0 %v2456
    %v2458 = vpop.xlane.xlu0 %2457
    %v2459 = vmul.f32 %v2458, %v250
    %v2460 = vsub.f32 %v2453, %v2459
    %v2461 = vmul.f32 %v2460, %v2460
    %v2462 = vsel %vm200, %v2461, 0.0
    %2463 = vadd.xlane.f32.xlu0 %v2462
    %v2464 = vpop.xlane.xlu0 %2463
    %v2465 = vmul.f32 %v2464, %v250
    %v2466 = vadd.f32 %v2465, 1e-05
    %v2467 = vrsqrt.pop %v2466
    %v2468 = vmul.f32 %v2460, %v2467
    %v2469 = vlaneseq
    %v2470 = vshrl.u32 %v2469, 7
    %v2471 = vsub.s32 0, %v2470
    %v2472 = vrot.slane %v2454, %v2471
    %v2473 = vmul.f32 %v2468, %v2472
    %v2474 = vlaneseq
    %v2475 = vshrl.u32 %v2474, 7
    %v2476 = vsub.s32 0, %v2475
    %v2477 = vrot.slane %v2455, %v2476
    %v2478 = vadd.f32 %v2473, %v2477
    %v2479 = vld [vmem:[#allocation8 + $0x28] sm:$0xf]
    %v2480 = vld [vmem:[#allocation8 + $0x2c] sm:$0xf]
    %v2481 = vld [vmem:[#allocation8 + $0x30] sm:$0xf]
    %v2482 = vld [vmem:[#allocation8 + $0x34] sm:$0xf]
    %v2483 = vld [vmem:[#allocation8 + $0x38] sm:$0xf]
    %v2484 = vld [vmem:[#allocation8 + $0x3c] sm:$0xf]
    %v2485 = vld [vmem:[#allocation8 + $0x40] sm:$0xf]
    %v2486 = vld [vmem:[#allocation8 + $0x44] sm:$0xf]
    %v2487 = vpack.c.bf16 %v2478, %v2478
    %v2488 = vld [vmem:[#allocation5 + $0x7] sm:$0x1]
    %v2489 = vlaneseq
    %v2490 = vshrl.u32 %v2489, 7
    %v2491 = vsub.s32 0, %v2490
    %v2492 = vrot.slane %v2488, %v2491
    %v2501 = vunpack.c.l.b16 %v2479
    %v2502 = vunpack.c.l.b16 %v2480
    %v2503 = vunpack.c.l.b16 %v2481
    %v2504 = vunpack.c.l.b16 %v2482
    %v2505 = vunpack.c.l.b16 %v2483
    %v2506 = vunpack.c.l.b16 %v2484
    %v2507 = vunpack.c.l.b16 %v2485
    %v2508 = vunpack.c.l.b16 %v2486
    %v2509 = vpack.c.b16 %v2502, %v2501
    %v2510 = vpack.c.b16 %v2504, %v2503
    %v2511 = vpack.c.b16 %v2506, %v2505
    %v2512 = vpack.c.b16 %v2508, %v2507
    %v2518 = vsel %vm200, %v2487, 0
    %2520 = vmatprep.subr.bf16.mxu0 0
    %2521 = vmatpush1.bf16.msra.mxu0 %v2509
    %2522 = vmatprep.subr.bf16.mxu0 0
    %2523 = vmatpush1.bf16.msra.mxu0 %v2510
    %2524 = vmatprep.subr.bf16.mxu0 0
    %2525 = vmatpush1.bf16.msra.mxu0 %v2511
    %2526 = vmatprep.subr.bf16.mxu0 0
    %2527 = vmatpush1.bf16.msra.mxu0 %v2512
    %2528 = vmatprep.subr.bf16.mxu0 0
    %2529 = vmatpush1.bf16.msra.mxu0 0
    %2530 = vmatprep.subr.bf16.mxu0 0
    %2531 = vmatpush1.bf16.msra.mxu0 0
    %2532 = vmatprep.subr.bf16.mxu0 0
    %2533 = vmatpush1.bf16.msra.mxu0 0
    %2534 = vmatprep.subr.bf16.mxu0 0
    %2535 = vmatpush1.bf16.msra.mxu0 0
    %2536 = vmatprep.subr.bf16.mxu0 0
    %2537 = vmatpush1.bf16.msra.mxu0 0
    %2538 = vmatprep.subr.bf16.mxu0 0
    %2539 = vmatpush1.bf16.msra.mxu0 0
    %2540 = vmatprep.subr.bf16.mxu0 0
    %2541 = vmatpush1.bf16.msra.mxu0 0
    %2542 = vmatprep.subr.bf16.mxu0 0
    %2543 = vmatpush1.bf16.msra.mxu0 0
    %2544 = vmatprep.subr.bf16.mxu0 0
    %2545 = vmatpush1.bf16.msra.mxu0 0
    %2546 = vmatprep.subr.bf16.mxu0 0
    %2547 = vmatpush1.bf16.msra.mxu0 0
    %2548 = vmatprep.subr.bf16.mxu0 0
    %2549 = vmatpush1.bf16.msra.mxu0 0
    %2550 = vmatprep.subr.bf16.mxu0 0
    %2551 = vmatpush1.bf16.msra.mxu0 0
    %2552 = vmatprep.mubr.bf16.mxu0 0
    %2553 = vmatmul.mubr.bf16.gmra.mrb[0].mxu0 %v2518
    %v2554 = vpop.f32.mrb[0].mxu0
    %v2555 = vadd.f32 %v2492, %v2554
    %v2556 = vpop.f32.mrb[0].mxu0
    %v2557 = vpop.f32.mrb[0].mxu0
    %v2558 = vpop.f32.mrb[0].mxu0
    %2559 = vdwg.mxu0
    %v2560 = vadd.f32 %v2478, %v2555
    %v2561 = vld [vmem:[#allocation5 + $0x8] sm:$0x1]
    %v2562 = vld [vmem:[#allocation5 + $0x9] sm:$0x1]
    %v2563 = vsel %vm200, %v2560, 0.0
    %2564 = vadd.xlane.f32.xlu0 %v2563
    %v2565 = vpop.xlane.xlu0 %2564
    %v2566 = vmul.f32 %v2565, %v250
    %v2567 = vsub.f32 %v2560, %v2566
    %v2568 = vmul.f32 %v2567, %v2567
    %v2569 = vsel %vm200, %v2568, 0.0
    %2570 = vadd.xlane.f32.xlu0 %v2569
    %v2571 = vpop.xlane.xlu0 %2570
    %v2572 = vmul.f32 %v2571, %v250
    %v2573 = vadd.f32 %v2572, 1e-05
    %v2574 = vrsqrt.pop %v2573
    %v2575 = vmul.f32 %v2567, %v2574
    %v2576 = vlaneseq
    %v2577 = vshrl.u32 %v2576, 7
    %v2578 = vsub.s32 0, %v2577
    %v2579 = vrot.slane %v2561, %v2578
    %v2580 = vmul.f32 %v2575, %v2579
    %v2581 = vlaneseq
    %v2582 = vshrl.u32 %v2581, 7
    %v2583 = vsub.s32 0, %v2582
    %v2584 = vrot.slane %v2562, %v2583
    %v2585 = vadd.f32 %v2580, %v2584
    %s2586 = scalar_lea.vmem [#allocation10], 512
    %v2587 = vld [vmem:[%s2586] sm:$0xff]
    %v2588 = vld [vmem:[%s2586 + $0x8] sm:$0xff]
    %v2589 = vld [vmem:[%s2586 + $0x10] sm:$0xff]
    %v2590 = vld [vmem:[%s2586 + $0x18] sm:$0xff]
    %v2591 = vld [vmem:[%s2586 + $0x20] sm:$0xff]
    %v2592 = vld [vmem:[%s2586 + $0x28] sm:$0xff]
    %v2593 = vld [vmem:[%s2586 + $0x30] sm:$0xff]
    %v2594 = vld [vmem:[%s2586 + $0x38] sm:$0xff]
    %v2595 = vld [vmem:[%s2586 + $0x40] sm:$0xff]
    %v2596 = vld [vmem:[%s2586 + $0x48] sm:$0xff]
    %v2597 = vld [vmem:[%s2586 + $0x50] sm:$0xff]
    %v2598 = vld [vmem:[%s2586 + $0x58] sm:$0xff]
    %v2599 = vld [vmem:[%s2586 + $0x60] sm:$0xff]
    %v2600 = vld [vmem:[%s2586 + $0x68] sm:$0xff]
    %v2601 = vld [vmem:[%s2586 + $0x70] sm:$0xff]
    %v2602 = vld [vmem:[%s2586 + $0x78] sm:$0xff]
    %v2603 = vld [vmem:[%s2586 + $0x80] sm:$0xff]
    %v2604 = vld [vmem:[%s2586 + $0x88] sm:$0xff]
    %v2605 = vld [vmem:[%s2586 + $0x90] sm:$0xff]
    %v2606 = vld [vmem:[%s2586 + $0x98] sm:$0xff]
    %v2607 = vld [vmem:[%s2586 + $0xa0] sm:$0xff]
    %v2608 = vld [vmem:[%s2586 + $0xa8] sm:$0xff]
    %v2609 = vld [vmem:[%s2586 + $0xb0] sm:$0xff]
    %v2610 = vld [vmem:[%s2586 + $0xb8] sm:$0xff]
    %v2611 = vld [vmem:[%s2586 + $0xc0] sm:$0xff]
    %v2612 = vld [vmem:[%s2586 + $0xc8] sm:$0xff]
    %v2613 = vld [vmem:[%s2586 + $0xd0] sm:$0xff]
    %v2614 = vld [vmem:[%s2586 + $0xd8] sm:$0xff]
    %v2615 = vld [vmem:[%s2586 + $0xe0] sm:$0xff]
    %v2616 = vld [vmem:[%s2586 + $0xe8] sm:$0xff]
    %v2617 = vld [vmem:[%s2586 + $0xf0] sm:$0xff]
    %v2618 = vld [vmem:[%s2586 + $0xf8] sm:$0xff]
    %v2619 = vld [vmem:[%s2586 + $0x100] sm:$0xff]
    %v2620 = vld [vmem:[%s2586 + $0x108] sm:$0xff]
    %v2621 = vld [vmem:[%s2586 + $0x110] sm:$0xff]
    %v2622 = vld [vmem:[%s2586 + $0x118] sm:$0xff]
    %v2623 = vld [vmem:[%s2586 + $0x120] sm:$0xff]
    %v2624 = vld [vmem:[%s2586 + $0x128] sm:$0xff]
    %v2625 = vld [vmem:[%s2586 + $0x130] sm:$0xff]
    %v2626 = vld [vmem:[%s2586 + $0x138] sm:$0xff]
    %v2627 = vld [vmem:[%s2586 + $0x140] sm:$0xff]
    %v2628 = vld [vmem:[%s2586 + $0x148] sm:$0xff]
    %v2629 = vld [vmem:[%s2586 + $0x150] sm:$0xff]
    %v2630 = vld [vmem:[%s2586 + $0x158] sm:$0xff]
    %v2631 = vld [vmem:[%s2586 + $0x160] sm:$0xff]
    %v2632 = vld [vmem:[%s2586 + $0x168] sm:$0xff]
    %v2633 = vld [vmem:[%s2586 + $0x170] sm:$0xff]
    %v2634 = vld [vmem:[%s2586 + $0x178] sm:$0xff]
    %v2635 = vld [vmem:[%s2586 + $0x180] sm:$0xff]
    %v2636 = vld [vmem:[%s2586 + $0x188] sm:$0xff]
    %v2637 = vld [vmem:[%s2586 + $0x190] sm:$0xff]
    %v2638 = vld [vmem:[%s2586 + $0x198] sm:$0xff]
    %v2639 = vld [vmem:[%s2586 + $0x1a0] sm:$0xff]
    %v2640 = vld [vmem:[%s2586 + $0x1a8] sm:$0xff]
    %v2641 = vld [vmem:[%s2586 + $0x1b0] sm:$0xff]
    %v2642 = vld [vmem:[%s2586 + $0x1b8] sm:$0xff]
    %v2643 = vld [vmem:[%s2586 + $0x1c0] sm:$0xff]
    %v2644 = vld [vmem:[%s2586 + $0x1c8] sm:$0xff]
    %v2645 = vld [vmem:[%s2586 + $0x1d0] sm:$0xff]
    %v2646 = vld [vmem:[%s2586 + $0x1d8] sm:$0xff]
    %v2647 = vld [vmem:[%s2586 + $0x1e0] sm:$0xff]
    %v2648 = vld [vmem:[%s2586 + $0x1e8] sm:$0xff]
    %v2649 = vld [vmem:[%s2586 + $0x1f0] sm:$0xff]
    %v2650 = vld [vmem:[%s2586 + $0x1f8] sm:$0xff]
    %v2651 = vpack.c.bf16 %v2585, %v2585
    %s2652 = scalar_lea.vmem [#allocation7], 1
    %v2653 = vld [vmem:[%s2652] ss:$2 sm:$0xff]
    %s2654 = scalar_lea.vmem [#allocation7], 17
    %v2655 = vld [vmem:[%s2654] ss:$2 sm:$0xff]
    %v2658 = vlaneseq
    %v2659 = vshrl.u32 %v2658, 7
    %v2660 = vsub.s32 0, %v2659
    %v2661 = vrot.slane %v2653, %v2660
    %v2662 = vlaneseq
    %v2663 = vshrl.u32 %v2662, 7
    %v2664 = vsub.s32 1, %v2663
    %v2665 = vrot.slane %v2653, %v2664
    %v2666 = vlaneseq
    %v2667 = vshrl.u32 %v2666, 7
    %v2668 = vsub.s32 2, %v2667
    %v2669 = vrot.slane %v2653, %v2668
    %v2670 = vlaneseq
    %v2671 = vshrl.u32 %v2670, 7
    %v2672 = vsub.s32 3, %v2671
    %v2673 = vrot.slane %v2653, %v2672
    %v2674 = vlaneseq
    %v2675 = vshrl.u32 %v2674, 7
    %v2676 = vsub.s32 4, %v2675
    %v2677 = vrot.slane %v2653, %v2676
    %v2678 = vlaneseq
    %v2679 = vshrl.u32 %v2678, 7
    %v2680 = vsub.s32 5, %v2679
    %v2681 = vrot.slane %v2653, %v2680
    %v2682 = vlaneseq
    %v2683 = vshrl.u32 %v2682, 7
    %v2684 = vsub.s32 6, %v2683
    %v2685 = vrot.slane %v2653, %v2684
    %v2686 = vlaneseq
    %v2687 = vshrl.u32 %v2686, 7
    %v2688 = vsub.s32 7, %v2687
    %v2689 = vrot.slane %v2653, %v2688
    %v2690 = vlaneseq
    %v2691 = vshrl.u32 %v2690, 7
    %v2692 = vsub.s32 0, %v2691
    %v2693 = vrot.slane %v2655, %v2692
    %v2694 = vlaneseq
    %v2695 = vshrl.u32 %v2694, 7
    %v2696 = vsub.s32 1, %v2695
    %v2697 = vrot.slane %v2655, %v2696
    %v2698 = vlaneseq
    %v2699 = vshrl.u32 %v2698, 7
    %v2700 = vsub.s32 2, %v2699
    %v2701 = vrot.slane %v2655, %v2700
    %v2702 = vlaneseq
    %v2703 = vshrl.u32 %v2702, 7
    %v2704 = vsub.s32 3, %v2703
    %v2705 = vrot.slane %v2655, %v2704
    %v2706 = vlaneseq
    %v2707 = vshrl.u32 %v2706, 7
    %v2708 = vsub.s32 4, %v2707
    %v2709 = vrot.slane %v2655, %v2708
    %v2710 = vlaneseq
    %v2711 = vshrl.u32 %v2710, 7
    %v2712 = vsub.s32 5, %v2711
    %v2713 = vrot.slane %v2655, %v2712
    %v2714 = vlaneseq
    %v2715 = vshrl.u32 %v2714, 7
    %v2716 = vsub.s32 6, %v2715
    %v2717 = vrot.slane %v2655, %v2716
    %v2718 = vlaneseq
    %v2719 = vshrl.u32 %v2718, 7
    %v2720 = vsub.s32 7, %v2719
    %v2721 = vrot.slane %v2655, %v2720
    %v2802 = vunpack.c.l.b16 %v2587
    %v2803 = vunpack.c.h.b16 %v2587
    %v2804 = vunpack.c.l.b16 %v2588
    %v2805 = vunpack.c.h.b16 %v2588
    %v2806 = vunpack.c.l.b16 %v2589
    %v2807 = vunpack.c.h.b16 %v2589
    %v2808 = vunpack.c.l.b16 %v2590
    %v2809 = vunpack.c.h.b16 %v2590
    %v2810 = vunpack.c.l.b16 %v2591
    %v2811 = vunpack.c.h.b16 %v2591
    %v2812 = vunpack.c.l.b16 %v2592
    %v2813 = vunpack.c.h.b16 %v2592
    %v2814 = vunpack.c.l.b16 %v2593
    %v2815 = vunpack.c.h.b16 %v2593
    %v2816 = vunpack.c.l.b16 %v2594
    %v2817 = vunpack.c.h.b16 %v2594
    %v2818 = vunpack.c.l.b16 %v2595
    %v2819 = vunpack.c.h.b16 %v2595
    %v2820 = vunpack.c.l.b16 %v2596
    %v2821 = vunpack.c.h.b16 %v2596
    %v2822 = vunpack.c.l.b16 %v2597
    %v2823 = vunpack.c.h.b16 %v2597
    %v2824 = vunpack.c.l.b16 %v2598
    %v2825 = vunpack.c.h.b16 %v2598
    %v2826 = vunpack.c.l.b16 %v2599
    %v2827 = vunpack.c.h.b16 %v2599
    %v2828 = vunpack.c.l.b16 %v2600
    %v2829 = vunpack.c.h.b16 %v2600
    %v2830 = vunpack.c.l.b16 %v2601
    %v2831 = vunpack.c.h.b16 %v2601
    %v2832 = vunpack.c.l.b16 %v2602
    %v2833 = vunpack.c.h.b16 %v2602
    %v2834 = vunpack.c.l.b16 %v2603
    %v2835 = vunpack.c.h.b16 %v2603
    %v2836 = vunpack.c.l.b16 %v2604
    %v2837 = vunpack.c.h.b16 %v2604
    %v2838 = vunpack.c.l.b16 %v2605
    %v2839 = vunpack.c.h.b16 %v2605
    %v2840 = vunpack.c.l.b16 %v2606
    %v2841 = vunpack.c.h.b16 %v2606
    %v2842 = vunpack.c.l.b16 %v2607
    %v2843 = vunpack.c.h.b16 %v2607
    %v2844 = vunpack.c.l.b16 %v2608
    %v2845 = vunpack.c.h.b16 %v2608
    %v2846 = vunpack.c.l.b16 %v2609
    %v2847 = vunpack.c.h.b16 %v2609
    %v2848 = vunpack.c.l.b16 %v2610
    %v2849 = vunpack.c.h.b16 %v2610
    %v2850 = vunpack.c.l.b16 %v2611
    %v2851 = vunpack.c.h.b16 %v2611
    %v2852 = vunpack.c.l.b16 %v2612
    %v2853 = vunpack.c.h.b16 %v2612
    %v2854 = vunpack.c.l.b16 %v2613
    %v2855 = vunpack.c.h.b16 %v2613
    %v2856 = vunpack.c.l.b16 %v2614
    %v2857 = vunpack.c.h.b16 %v2614
    %v2858 = vunpack.c.l.b16 %v2615
    %v2859 = vunpack.c.h.b16 %v2615
    %v2860 = vunpack.c.l.b16 %v2616
    %v2861 = vunpack.c.h.b16 %v2616
    %v2862 = vunpack.c.l.b16 %v2617
    %v2863 = vunpack.c.h.b16 %v2617
    %v2864 = vunpack.c.l.b16 %v2618
    %v2865 = vunpack.c.h.b16 %v2618
    %v2866 = vunpack.c.l.b16 %v2619
    %v2867 = vunpack.c.h.b16 %v2619
    %v2868 = vunpack.c.l.b16 %v2620
    %v2869 = vunpack.c.h.b16 %v2620
    %v2870 = vunpack.c.l.b16 %v2621
    %v2871 = vunpack.c.h.b16 %v2621
    %v2872 = vunpack.c.l.b16 %v2622
    %v2873 = vunpack.c.h.b16 %v2622
    %v2874 = vunpack.c.l.b16 %v2623
    %v2875 = vunpack.c.h.b16 %v2623
    %v2876 = vunpack.c.l.b16 %v2624
    %v2877 = vunpack.c.h.b16 %v2624
    %v2878 = vunpack.c.l.b16 %v2625
    %v2879 = vunpack.c.h.b16 %v2625
    %v2880 = vunpack.c.l.b16 %v2626
    %v2881 = vunpack.c.h.b16 %v2626
    %v2882 = vunpack.c.l.b16 %v2627
    %v2883 = vunpack.c.h.b16 %v2627
    %v2884 = vunpack.c.l.b16 %v2628
    %v2885 = vunpack.c.h.b16 %v2628
    %v2886 = vunpack.c.l.b16 %v2629
    %v2887 = vunpack.c.h.b16 %v2629
    %v2888 = vunpack.c.l.b16 %v2630
    %v2889 = vunpack.c.h.b16 %v2630
    %v2890 = vunpack.c.l.b16 %v2631
    %v2891 = vunpack.c.h.b16 %v2631
    %v2892 = vunpack.c.l.b16 %v2632
    %v2893 = vunpack.c.h.b16 %v2632
    %v2894 = vunpack.c.l.b16 %v2633
    %v2895 = vunpack.c.h.b16 %v2633
    %v2896 = vunpack.c.l.b16 %v2634
    %v2897 = vunpack.c.h.b16 %v2634
    %v2898 = vunpack.c.l.b16 %v2635
    %v2899 = vunpack.c.h.b16 %v2635
    %v2900 = vunpack.c.l.b16 %v2636
    %v2901 = vunpack.c.h.b16 %v2636
    %v2902 = vunpack.c.l.b16 %v2637
    %v2903 = vunpack.c.h.b16 %v2637
    %v2904 = vunpack.c.l.b16 %v2638
    %v2905 = vunpack.c.h.b16 %v2638
    %v2906 = vunpack.c.l.b16 %v2639
    %v2907 = vunpack.c.h.b16 %v2639
    %v2908 = vunpack.c.l.b16 %v2640
    %v2909 = vunpack.c.h.b16 %v2640
    %v2910 = vunpack.c.l.b16 %v2641
    %v2911 = vunpack.c.h.b16 %v2641
    %v2912 = vunpack.c.l.b16 %v2642
    %v2913 = vunpack.c.h.b16 %v2642
    %v2914 = vunpack.c.l.b16 %v2643
    %v2915 = vunpack.c.h.b16 %v2643
    %v2916 = vunpack.c.l.b16 %v2644
    %v2917 = vunpack.c.h.b16 %v2644
    %v2918 = vunpack.c.l.b16 %v2645
    %v2919 = vunpack.c.h.b16 %v2645
    %v2920 = vunpack.c.l.b16 %v2646
    %v2921 = vunpack.c.h.b16 %v2646
    %v2922 = vunpack.c.l.b16 %v2647
    %v2923 = vunpack.c.h.b16 %v2647
    %v2924 = vunpack.c.l.b16 %v2648
    %v2925 = vunpack.c.h.b16 %v2648
    %v2926 = vunpack.c.l.b16 %v2649
    %v2927 = vunpack.c.h.b16 %v2649
    %v2928 = vunpack.c.l.b16 %v2650
    %v2929 = vunpack.c.h.b16 %v2650
    %v2930 = vpack.c.b16 %v2818, %v2802
    %v2931 = vpack.c.b16 %v2819, %v2803
    %v2932 = vpack.c.b16 %v2820, %v2804
    %v2933 = vpack.c.b16 %v2821, %v2805
    %v2934 = vpack.c.b16 %v2822, %v2806
    %v2935 = vpack.c.b16 %v2823, %v2807
    %v2936 = vpack.c.b16 %v2824, %v2808
    %v2937 = vpack.c.b16 %v2825, %v2809
    %v2938 = vpack.c.b16 %v2826, %v2810
    %v2939 = vpack.c.b16 %v2827, %v2811
    %v2940 = vpack.c.b16 %v2828, %v2812
    %v2941 = vpack.c.b16 %v2829, %v2813
    %v2942 = vpack.c.b16 %v2830, %v2814
    %v2943 = vpack.c.b16 %v2831, %v2815
    %v2944 = vpack.c.b16 %v2832, %v2816
    %v2945 = vpack.c.b16 %v2833, %v2817
    %v2946 = vpack.c.b16 %v2850, %v2834
    %v2947 = vpack.c.b16 %v2851, %v2835
    %v2948 = vpack.c.b16 %v2852, %v2836
    %v2949 = vpack.c.b16 %v2853, %v2837
    %v2950 = vpack.c.b16 %v2854, %v2838
    %v2951 = vpack.c.b16 %v2855, %v2839
    %v2952 = vpack.c.b16 %v2856, %v2840
    %v2953 = vpack.c.b16 %v2857, %v2841
    %v2954 = vpack.c.b16 %v2858, %v2842
    %v2955 = vpack.c.b16 %v2859, %v2843
    %v2956 = vpack.c.b16 %v2860, %v2844
    %v2957 = vpack.c.b16 %v2861, %v2845
    %v2958 = vpack.c.b16 %v2862, %v2846
    %v2959 = vpack.c.b16 %v2863, %v2847
    %v2960 = vpack.c.b16 %v2864, %v2848
    %v2961 = vpack.c.b16 %v2865, %v2849
    %v2962 = vpack.c.b16 %v2882, %v2866
    %v2963 = vpack.c.b16 %v2883, %v2867
    %v2964 = vpack.c.b16 %v2884, %v2868
    %v2965 = vpack.c.b16 %v2885, %v2869
    %v2966 = vpack.c.b16 %v2886, %v2870
    %v2967 = vpack.c.b16 %v2887, %v2871
    %v2968 = vpack.c.b16 %v2888, %v2872
    %v2969 = vpack.c.b16 %v2889, %v2873
    %v2970 = vpack.c.b16 %v2890, %v2874
    %v2971 = vpack.c.b16 %v2891, %v2875
    %v2972 = vpack.c.b16 %v2892, %v2876
    %v2973 = vpack.c.b16 %v2893, %v2877
    %v2974 = vpack.c.b16 %v2894, %v2878
    %v2975 = vpack.c.b16 %v2895, %v2879
    %v2976 = vpack.c.b16 %v2896, %v2880
    %v2977 = vpack.c.b16 %v2897, %v2881
    %v2978 = vpack.c.b16 %v2914, %v2898
    %v2979 = vpack.c.b16 %v2915, %v2899
    %v2980 = vpack.c.b16 %v2916, %v2900
    %v2981 = vpack.c.b16 %v2917, %v2901
    %v2982 = vpack.c.b16 %v2918, %v2902
    %v2983 = vpack.c.b16 %v2919, %v2903
    %v2984 = vpack.c.b16 %v2920, %v2904
    %v2985 = vpack.c.b16 %v2921, %v2905
    %v2986 = vpack.c.b16 %v2922, %v2906
    %v2987 = vpack.c.b16 %v2923, %v2907
    %v2988 = vpack.c.b16 %v2924, %v2908
    %v2989 = vpack.c.b16 %v2925, %v2909
    %v2990 = vpack.c.b16 %v2926, %v2910
    %v2991 = vpack.c.b16 %v2927, %v2911
    %v2992 = vpack.c.b16 %v2928, %v2912
    %v2993 = vpack.c.b16 %v2929, %v2913
    %v3059 = vsel %vm200, %v2651, 0
    %3061 = vmatprep.subr.bf16.mxu0 %v2931
    %3062 = vmatpush1.bf16.msra.mxu0 %v2930
    %3063 = vmatprep.subr.bf16.mxu0 %v2947
    %3064 = vmatpush1.bf16.msra.mxu0 %v2946
    %3065 = vmatprep.subr.bf16.mxu0 %v2963
    %3066 = vmatpush1.bf16.msra.mxu0 %v2962
    %3067 = vmatprep.subr.bf16.mxu0 %v2979
    %3068 = vmatpush1.bf16.msra.mxu0 %v2978
    %3069 = vmatprep.subr.bf16.mxu0 0
    %3070 = vmatpush1.bf16.msra.mxu0 0
    %3071 = vmatprep.subr.bf16.mxu0 0
    %3072 = vmatpush1.bf16.msra.mxu0 0
    %3073 = vmatprep.subr.bf16.mxu0 0
    %3074 = vmatpush1.bf16.msra.mxu0 0
    %3075 = vmatprep.subr.bf16.mxu0 0
    %3076 = vmatpush1.bf16.msra.mxu0 0
    %3077 = vmatprep.subr.bf16.mxu0 0
    %3078 = vmatpush1.bf16.msra.mxu0 0
    %3079 = vmatprep.subr.bf16.mxu0 0
    %3080 = vmatpush1.bf16.msra.mxu0 0
    %3081 = vmatprep.subr.bf16.mxu0 0
    %3082 = vmatpush1.bf16.msra.mxu0 0
    %3083 = vmatprep.subr.bf16.mxu0 0
    %3084 = vmatpush1.bf16.msra.mxu0 0
    %3085 = vmatprep.subr.bf16.mxu0 0
    %3086 = vmatpush1.bf16.msra.mxu0 0
    %3087 = vmatprep.subr.bf16.mxu0 0
    %3088 = vmatpush1.bf16.msra.mxu0 0
    %3089 = vmatprep.subr.bf16.mxu0 0
    %3090 = vmatpush1.bf16.msra.mxu0 0
    %3091 = vmatprep.subr.bf16.mxu0 0
    %3092 = vmatpush1.bf16.msra.mxu0 0
    %3093 = vmatprep.mubr.bf16.mxu0 0
    %3094 = vmatmul.mubr.bf16.gmra.mrb[0].mxu0 %v3059
    %v3095 = vpop.f32.mrb[0].mxu0
    %v3096 = vadd.f32 %v2661, %v3095
    %v3097 = vpop.f32.mrb[0].mxu0
    %v3098 = vadd.f32 %v2665, %v3097
    %v3099 = vpop.f32.mrb[0].mxu0
    %v3100 = vpop.f32.mrb[0].mxu0
    %3101 = vdwg.mxu0
    %3102 = vmatprep.subr.bf16.mxu0 %v2933
    %3103 = vmatpush1.bf16.msra.mxu0 %v2932
    %3104 = vmatprep.subr.bf16.mxu0 %v2949
    %3105 = vmatpush1.bf16.msra.mxu0 %v2948
    %3106 = vmatprep.subr.bf16.mxu0 %v2965
    %3107 = vmatpush1.bf16.msra.mxu0 %v2964
    %3108 = vmatprep.subr.bf16.mxu0 %v2981
    %3109 = vmatpush1.bf16.msra.mxu0 %v2980
    %3110 = vmatprep.subr.bf16.mxu0 0
    %3111 = vmatpush1.bf16.msra.mxu0 0
    %3112 = vmatprep.subr.bf16.mxu0 0
    %3113 = vmatpush1.bf16.msra.mxu0 0
    %3114 = vmatprep.subr.bf16.mxu0 0
    %3115 = vmatpush1.bf16.msra.mxu0 0
    %3116 = vmatprep.subr.bf16.mxu0 0
    %3117 = vmatpush1.bf16.msra.mxu0 0
    %3118 = vmatprep.subr.bf16.mxu0 0
    %3119 = vmatpush1.bf16.msra.mxu0 0
    %3120 = vmatprep.subr.bf16.mxu0 0
    %3121 = vmatpush1.bf16.msra.mxu0 0
    %3122 = vmatprep.subr.bf16.mxu0 0
    %3123 = vmatpush1.bf16.msra.mxu0 0
    %3124 = vmatprep.subr.bf16.mxu0 0
    %3125 = vmatpush1.bf16.msra.mxu0 0
    %3126 = vmatprep.subr.bf16.mxu0 0
    %3127 = vmatpush1.bf16.msra.mxu0 0
    %3128 = vmatprep.subr.bf16.mxu0 0
    %3129 = vmatpush1.bf16.msra.mxu0 0
    %3130 = vmatprep.subr.bf16.mxu0 0
    %3131 = vmatpush1.bf16.msra.mxu0 0
    %3132 = vmatprep.subr.bf16.mxu0 0
    %3133 = vmatpush1.bf16.msra.mxu0 0
    %3134 = vmatprep.mubr.bf16.mxu0 0
    %3135 = vmatmul.mubr.bf16.gmra.mrb[0].mxu0 %v3059
    %v3136 = vpop.f32.mrb[0].mxu0
    %v3137 = vadd.f32 %v2669, %v3136
    %v3138 = vpop.f32.mrb[0].mxu0
    %v3139 = vadd.f32 %v2673, %v3138
    %v3140 = vpop.f32.mrb[0].mxu0
    %v3141 = vpop.f32.mrb[0].mxu0
    %3142 = vdwg.mxu0
    %3143 = vmatprep.subr.bf16.mxu0 %v2935
    %3144 = vmatpush1.bf16.msra.mxu0 %v2934
    %3145 = vmatprep.subr.bf16.mxu0 %v2951
    %3146 = vmatpush1.bf16.msra.mxu0 %v2950
    %3147 = vmatprep.subr.bf16.mxu0 %v2967
    %3148 = vmatpush1.bf16.msra.mxu0 %v2966
    %3149 = vmatprep.subr.bf16.mxu0 %v2983
    %3150 = vmatpush1.bf16.msra.mxu0 %v2982
    %3151 = vmatprep.subr.bf16.mxu0 0
    %3152 = vmatpush1.bf16.msra.mxu0 0
    %3153 = vmatprep.subr.bf16.mxu0 0
    %3154 = vmatpush1.bf16.msra.mxu0 0
    %3155 = vmatprep.subr.bf16.mxu0 0
    %3156 = vmatpush1.bf16.msra.mxu0 0
    %3157 = vmatprep.subr.bf16.mxu0 0
    %3158 = vmatpush1.bf16.msra.mxu0 0
    %3159 = vmatprep.subr.bf16.mxu0 0
    %3160 = vmatpush1.bf16.msra.mxu0 0
    %3161 = vmatprep.subr.bf16.mxu0 0
    %3162 = vmatpush1.bf16.msra.mxu0 0
    %3163 = vmatprep.subr.bf16.mxu0 0
    %3164 = vmatpush1.bf16.msra.mxu0 0
    %3165 = vmatprep.subr.bf16.mxu0 0
    %3166 = vmatpush1.bf16.msra.mxu0 0
    %3167 = vmatprep.subr.bf16.mxu0 0
    %3168 = vmatpush1.bf16.msra.mxu0 0
    %3169 = vmatprep.subr.bf16.mxu0 0
    %3170 = vmatpush1.bf16.msra.mxu0 0
    %3171 = vmatprep.subr.bf16.mxu0 0
    %3172 = vmatpush1.bf16.msra.mxu0 0
    %3173 = vmatprep.subr.bf16.mxu0 0
    %3174 = vmatpush1.bf16.msra.mxu0 0
    %3175 = vmatprep.mubr.bf16.mxu0 0
    %3176 = vmatmul.mubr.bf16.gmra.mrb[0].mxu0 %v3059
    %v3177 = vpop.f32.mrb[0].mxu0
    %v3178 = vadd.f32 %v2677, %v3177
    %v3179 = vpop.f32.mrb[0].mxu0
    %v3180 = vadd.f32 %v2681, %v3179
    %v3181 = vpop.f32.mrb[0].mxu0
    %v3182 = vpop.f32.mrb[0].mxu0
    %3183 = vdwg.mxu0
    %3184 = vmatprep.subr.bf16.mxu0 %v2937
    %3185 = vmatpush1.bf16.msra.mxu0 %v2936
    %3186 = vmatprep.subr.bf16.mxu0 %v2953
    %3187 = vmatpush1.bf16.msra.mxu0 %v2952
    %3188 = vmatprep.subr.bf16.mxu0 %v2969
    %3189 = vmatpush1.bf16.msra.mxu0 %v2968
    %3190 = vmatprep.subr.bf16.mxu0 %v2985
    %3191 = vmatpush1.bf16.msra.mxu0 %v2984
    %3192 = vmatprep.subr.bf16.mxu0 0
    %3193 = vmatpush1.bf16.msra.mxu0 0
    %3194 = vmatprep.subr.bf16.mxu0 0
    %3195 = vmatpush1.bf16.msra.mxu0 0
    %3196 = vmatprep.subr.bf16.mxu0 0
    %3197 = vmatpush1.bf16.msra.mxu0 0
    %3198 = vmatprep.subr.bf16.mxu0 0
    %3199 = vmatpush1.bf16.msra.mxu0 0
    %3200 = vmatprep.subr.bf16.mxu0 0
    %3201 = vmatpush1.bf16.msra.mxu0 0
    %3202 = vmatprep.subr.bf16.mxu0 0
    %3203 = vmatpush1.bf16.msra.mxu0 0
    %3204 = vmatprep.subr.bf16.mxu0 0
    %3205 = vmatpush1.bf16.msra.mxu0 0
    %3206 = vmatprep.subr.bf16.mxu0 0
    %3207 = vmatpush1.bf16.msra.mxu0 0
    %3208 = vmatprep.subr.bf16.mxu0 0
    %3209 = vmatpush1.bf16.msra.mxu0 0
    %3210 = vmatprep.subr.bf16.mxu0 0
    %3211 = vmatpush1.bf16.msra.mxu0 0
    %3212 = vmatprep.subr.bf16.mxu0 0
    %3213 = vmatpush1.bf16.msra.mxu0 0
    %3214 = vmatprep.subr.bf16.mxu0 0
    %3215 = vmatpush1.bf16.msra.mxu0 0
    %3216 = vmatprep.mubr.bf16.mxu0 0
    %3217 = vmatmul.mubr.bf16.gmra.mrb[0].mxu0 %v3059
    %v3218 = vpop.f32.mrb[0].mxu0
    %v3219 = vadd.f32 %v2685, %v3218
    %v3220 = vpop.f32.mrb[0].mxu0
    %v3221 = vadd.f32 %v2689, %v3220
    %v3222 = vpop.f32.mrb[0].mxu0
    %v3223 = vpop.f32.mrb[0].mxu0
    %3224 = vdwg.mxu0
    %3225 = vmatprep.subr.bf16.mxu0 %v2939
    %3226 = vmatpush1.bf16.msra.mxu0 %v2938
    %3227 = vmatprep.subr.bf16.mxu0 %v2955
    %3228 = vmatpush1.bf16.msra.mxu0 %v2954
    %3229 = vmatprep.subr.bf16.mxu0 %v2971
    %3230 = vmatpush1.bf16.msra.mxu0 %v2970
    %3231 = vmatprep.subr.bf16.mxu0 %v2987
    %3232 = vmatpush1.bf16.msra.mxu0 %v2986
    %3233 = vmatprep.subr.bf16.mxu0 0
    %3234 = vmatpush1.bf16.msra.mxu0 0
    %3235 = vmatprep.subr.bf16.mxu0 0
    %3236 = vmatpush1.bf16.msra.mxu0 0
    %3237 = vmatprep.subr.bf16.mxu0 0
    %3238 = vmatpush1.bf16.msra.mxu0 0
    %3239 = vmatprep.subr.bf16.mxu0 0
    %3240 = vmatpush1.bf16.msra.mxu0 0
    %3241 = vmatprep.subr.bf16.mxu0 0
    %3242 = vmatpush1.bf16.msra.mxu0 0
    %3243 = vmatprep.subr.bf16.mxu0 0
    %3244 = vmatpush1.bf16.msra.mxu0 0
    %3245 = vmatprep.subr.bf16.mxu0 0
    %3246 = vmatpush1.bf16.msra.mxu0 0
    %3247 = vmatprep.subr.bf16.mxu0 0
    %3248 = vmatpush1.bf16.msra.mxu0 0
    %3249 = vmatprep.subr.bf16.mxu0 0
    %3250 = vmatpush1.bf16.msra.mxu0 0
    %3251 = vmatprep.subr.bf16.mxu0 0
    %3252 = vmatpush1.bf16.msra.mxu0 0
    %3253 = vmatprep.subr.bf16.mxu0 0
    %3254 = vmatpush1.bf16.msra.mxu0 0
    %3255 = vmatprep.subr.bf16.mxu0 0
    %3256 = vmatpush1.bf16.msra.mxu0 0
    %3257 = vmatprep.mubr.bf16.mxu0 0
    %3258 = vmatmul.mubr.bf16.gmra.mrb[0].mxu0 %v3059
    %v3259 = vpop.f32.mrb[0].mxu0
    %v3260 = vadd.f32 %v2693, %v3259
    %v3261 = vpop.f32.mrb[0].mxu0
    %v3262 = vadd.f32 %v2697, %v3261
    %v3263 = vpop.f32.mrb[0].mxu0
    %v3264 = vpop.f32.mrb[0].mxu0
    %3265 = vdwg.mxu0
    %3266 = vmatprep.subr.bf16.mxu0 %v2941
    %3267 = vmatpush1.bf16.msra.mxu0 %v2940
    %3268 = vmatprep.subr.bf16.mxu0 %v2957
    %3269 = vmatpush1.bf16.msra.mxu0 %v2956
    %3270 = vmatprep.subr.bf16.mxu0 %v2973
    %3271 = vmatpush1.bf16.msra.mxu0 %v2972
    %3272 = vmatprep.subr.bf16.mxu0 %v2989
    %3273 = vmatpush1.bf16.msra.mxu0 %v2988
    %3274 = vmatprep.subr.bf16.mxu0 0
    %3275 = vmatpush1.bf16.msra.mxu0 0
    %3276 = vmatprep.subr.bf16.mxu0 0
    %3277 = vmatpush1.bf16.msra.mxu0 0
    %3278 = vmatprep.subr.bf16.mxu0 0
    %3279 = vmatpush1.bf16.msra.mxu0 0
    %3280 = vmatprep.subr.bf16.mxu0 0
    %3281 = vmatpush1.bf16.msra.mxu0 0
    %3282 = vmatprep.subr.bf16.mxu0 0
    %3283 = vmatpush1.bf16.msra.mxu0 0
    %3284 = vmatprep.subr.bf16.mxu0 0
    %3285 = vmatpush1.bf16.msra.mxu0 0
    %3286 = vmatprep.subr.bf16.mxu0 0
    %3287 = vmatpush1.bf16.msra.mxu0 0
    %3288 = vmatprep.subr.bf16.mxu0 0
    %3289 = vmatpush1.bf16.msra.mxu0 0
    %3290 = vmatprep.subr.bf16.mxu0 0
    %3291 = vmatpush1.bf16.msra.mxu0 0
    %3292 = vmatprep.subr.bf16.mxu0 0
    %3293 = vmatpush1.bf16.msra.mxu0 0
    %3294 = vmatprep.subr.bf16.mxu0 0
    %3295 = vmatpush1.bf16.msra.mxu0 0
    %3296 = vmatprep.subr.bf16.mxu0 0
    %3297 = vmatpush1.bf16.msra.mxu0 0
    %3298 = vmatprep.mubr.bf16.mxu0 0
    %3299 = vmatmul.mubr.bf16.gmra.mrb[0].mxu0 %v3059
    %v3300 = vpop.f32.mrb[0].mxu0
    %v3301 = vadd.f32 %v2701, %v3300
    %v3302 = vpop.f32.mrb[0].mxu0
    %v3303 = vadd.f32 %v2705, %v3302
    %v3304 = vpop.f32.mrb[0].mxu0
    %v3305 = vpop.f32.mrb[0].mxu0
    %3306 = vdwg.mxu0
    %3307 = vmatprep.subr.bf16.mxu0 %v2943
    %3308 = vmatpush1.bf16.msra.mxu0 %v2942
    %3309 = vmatprep.subr.bf16.mxu0 %v2959
    %3310 = vmatpush1.bf16.msra.mxu0 %v2958
    %3311 = vmatprep.subr.bf16.mxu0 %v2975
    %3312 = vmatpush1.bf16.msra.mxu0 %v2974
    %3313 = vmatprep.subr.bf16.mxu0 %v2991
    %3314 = vmatpush1.bf16.msra.mxu0 %v2990
    %3315 = vmatprep.subr.bf16.mxu0 0
    %3316 = vmatpush1.bf16.msra.mxu0 0
    %3317 = vmatprep.subr.bf16.mxu0 0
    %3318 = vmatpush1.bf16.msra.mxu0 0
    %3319 = vmatprep.subr.bf16.mxu0 0
    %3320 = vmatpush1.bf16.msra.mxu0 0
    %3321 = vmatprep.subr.bf16.mxu0 0
    %3322 = vmatpush1.bf16.msra.mxu0 0
    %3323 = vmatprep.subr.bf16.mxu0 0
    %3324 = vmatpush1.bf16.msra.mxu0 0
    %3325 = vmatprep.subr.bf16.mxu0 0
    %3326 = vmatpush1.bf16.msra.mxu0 0
    %3327 = vmatprep.subr.bf16.mxu0 0
    %3328 = vmatpush1.bf16.msra.mxu0 0
    %3329 = vmatprep.subr.bf16.mxu0 0
    %3330 = vmatpush1.bf16.msra.mxu0 0
    %3331 = vmatprep.subr.bf16.mxu0 0
    %3332 = vmatpush1.bf16.msra.mxu0 0
    %3333 = vmatprep.subr.bf16.mxu0 0
    %3334 = vmatpush1.bf16.msra.mxu0 0
    %3335 = vmatprep.subr.bf16.mxu0 0
    %3336 = vmatpush1.bf16.msra.mxu0 0
    %3337 = vmatprep.subr.bf16.mxu0 0
    %3338 = vmatpush1.bf16.msra.mxu0 0
    %3339 = vmatprep.mubr.bf16.mxu0 0
    %3340 = vmatmul.mubr.bf16.gmra.mrb[0].mxu0 %v3059
    %v3341 = vpop.f32.mrb[0].mxu0
    %v3342 = vadd.f32 %v2709, %v3341
    %v3343 = vpop.f32.mrb[0].mxu0
    %v3344 = vadd.f32 %v2713, %v3343
    %v3345 = vpop.f32.mrb[0].mxu0
    %v3346 = vpop.f32.mrb[0].mxu0
    %3347 = vdwg.mxu0
    %3348 = vmatprep.subr.bf16.mxu0 %v2945
    %3349 = vmatpush1.bf16.msra.mxu0 %v2944
    %3350 = vmatprep.subr.bf16.mxu0 %v2961
    %3351 = vmatpush1.bf16.msra.mxu0 %v2960
    %3352 = vmatprep.subr.bf16.mxu0 %v2977
    %3353 = vmatpush1.bf16.msra.mxu0 %v2976
    %3354 = vmatprep.subr.bf16.mxu0 %v2993
    %3355 = vmatpush1.bf16.msra.mxu0 %v2992
    %3356 = vmatprep.subr.bf16.mxu0 0
    %3357 = vmatpush1.bf16.msra.mxu0 0
    %3358 = vmatprep.subr.bf16.mxu0 0
    %3359 = vmatpush1.bf16.msra.mxu0 0
    %3360 = vmatprep.subr.bf16.mxu0 0
    %3361 = vmatpush1.bf16.msra.mxu0 0
    %3362 = vmatprep.subr.bf16.mxu0 0
    %3363 = vmatpush1.bf16.msra.mxu0 0
    %3364 = vmatprep.subr.bf16.mxu0 0
    %3365 = vmatpush1.bf16.msra.mxu0 0
    %3366 = vmatprep.subr.bf16.mxu0 0
    %3367 = vmatpush1.bf16.msra.mxu0 0
    %3368 = vmatprep.subr.bf16.mxu0 0
    %3369 = vmatpush1.bf16.msra.mxu0 0
    %3370 = vmatprep.subr.bf16.mxu0 0
    %3371 = vmatpush1.bf16.msra.mxu0 0
    %3372 = vmatprep.subr.bf16.mxu0 0
    %3373 = vmatpush1.bf16.msra.mxu0 0
    %3374 = vmatprep.subr.bf16.mxu0 0
    %3375 = vmatpush1.bf16.msra.mxu0 0
    %3376 = vmatprep.subr.bf16.mxu0 0
    %3377 = vmatpush1.bf16.msra.mxu0 0
    %3378 = vmatprep.subr.bf16.mxu0 0
    %3379 = vmatpush1.bf16.msra.mxu0 0
    %3380 = vmatprep.mubr.bf16.mxu0 0
    %3381 = vmatmul.mubr.bf16.gmra.mrb[0].mxu0 %v3059
    %v3382 = vpop.f32.mrb[0].mxu0
    %v3383 = vadd.f32 %v2717, %v3382
    %v3384 = vpop.f32.mrb[0].mxu0
    %v3385 = vadd.f32 %v2721, %v3384
    %v3386 = vpop.f32.mrb[0].mxu0
    %v3387 = vpop.f32.mrb[0].mxu0
    %3388 = vdwg.mxu0
    %v3389 = vmax.f32 %v3096, 0.0
    %v3390 = vmax.f32 %v3098, 0.0
    %v3391 = vmax.f32 %v3137, 0.0
    %v3392 = vmax.f32 %v3139, 0.0
    %v3393 = vmax.f32 %v3178, 0.0
    %v3394 = vmax.f32 %v3180, 0.0
    %v3395 = vmax.f32 %v3219, 0.0
    %v3396 = vmax.f32 %v3221, 0.0
    %v3397 = vmax.f32 %v3260, 0.0
    %v3398 = vmax.f32 %v3262, 0.0
    %v3399 = vmax.f32 %v3301, 0.0
    %v3400 = vmax.f32 %v3303, 0.0
    %v3401 = vmax.f32 %v3342, 0.0
    %v3402 = vmax.f32 %v3344, 0.0
    %v3403 = vmax.f32 %v3383, 0.0
    %v3404 = vmax.f32 %v3385, 0.0
    %v3405 = vpack.c.bf16 %v3389, %v3389
    %v3406 = vpack.c.bf16 %v3390, %v3390
    %v3407 = vpack.c.bf16 %v3391, %v3391
    %v3408 = vpack.c.bf16 %v3392, %v3392
    %v3409 = vpack.c.bf16 %v3393, %v3393
    %v3410 = vpack.c.bf16 %v3394, %v3394
    %v3411 = vpack.c.bf16 %v3395, %v3395
    %v3412 = vpack.c.bf16 %v3396, %v3396
    %v3413 = vpack.c.bf16 %v3397, %v3397
    %v3414 = vpack.c.bf16 %v3398, %v3398
    %v3415 = vpack.c.bf16 %v3399, %v3399
    %v3416 = vpack.c.bf16 %v3400, %v3400
    %v3417 = vpack.c.bf16 %v3401, %v3401
    %v3418 = vpack.c.bf16 %v3402, %v3402
    %v3419 = vpack.c.bf16 %v3403, %v3403
    %v3420 = vpack.c.bf16 %v3404, %v3404
    %v3421 = vld [vmem:[#allocation5 + $0xa] sm:$0x1]
    %v3422 = vlaneseq
    %v3423 = vshrl.u32 %v3422, 7
    %v3424 = vsub.s32 0, %v3423
    %v3425 = vrot.slane %v3421, %v3424
    %3426 = vrot.lane.b32.xlu0 %v1877, 64
    %v3427 = vpop.permute.xlu0 %3426
    %3428 = vrot.lane.b32.xlu0 %v1878, 64
    %v3429 = vpop.permute.xlu0 %3428
    %3430 = vrot.lane.b32.xlu0 %v1879, 64
    %v3431 = vpop.permute.xlu0 %3430
    %3432 = vrot.lane.b32.xlu0 %v1880, 64
    %v3433 = vpop.permute.xlu0 %3432
    %3434 = vrot.lane.b32.xlu0 %v1881, 64
    %v3435 = vpop.permute.xlu0 %3434
    %3436 = vrot.lane.b32.xlu0 %v1882, 64
    %v3437 = vpop.permute.xlu0 %3436
    %3438 = vrot.lane.b32.xlu0 %v1883, 64
    %v3439 = vpop.permute.xlu0 %3438
    %3440 = vrot.lane.b32.xlu0 %v1884, 64
    %v3441 = vpop.permute.xlu0 %3440
    %3442 = vrot.lane.b32.xlu0 %v1885, 64
    %v3443 = vpop.permute.xlu0 %3442
    %3444 = vrot.lane.b32.xlu0 %v1886, 64
    %v3445 = vpop.permute.xlu0 %3444
    %3446 = vrot.lane.b32.xlu0 %v1887, 64
    %v3447 = vpop.permute.xlu0 %3446
    %3448 = vrot.lane.b32.xlu0 %v1888, 64
    %v3449 = vpop.permute.xlu0 %3448
    %3450 = vrot.lane.b32.xlu0 %v1889, 64
    %v3451 = vpop.permute.xlu0 %3450
    %3452 = vrot.lane.b32.xlu0 %v1890, 64
    %v3453 = vpop.permute.xlu0 %3452
    %3454 = vrot.lane.b32.xlu0 %v1891, 64
    %v3455 = vpop.permute.xlu0 %3454
    %3456 = vrot.lane.b32.xlu0 %v1892, 64
    %v3457 = vpop.permute.xlu0 %3456
    %3458 = vrot.lane.b32.xlu0 %v1893, 64
    %v3459 = vpop.permute.xlu0 %3458
    %3460 = vrot.lane.b32.xlu0 %v1894, 64
    %v3461 = vpop.permute.xlu0 %3460
    %3462 = vrot.lane.b32.xlu0 %v1895, 64
    %v3463 = vpop.permute.xlu0 %3462
    %3464 = vrot.lane.b32.xlu0 %v1896, 64
    %v3465 = vpop.permute.xlu0 %3464
    %3466 = vrot.lane.b32.xlu0 %v1897, 64
    %v3467 = vpop.permute.xlu0 %3466
    %3468 = vrot.lane.b32.xlu0 %v1898, 64
    %v3469 = vpop.permute.xlu0 %3468
    %3470 = vrot.lane.b32.xlu0 %v1899, 64
    %v3471 = vpop.permute.xlu0 %3470
    %3472 = vrot.lane.b32.xlu0 %v1900, 64
    %v3473 = vpop.permute.xlu0 %3472
    %3474 = vrot.lane.b32.xlu0 %v1901, 64
    %v3475 = vpop.permute.xlu0 %3474
    %3476 = vrot.lane.b32.xlu0 %v1902, 64
    %v3477 = vpop.permute.xlu0 %3476
    %3478 = vrot.lane.b32.xlu0 %v1903, 64
    %v3479 = vpop.permute.xlu0 %3478
    %3480 = vrot.lane.b32.xlu0 %v1904, 64
    %v3481 = vpop.permute.xlu0 %3480
    %3482 = vrot.lane.b32.xlu0 %v1905, 64
    %v3483 = vpop.permute.xlu0 %3482
    %3484 = vrot.lane.b32.xlu0 %v1906, 64
    %v3485 = vpop.permute.xlu0 %3484
    %3486 = vrot.lane.b32.xlu0 %v1907, 64
    %v3487 = vpop.permute.xlu0 %3486
    %3488 = vrot.lane.b32.xlu0 %v1908, 64
    %v3489 = vpop.permute.xlu0 %3488
    %3490 = vrot.lane.b32.xlu0 %v1909, 64
    %v3491 = vpop.permute.xlu0 %3490
    %3492 = vrot.lane.b32.xlu0 %v1910, 64
    %v3493 = vpop.permute.xlu0 %3492
    %3494 = vrot.lane.b32.xlu0 %v1911, 64
    %v3495 = vpop.permute.xlu0 %3494
    %3496 = vrot.lane.b32.xlu0 %v1912, 64
    %v3497 = vpop.permute.xlu0 %3496
    %3498 = vrot.lane.b32.xlu0 %v1913, 64
    %v3499 = vpop.permute.xlu0 %3498
    %3500 = vrot.lane.b32.xlu0 %v1914, 64
    %v3501 = vpop.permute.xlu0 %3500
    %3502 = vrot.lane.b32.xlu0 %v1915, 64
    %v3503 = vpop.permute.xlu0 %3502
    %3504 = vrot.lane.b32.xlu0 %v1916, 64
    %v3505 = vpop.permute.xlu0 %3504
    %3506 = vrot.lane.b32.xlu0 %v1917, 64
    %v3507 = vpop.permute.xlu0 %3506
    %3508 = vrot.lane.b32.xlu0 %v1918, 64
    %v3509 = vpop.permute.xlu0 %3508
    %3510 = vrot.lane.b32.xlu0 %v1919, 64
    %v3511 = vpop.permute.xlu0 %3510
    %3512 = vrot.lane.b32.xlu0 %v1920, 64
    %v3513 = vpop.permute.xlu0 %3512
    %3514 = vrot.lane.b32.xlu0 %v1921, 64
    %v3515 = vpop.permute.xlu0 %3514
    %3516 = vrot.lane.b32.xlu0 %v1922, 64
    %v3517 = vpop.permute.xlu0 %3516
    %3518 = vrot.lane.b32.xlu0 %v1923, 64
    %v3519 = vpop.permute.xlu0 %3518
    %3520 = vrot.lane.b32.xlu0 %v1924, 64
    %v3521 = vpop.permute.xlu0 %3520
    %3522 = vrot.lane.b32.xlu0 %v1925, 64
    %v3523 = vpop.permute.xlu0 %3522
    %3524 = vrot.lane.b32.xlu0 %v1926, 64
    %v3525 = vpop.permute.xlu0 %3524
    %3526 = vrot.lane.b32.xlu0 %v1927, 64
    %v3527 = vpop.permute.xlu0 %3526
    %3528 = vrot.lane.b32.xlu0 %v1928, 64
    %v3529 = vpop.permute.xlu0 %3528
    %3530 = vrot.lane.b32.xlu0 %v1929, 64
    %v3531 = vpop.permute.xlu0 %3530
    %3532 = vrot.lane.b32.xlu0 %v1930, 64
    %v3533 = vpop.permute.xlu0 %3532
    %3534 = vrot.lane.b32.xlu0 %v1931, 64
    %v3535 = vpop.permute.xlu0 %3534
    %3536 = vrot.lane.b32.xlu0 %v1932, 64
    %v3537 = vpop.permute.xlu0 %3536
    %3538 = vrot.lane.b32.xlu0 %v1933, 64
    %v3539 = vpop.permute.xlu0 %3538
    %3540 = vrot.lane.b32.xlu0 %v1934, 64
    %v3541 = vpop.permute.xlu0 %3540
    %3542 = vrot.lane.b32.xlu0 %v1935, 64
    %v3543 = vpop.permute.xlu0 %3542
    %3544 = vrot.lane.b32.xlu0 %v1936, 64
    %v3545 = vpop.permute.xlu0 %3544
    %3546 = vrot.lane.b32.xlu0 %v1937, 64
    %v3547 = vpop.permute.xlu0 %3546
    %3548 = vrot.lane.b32.xlu0 %v1938, 64
    %v3549 = vpop.permute.xlu0 %3548
    %3550 = vrot.lane.b32.xlu0 %v1939, 64
    %v3551 = vpop.permute.xlu0 %3550
    %3552 = vrot.lane.b32.xlu0 %v1940, 64
    %v3553 = vpop.permute.xlu0 %3552
    %3554 = vrot.lane.b32.xlu0 %v1941, 64
    %v3555 = vpop.permute.xlu0 %3554
    %3556 = vrot.lane.b32.xlu0 %v1942, 64
    %v3557 = vpop.permute.xlu0 %3556
    %3558 = vrot.lane.b32.xlu0 %v1943, 64
    %v3559 = vpop.permute.xlu0 %3558
    %3560 = vrot.lane.b32.xlu0 %v1944, 64
    %v3561 = vpop.permute.xlu0 %3560
    %3562 = vrot.lane.b32.xlu0 %v1945, 64
    %v3563 = vpop.permute.xlu0 %3562
    %3564 = vrot.lane.b32.xlu0 %v1946, 64
    %v3565 = vpop.permute.xlu0 %3564
    %3566 = vrot.lane.b32.xlu0 %v1947, 64
    %v3567 = vpop.permute.xlu0 %3566
    %3568 = vrot.lane.b32.xlu0 %v1948, 64
    %v3569 = vpop.permute.xlu0 %3568
    %3570 = vrot.lane.b32.xlu0 %v1949, 64
    %v3571 = vpop.permute.xlu0 %3570
    %3572 = vrot.lane.b32.xlu0 %v1950, 64
    %v3573 = vpop.permute.xlu0 %3572
    %3574 = vrot.lane.b32.xlu0 %v1951, 64
    %v3575 = vpop.permute.xlu0 %3574
    %3576 = vrot.lane.b32.xlu0 %v1952, 64
    %v3577 = vpop.permute.xlu0 %3576
    %3578 = vrot.lane.b32.xlu0 %v1953, 64
    %v3579 = vpop.permute.xlu0 %3578
    %3580 = vrot.lane.b32.xlu0 %v1954, 64
    %v3581 = vpop.permute.xlu0 %3580
    %3582 = vrot.lane.b32.xlu0 %v1955, 64
    %v3583 = vpop.permute.xlu0 %3582
    %3584 = vrot.lane.b32.xlu0 %v1956, 64
    %v3585 = vpop.permute.xlu0 %3584
    %3586 = vrot.lane.b32.xlu0 %v1957, 64
    %v3587 = vpop.permute.xlu0 %3586
    %3588 = vrot.lane.b32.xlu0 %v1958, 64
    %v3589 = vpop.permute.xlu0 %3588
    %3590 = vrot.lane.b32.xlu0 %v1959, 64
    %v3591 = vpop.permute.xlu0 %3590
    %3592 = vrot.lane.b32.xlu0 %v1960, 64
    %v3593 = vpop.permute.xlu0 %3592
    %3594 = vrot.lane.b32.xlu0 %v1961, 64
    %v3595 = vpop.permute.xlu0 %3594
    %3596 = vrot.lane.b32.xlu0 %v1962, 64
    %v3597 = vpop.permute.xlu0 %3596
    %3598 = vrot.lane.b32.xlu0 %v1963, 64
    %v3599 = vpop.permute.xlu0 %3598
    %3600 = vrot.lane.b32.xlu0 %v1964, 64
    %v3601 = vpop.permute.xlu0 %3600
    %3602 = vrot.lane.b32.xlu0 %v1965, 64
    %v3603 = vpop.permute.xlu0 %3602
    %3604 = vrot.lane.b32.xlu0 %v1966, 64
    %v3605 = vpop.permute.xlu0 %3604
    %3606 = vrot.lane.b32.xlu0 %v1967, 64
    %v3607 = vpop.permute.xlu0 %3606
    %3608 = vrot.lane.b32.xlu0 %v1968, 64
    %v3609 = vpop.permute.xlu0 %3608
    %3610 = vrot.lane.b32.xlu0 %v1969, 64
    %v3611 = vpop.permute.xlu0 %3610
    %3612 = vrot.lane.b32.xlu0 %v1970, 64
    %v3613 = vpop.permute.xlu0 %3612
    %3614 = vrot.lane.b32.xlu0 %v1971, 64
    %v3615 = vpop.permute.xlu0 %3614
    %3616 = vrot.lane.b32.xlu0 %v1972, 64
    %v3617 = vpop.permute.xlu0 %3616
    %3618 = vrot.lane.b32.xlu0 %v1973, 64
    %v3619 = vpop.permute.xlu0 %3618
    %3620 = vrot.lane.b32.xlu0 %v1974, 64
    %v3621 = vpop.permute.xlu0 %3620
    %3622 = vrot.lane.b32.xlu0 %v1975, 64
    %v3623 = vpop.permute.xlu0 %3622
    %3624 = vrot.lane.b32.xlu0 %v1976, 64
    %v3625 = vpop.permute.xlu0 %3624
    %3626 = vrot.lane.b32.xlu0 %v1977, 64
    %v3627 = vpop.permute.xlu0 %3626
    %3628 = vrot.lane.b32.xlu0 %v1978, 64
    %v3629 = vpop.permute.xlu0 %3628
    %3630 = vrot.lane.b32.xlu0 %v1979, 64
    %v3631 = vpop.permute.xlu0 %3630
    %3632 = vrot.lane.b32.xlu0 %v1980, 64
    %v3633 = vpop.permute.xlu0 %3632
    %3634 = vrot.lane.b32.xlu0 %v1981, 64
    %v3635 = vpop.permute.xlu0 %3634
    %3636 = vrot.lane.b32.xlu0 %v1982, 64
    %v3637 = vpop.permute.xlu0 %3636
    %3638 = vrot.lane.b32.xlu0 %v1983, 64
    %v3639 = vpop.permute.xlu0 %3638
    %3640 = vrot.lane.b32.xlu0 %v1984, 64
    %v3641 = vpop.permute.xlu0 %3640
    %3642 = vrot.lane.b32.xlu0 %v1985, 64
    %v3643 = vpop.permute.xlu0 %3642
    %3644 = vrot.lane.b32.xlu0 %v1986, 64
    %v3645 = vpop.permute.xlu0 %3644
    %3646 = vrot.lane.b32.xlu0 %v1987, 64
    %v3647 = vpop.permute.xlu0 %3646
    %3648 = vrot.lane.b32.xlu0 %v1988, 64
    %v3649 = vpop.permute.xlu0 %3648
    %3650 = vrot.lane.b32.xlu0 %v1989, 64
    %v3651 = vpop.permute.xlu0 %3650
    %3652 = vrot.lane.b32.xlu0 %v1990, 64
    %v3653 = vpop.permute.xlu0 %3652
    %3654 = vrot.lane.b32.xlu0 %v1991, 64
    %v3655 = vpop.permute.xlu0 %3654
    %3656 = vrot.lane.b32.xlu0 %v1992, 64
    %v3657 = vpop.permute.xlu0 %3656
    %3658 = vrot.lane.b32.xlu0 %v1993, 64
    %v3659 = vpop.permute.xlu0 %3658
    %3660 = vrot.lane.b32.xlu0 %v1994, 64
    %v3661 = vpop.permute.xlu0 %3660
    %3662 = vrot.lane.b32.xlu0 %v1995, 64
    %v3663 = vpop.permute.xlu0 %3662
    %3664 = vrot.lane.b32.xlu0 %v1996, 64
    %v3665 = vpop.permute.xlu0 %3664
    %3666 = vrot.lane.b32.xlu0 %v1997, 64
    %v3667 = vpop.permute.xlu0 %3666
    %3668 = vrot.lane.b32.xlu0 %v1998, 64
    %v3669 = vpop.permute.xlu0 %3668
    %3670 = vrot.lane.b32.xlu0 %v1999, 64
    %v3671 = vpop.permute.xlu0 %3670
    %3672 = vrot.lane.b32.xlu0 %v2000, 64
    %v3673 = vpop.permute.xlu0 %3672
    %3674 = vrot.lane.b32.xlu0 %v2001, 64
    %v3675 = vpop.permute.xlu0 %3674
    %3676 = vrot.lane.b32.xlu0 %v2002, 64
    %v3677 = vpop.permute.xlu0 %3676
    %3678 = vrot.lane.b32.xlu0 %v2003, 64
    %v3679 = vpop.permute.xlu0 %3678
    %3680 = vrot.lane.b32.xlu0 %v2004, 64
    %v3681 = vpop.permute.xlu0 %3680
    %3810 = vmatprep.subr.bf16.mxu0 0
    %3811 = vmatpush1.bf16.msra.mxu0 %v3427
    %3812 = vmatprep.subr.bf16.mxu0 0
    %3813 = vmatpush1.bf16.msra.mxu0 %v3429
    %3814 = vmatprep.subr.bf16.mxu0 0
    %3815 = vmatpush1.bf16.msra.mxu0 %v3431
    %3816 = vmatprep.subr.bf16.mxu0 0
    %3817 = vmatpush1.bf16.msra.mxu0 %v3433
    %3818 = vmatprep.subr.bf16.mxu0 0
    %3819 = vmatpush1.bf16.msra.mxu0 %v3435
    %3820 = vmatprep.subr.bf16.mxu0 0
    %3821 = vmatpush1.bf16.msra.mxu0 %v3437
    %3822 = vmatprep.subr.bf16.mxu0 0
    %3823 = vmatpush1.bf16.msra.mxu0 %v3439
    %3824 = vmatprep.subr.bf16.mxu0 0
    %3825 = vmatpush1.bf16.msra.mxu0 %v3441
    %3826 = vmatprep.subr.bf16.mxu0 0
    %3827 = vmatpush1.bf16.msra.mxu0 %v3443
    %3828 = vmatprep.subr.bf16.mxu0 0
    %3829 = vmatpush1.bf16.msra.mxu0 %v3445
    %3830 = vmatprep.subr.bf16.mxu0 0
    %3831 = vmatpush1.bf16.msra.mxu0 %v3447
    %3832 = vmatprep.subr.bf16.mxu0 0
    %3833 = vmatpush1.bf16.msra.mxu0 %v3449
    %3834 = vmatprep.subr.bf16.mxu0 0
    %3835 = vmatpush1.bf16.msra.mxu0 %v3451
    %3836 = vmatprep.subr.bf16.mxu0 0
    %3837 = vmatpush1.bf16.msra.mxu0 %v3453
    %3838 = vmatprep.subr.bf16.mxu0 0
    %3839 = vmatpush1.bf16.msra.mxu0 %v3455
    %3840 = vmatprep.subr.bf16.mxu0 0
    %3841 = vmatpush1.bf16.msra.mxu0 %v3457
    %3842 = vmatprep.mubr.bf16.mxu0 %v3406
    %3843 = vmatmul.mubr.bf16.gmra.mrb[0].mxu0 %v3405
    %v3844 = vpop.f32.mrb[0].mxu0
    %v3845 = vadd.f32 %v3425, %v3844
    %v3846 = vpop.f32.mrb[0].mxu0
    %v3847 = vpop.f32.mrb[0].mxu0
    %v3848 = vpop.f32.mrb[0].mxu0
    %3849 = vdwg.mxu0
    %3850 = vmatprep.subr.bf16.mxu0 0
    %3851 = vmatpush1.bf16.msra.mxu0 %v3459
    %3852 = vmatprep.subr.bf16.mxu0 0
    %3853 = vmatpush1.bf16.msra.mxu0 %v3461
    %3854 = vmatprep.subr.bf16.mxu0 0
    %3855 = vmatpush1.bf16.msra.mxu0 %v3463
    %3856 = vmatprep.subr.bf16.mxu0 0
    %3857 = vmatpush1.bf16.msra.mxu0 %v3465
    %3858 = vmatprep.subr.bf16.mxu0 0
    %3859 = vmatpush1.bf16.msra.mxu0 %v3467
    %3860 = vmatprep.subr.bf16.mxu0 0
    %3861 = vmatpush1.bf16.msra.mxu0 %v3469
    %3862 = vmatprep.subr.bf16.mxu0 0
    %3863 = vmatpush1.bf16.msra.mxu0 %v3471
    %3864 = vmatprep.subr.bf16.mxu0 0
    %3865 = vmatpush1.bf16.msra.mxu0 %v3473
    %3866 = vmatprep.subr.bf16.mxu0 0
    %3867 = vmatpush1.bf16.msra.mxu0 %v3475
    %3868 = vmatprep.subr.bf16.mxu0 0
    %3869 = vmatpush1.bf16.msra.mxu0 %v3477
    %3870 = vmatprep.subr.bf16.mxu0 0
    %3871 = vmatpush1.bf16.msra.mxu0 %v3479
    %3872 = vmatprep.subr.bf16.mxu0 0
    %3873 = vmatpush1.bf16.msra.mxu0 %v3481
    %3874 = vmatprep.subr.bf16.mxu0 0
    %3875 = vmatpush1.bf16.msra.mxu0 %v3483
    %3876 = vmatprep.subr.bf16.mxu0 0
    %3877 = vmatpush1.bf16.msra.mxu0 %v3485
    %3878 = vmatprep.subr.bf16.mxu0 0
    %3879 = vmatpush1.bf16.msra.mxu0 %v3487
    %3880 = vmatprep.subr.bf16.mxu0 0
    %3881 = vmatpush1.bf16.msra.mxu0 %v3489
    %3882 = vmatprep.mubr.bf16.mxu0 %v3408
    %3883 = vmatmul.mubr.bf16.gmra.mrb[0].mxu0 %v3407
    %v3884 = vpop.f32.mrb[0].mxu0
    %v3885 = vadd.f32 %v3845, %v3884
    %v3886 = vpop.f32.mrb[0].mxu0
    %v3887 = vpop.f32.mrb[0].mxu0
    %v3888 = vpop.f32.mrb[0].mxu0
    %3889 = vdwg.mxu0
    %3890 = vmatprep.subr.bf16.mxu0 0
    %3891 = vmatpush1.bf16.msra.mxu0 %v3491
    %3892 = vmatprep.subr.bf16.mxu0 0
    %3893 = vmatpush1.bf16.msra.mxu0 %v3493
    %3894 = vmatprep.subr.bf16.mxu0 0
    %3895 = vmatpush1.bf16.msra.mxu0 %v3495
    %3896 = vmatprep.subr.bf16.mxu0 0
    %3897 = vmatpush1.bf16.msra.mxu0 %v3497
    %3898 = vmatprep.subr.bf16.mxu0 0
    %3899 = vmatpush1.bf16.msra.mxu0 %v3499
    %3900 = vmatprep.subr.bf16.mxu0 0
    %3901 = vmatpush1.bf16.msra.mxu0 %v3501
    %3902 = vmatprep.subr.bf16.mxu0 0
    %3903 = vmatpush1.bf16.msra.mxu0 %v3503
    %3904 = vmatprep.subr.bf16.mxu0 0
    %3905 = vmatpush1.bf16.msra.mxu0 %v3505
    %3906 = vmatprep.subr.bf16.mxu0 0
    %3907 = vmatpush1.bf16.msra.mxu0 %v3507
    %3908 = vmatprep.subr.bf16.mxu0 0
    %3909 = vmatpush1.bf16.msra.mxu0 %v3509
    %3910 = vmatprep.subr.bf16.mxu0 0
    %3911 = vmatpush1.bf16.msra.mxu0 %v3511
    %3912 = vmatprep.subr.bf16.mxu0 0
    %3913 = vmatpush1.bf16.msra.mxu0 %v3513
    %3914 = vmatprep.subr.bf16.mxu0 0
    %3915 = vmatpush1.bf16.msra.mxu0 %v3515
    %3916 = vmatprep.subr.bf16.mxu0 0
    %3917 = vmatpush1.bf16.msra.mxu0 %v3517
    %3918 = vmatprep.subr.bf16.mxu0 0
    %3919 = vmatpush1.bf16.msra.mxu0 %v3519
    %3920 = vmatprep.subr.bf16.mxu0 0
    %3921 = vmatpush1.bf16.msra.mxu0 %v3521
    %3922 = vmatprep.mubr.bf16.mxu0 %v3410
    %3923 = vmatmul.mubr.bf16.gmra.mrb[0].mxu0 %v3409
    %v3924 = vpop.f32.mrb[0].mxu0
    %v3925 = vadd.f32 %v3885, %v3924
    %v3926 = vpop.f32.mrb[0].mxu0
    %v3927 = vpop.f32.mrb[0].mxu0
    %v3928 = vpop.f32.mrb[0].mxu0
    %3929 = vdwg.mxu0
    %3930 = vmatprep.subr.bf16.mxu0 0
    %3931 = vmatpush1.bf16.msra.mxu0 %v3523
    %3932 = vmatprep.subr.bf16.mxu0 0
    %3933 = vmatpush1.bf16.msra.mxu0 %v3525
    %3934 = vmatprep.subr.bf16.mxu0 0
    %3935 = vmatpush1.bf16.msra.mxu0 %v3527
    %3936 = vmatprep.subr.bf16.mxu0 0
    %3937 = vmatpush1.bf16.msra.mxu0 %v3529
    %3938 = vmatprep.subr.bf16.mxu0 0
    %3939 = vmatpush1.bf16.msra.mxu0 %v3531
    %3940 = vmatprep.subr.bf16.mxu0 0
    %3941 = vmatpush1.bf16.msra.mxu0 %v3533
    %3942 = vmatprep.subr.bf16.mxu0 0
    %3943 = vmatpush1.bf16.msra.mxu0 %v3535
    %3944 = vmatprep.subr.bf16.mxu0 0
    %3945 = vmatpush1.bf16.msra.mxu0 %v3537
    %3946 = vmatprep.subr.bf16.mxu0 0
    %3947 = vmatpush1.bf16.msra.mxu0 %v3539
    %3948 = vmatprep.subr.bf16.mxu0 0
    %3949 = vmatpush1.bf16.msra.mxu0 %v3541
    %3950 = vmatprep.subr.bf16.mxu0 0
    %3951 = vmatpush1.bf16.msra.mxu0 %v3543
    %3952 = vmatprep.subr.bf16.mxu0 0
    %3953 = vmatpush1.bf16.msra.mxu0 %v3545
    %3954 = vmatprep.subr.bf16.mxu0 0
    %3955 = vmatpush1.bf16.msra.mxu0 %v3547
    %3956 = vmatprep.subr.bf16.mxu0 0
    %3957 = vmatpush1.bf16.msra.mxu0 %v3549
    %3958 = vmatprep.subr.bf16.mxu0 0
    %3959 = vmatpush1.bf16.msra.mxu0 %v3551
    %3960 = vmatprep.subr.bf16.mxu0 0
    %3961 = vmatpush1.bf16.msra.mxu0 %v3553
    %3962 = vmatprep.mubr.bf16.mxu0 %v3412
    %3963 = vmatmul.mubr.bf16.gmra.mrb[0].mxu0 %v3411
    %v3964 = vpop.f32.mrb[0].mxu0
    %v3965 = vadd.f32 %v3925, %v3964
    %v3966 = vpop.f32.mrb[0].mxu0
    %v3967 = vpop.f32.mrb[0].mxu0
    %v3968 = vpop.f32.mrb[0].mxu0
    %3969 = vdwg.mxu0
    %3970 = vmatprep.subr.bf16.mxu0 0
    %3971 = vmatpush1.bf16.msra.mxu0 %v3555
    %3972 = vmatprep.subr.bf16.mxu0 0
    %3973 = vmatpush1.bf16.msra.mxu0 %v3557
    %3974 = vmatprep.subr.bf16.mxu0 0
    %3975 = vmatpush1.bf16.msra.mxu0 %v3559
    %3976 = vmatprep.subr.bf16.mxu0 0
    %3977 = vmatpush1.bf16.msra.mxu0 %v3561
    %3978 = vmatprep.subr.bf16.mxu0 0
    %3979 = vmatpush1.bf16.msra.mxu0 %v3563
    %3980 = vmatprep.subr.bf16.mxu0 0
    %3981 = vmatpush1.bf16.msra.mxu0 %v3565
    %3982 = vmatprep.subr.bf16.mxu0 0
    %3983 = vmatpush1.bf16.msra.mxu0 %v3567
    %3984 = vmatprep.subr.bf16.mxu0 0
    %3985 = vmatpush1.bf16.msra.mxu0 %v3569
    %3986 = vmatprep.subr.bf16.mxu0 0
    %3987 = vmatpush1.bf16.msra.mxu0 %v3571
    %3988 = vmatprep.subr.bf16.mxu0 0
    %3989 = vmatpush1.bf16.msra.mxu0 %v3573
    %3990 = vmatprep.subr.bf16.mxu0 0
    %3991 = vmatpush1.bf16.msra.mxu0 %v3575
    %3992 = vmatprep.subr.bf16.mxu0 0
    %3993 = vmatpush1.bf16.msra.mxu0 %v3577
    %3994 = vmatprep.subr.bf16.mxu0 0
    %3995 = vmatpush1.bf16.msra.mxu0 %v3579
    %3996 = vmatprep.subr.bf16.mxu0 0
    %3997 = vmatpush1.bf16.msra.mxu0 %v3581
    %3998 = vmatprep.subr.bf16.mxu0 0
    %3999 = vmatpush1.bf16.msra.mxu0 %v3583
    %4000 = vmatprep.subr.bf16.mxu0 0
    %4001 = vmatpush1.bf16.msra.mxu0 %v3585
    %4002 = vmatprep.mubr.bf16.mxu0 %v3414
    %4003 = vmatmul.mubr.bf16.gmra.mrb[0].mxu0 %v3413
    %v4004 = vpop.f32.mrb[0].mxu0
    %v4005 = vadd.f32 %v3965, %v4004
    %v4006 = vpop.f32.mrb[0].mxu0
    %v4007 = vpop.f32.mrb[0].mxu0
    %v4008 = vpop.f32.mrb[0].mxu0
    %4009 = vdwg.mxu0
    %4010 = vmatprep.subr.bf16.mxu0 0
    %4011 = vmatpush1.bf16.msra.mxu0 %v3587
    %4012 = vmatprep.subr.bf16.mxu0 0
    %4013 = vmatpush1.bf16.msra.mxu0 %v3589
    %4014 = vmatprep.subr.bf16.mxu0 0
    %4015 = vmatpush1.bf16.msra.mxu0 %v3591
    %4016 = vmatprep.subr.bf16.mxu0 0
    %4017 = vmatpush1.bf16.msra.mxu0 %v3593
    %4018 = vmatprep.subr.bf16.mxu0 0
    %4019 = vmatpush1.bf16.msra.mxu0 %v3595
    %4020 = vmatprep.subr.bf16.mxu0 0
    %4021 = vmatpush1.bf16.msra.mxu0 %v3597
    %4022 = vmatprep.subr.bf16.mxu0 0
    %4023 = vmatpush1.bf16.msra.mxu0 %v3599
    %4024 = vmatprep.subr.bf16.mxu0 0
    %4025 = vmatpush1.bf16.msra.mxu0 %v3601
    %4026 = vmatprep.subr.bf16.mxu0 0
    %4027 = vmatpush1.bf16.msra.mxu0 %v3603
    %4028 = vmatprep.subr.bf16.mxu0 0
    %4029 = vmatpush1.bf16.msra.mxu0 %v3605
    %4030 = vmatprep.subr.bf16.mxu0 0
    %4031 = vmatpush1.bf16.msra.mxu0 %v3607
    %4032 = vmatprep.subr.bf16.mxu0 0
    %4033 = vmatpush1.bf16.msra.mxu0 %v3609
    %4034 = vmatprep.subr.bf16.mxu0 0
    %4035 = vmatpush1.bf16.msra.mxu0 %v3611
    %4036 = vmatprep.subr.bf16.mxu0 0
    %4037 = vmatpush1.bf16.msra.mxu0 %v3613
    %4038 = vmatprep.subr.bf16.mxu0 0
    %4039 = vmatpush1.bf16.msra.mxu0 %v3615
    %4040 = vmatprep.subr.bf16.mxu0 0
    %4041 = vmatpush1.bf16.msra.mxu0 %v3617
    %4042 = vmatprep.mubr.bf16.mxu0 %v3416
    %4043 = vmatmul.mubr.bf16.gmra.mrb[0].mxu0 %v3415
    %v4044 = vpop.f32.mrb[0].mxu0
    %v4045 = vadd.f32 %v4005, %v4044
    %v4046 = vpop.f32.mrb[0].mxu0
    %v4047 = vpop.f32.mrb[0].mxu0
    %v4048 = vpop.f32.mrb[0].mxu0
    %4049 = vdwg.mxu0
    %4050 = vmatprep.subr.bf16.mxu0 0
    %4051 = vmatpush1.bf16.msra.mxu0 %v3619
    %4052 = vmatprep.subr.bf16.mxu0 0
    %4053 = vmatpush1.bf16.msra.mxu0 %v3621
    %4054 = vmatprep.subr.bf16.mxu0 0
    %4055 = vmatpush1.bf16.msra.mxu0 %v3623
    %4056 = vmatprep.subr.bf16.mxu0 0
    %4057 = vmatpush1.bf16.msra.mxu0 %v3625
    %4058 = vmatprep.subr.bf16.mxu0 0
    %4059 = vmatpush1.bf16.msra.mxu0 %v3627
    %4060 = vmatprep.subr.bf16.mxu0 0
    %4061 = vmatpush1.bf16.msra.mxu0 %v3629
    %4062 = vmatprep.subr.bf16.mxu0 0
    %4063 = vmatpush1.bf16.msra.mxu0 %v3631
    %4064 = vmatprep.subr.bf16.mxu0 0
    %4065 = vmatpush1.bf16.msra.mxu0 %v3633
    %4066 = vmatprep.subr.bf16.mxu0 0
    %4067 = vmatpush1.bf16.msra.mxu0 %v3635
    %4068 = vmatprep.subr.bf16.mxu0 0
    %4069 = vmatpush1.bf16.msra.mxu0 %v3637
    %4070 = vmatprep.subr.bf16.mxu0 0
    %4071 = vmatpush1.bf16.msra.mxu0 %v3639
    %4072 = vmatprep.subr.bf16.mxu0 0
    %4073 = vmatpush1.bf16.msra.mxu0 %v3641
    %4074 = vmatprep.subr.bf16.mxu0 0
    %4075 = vmatpush1.bf16.msra.mxu0 %v3643
    %4076 = vmatprep.subr.bf16.mxu0 0
    %4077 = vmatpush1.bf16.msra.mxu0 %v3645
    %4078 = vmatprep.subr.bf16.mxu0 0
    %4079 = vmatpush1.bf16.msra.mxu0 %v3647
    %4080 = vmatprep.subr.bf16.mxu0 0
    %4081 = vmatpush1.bf16.msra.mxu0 %v3649
    %4082 = vmatprep.mubr.bf16.mxu0 %v3418
    %4083 = vmatmul.mubr.bf16.gmra.mrb[0].mxu0 %v3417
    %v4084 = vpop.f32.mrb[0].mxu0
    %v4085 = vadd.f32 %v4045, %v4084
    %v4086 = vpop.f32.mrb[0].mxu0
    %v4087 = vpop.f32.mrb[0].mxu0
    %v4088 = vpop.f32.mrb[0].mxu0
    %4089 = vdwg.mxu0
    %4090 = vmatprep.subr.bf16.mxu0 0
    %4091 = vmatpush1.bf16.msra.mxu0 %v3651
    %4092 = vmatprep.subr.bf16.mxu0 0
    %4093 = vmatpush1.bf16.msra.mxu0 %v3653
    %4094 = vmatprep.subr.bf16.mxu0 0
    %4095 = vmatpush1.bf16.msra.mxu0 %v3655
    %4096 = vmatprep.subr.bf16.mxu0 0
    %4097 = vmatpush1.bf16.msra.mxu0 %v3657
    %4098 = vmatprep.subr.bf16.mxu0 0
    %4099 = vmatpush1.bf16.msra.mxu0 %v3659
    %4100 = vmatprep.subr.bf16.mxu0 0
    %4101 = vmatpush1.bf16.msra.mxu0 %v3661
    %4102 = vmatprep.subr.bf16.mxu0 0
    %4103 = vmatpush1.bf16.msra.mxu0 %v3663
    %4104 = vmatprep.subr.bf16.mxu0 0
    %4105 = vmatpush1.bf16.msra.mxu0 %v3665
    %4106 = vmatprep.subr.bf16.mxu0 0
    %4107 = vmatpush1.bf16.msra.mxu0 %v3667
    %4108 = vmatprep.subr.bf16.mxu0 0
    %4109 = vmatpush1.bf16.msra.mxu0 %v3669
    %4110 = vmatprep.subr.bf16.mxu0 0
    %4111 = vmatpush1.bf16.msra.mxu0 %v3671
    %4112 = vmatprep.subr.bf16.mxu0 0
    %4113 = vmatpush1.bf16.msra.mxu0 %v3673
    %4114 = vmatprep.subr.bf16.mxu0 0
    %4115 = vmatpush1.bf16.msra.mxu0 %v3675
    %4116 = vmatprep.subr.bf16.mxu0 0
    %4117 = vmatpush1.bf16.msra.mxu0 %v3677
    %4118 = vmatprep.subr.bf16.mxu0 0
    %4119 = vmatpush1.bf16.msra.mxu0 %v3679
    %4120 = vmatprep.subr.bf16.mxu0 0
    %4121 = vmatpush1.bf16.msra.mxu0 %v3681
    %4122 = vmatprep.mubr.bf16.mxu0 %v3420
    %4123 = vmatmul.mubr.bf16.gmra.mrb[0].mxu0 %v3419
    %v4124 = vpop.f32.mrb[0].mxu0
    %v4125 = vadd.f32 %v4085, %v4124
    %v4126 = vpop.f32.mrb[0].mxu0
    %v4127 = vpop.f32.mrb[0].mxu0
    %v4128 = vpop.f32.mrb[0].mxu0
    %4129 = vdwg.mxu0
    %v4130 = vadd.f32 %v2585, %v4125
    %v4131 = vsel %vm200, %v4130, 0.0
    %4132 = vadd.xlane.f32.xlu0 %v4131
    %v4133 = vpop.xlane.xlu0 %4132
    %v4134 = vmul.f32 %v4133, %v250
    %v4135 = vsub.f32 %v4130, %v4134
    %v4136 = vmul.f32 %v4135, %v4135
    %v4137 = vsel %vm200, %v4136, 0.0
    %4138 = vadd.xlane.f32.xlu0 %v4137
    %v4139 = vpop.xlane.xlu0 %4138
    %v4140 = vmul.f32 %v4139, %v250
    %v4141 = vadd.f32 %v4140, 1e-05
    %v4142 = vrsqrt.pop %v4141
    %v4143 = vmul.f32 %v4135, %v4142
    %v4144 = vadd.f32 %v4143, 0.0
    %v4145 = vld [vmem:[#allocation8 + $0x48] sm:$0xf]
    %v4146 = vld [vmem:[#allocation8 + $0x4c] sm:$0xf]
    %v4147 = vld [vmem:[#allocation8 + $0x50] sm:$0xf]
    %v4148 = vld [vmem:[#allocation8 + $0x54] sm:$0xf]
    %v4149 = vld [vmem:[#allocation8 + $0x58] sm:$0xf]
    %v4150 = vld [vmem:[#allocation8 + $0x5c] sm:$0xf]
    %v4151 = vld [vmem:[#allocation8 + $0x60] sm:$0xf]
    %v4152 = vld [vmem:[#allocation8 + $0x64] sm:$0xf]
    %v4153 = vpack.c.bf16 %v4144, %v4144
    %v4154 = vld [vmem:[#allocation5 + $0xd] sm:$0x1]
    %v4155 = vlaneseq
    %v4156 = vshrl.u32 %v4155, 7
    %v4157 = vsub.s32 0, %v4156
    %v4158 = vrot.slane %v4154, %v4157
    %v4167 = vunpack.c.l.b16 %v4145
    %v4168 = vunpack.c.l.b16 %v4146
    %v4169 = vunpack.c.l.b16 %v4147
    %v4170 = vunpack.c.l.b16 %v4148
    %v4171 = vunpack.c.l.b16 %v4149
    %v4172 = vunpack.c.l.b16 %v4150
    %v4173 = vunpack.c.l.b16 %v4151
    %v4174 = vunpack.c.l.b16 %v4152
    %v4175 = vpack.c.b16 %v4168, %v4167
    %v4176 = vpack.c.b16 %v4170, %v4169
    %v4177 = vpack.c.b16 %v4172, %v4171
    %v4178 = vpack.c.b16 %v4174, %v4173
    %v4184 = vsel %vm200, %v4153, 0
    %4186 = vmatprep.subr.bf16.mxu0 0
    %4187 = vmatpush1.bf16.msra.mxu0 %v4175
    %4188 = vmatprep.subr.bf16.mxu0 0
    %4189 = vmatpush1.bf16.msra.mxu0 %v4176
    %4190 = vmatprep.subr.bf16.mxu0 0
    %4191 = vmatpush1.bf16.msra.mxu0 %v4177
    %4192 = vmatprep.subr.bf16.mxu0 0
    %4193 = vmatpush1.bf16.msra.mxu0 %v4178
    %4194 = vmatprep.subr.bf16.mxu0 0
    %4195 = vmatpush1.bf16.msra.mxu0 0
    %4196 = vmatprep.subr.bf16.mxu0 0
    %4197 = vmatpush1.bf16.msra.mxu0 0
    %4198 = vmatprep.subr.bf16.mxu0 0
    %4199 = vmatpush1.bf16.msra.mxu0 0
    %4200 = vmatprep.subr.bf16.mxu0 0
    %4201 = vmatpush1.bf16.msra.mxu0 0
    %4202 = vmatprep.subr.bf16.mxu0 0
    %4203 = vmatpush1.bf16.msra.mxu0 0
    %4204 = vmatprep.subr.bf16.mxu0 0
    %4205 = vmatpush1.bf16.msra.mxu0 0
    %4206 = vmatprep.subr.bf16.mxu0 0
    %4207 = vmatpush1.bf16.msra.mxu0 0
    %4208 = vmatprep.subr.bf16.mxu0 0
    %4209 = vmatpush1.bf16.msra.mxu0 0
    %4210 = vmatprep.subr.bf16.mxu0 0
    %4211 = vmatpush1.bf16.msra.mxu0 0
    %4212 = vmatprep.subr.bf16.mxu0 0
    %4213 = vmatpush1.bf16.msra.mxu0 0
    %4214 = vmatprep.subr.bf16.mxu0 0
    %4215 = vmatpush1.bf16.msra.mxu0 0
    %4216 = vmatprep.subr.bf16.mxu0 0
    %4217 = vmatpush1.bf16.msra.mxu0 0
    %4218 = vmatprep.mubr.bf16.mxu0 0
    %4219 = vmatmul.mubr.bf16.gmra.mrb[0].mxu0 %v4184
    %v4220 = vpop.f32.mrb[0].mxu0
    %v4221 = vadd.f32 %v4158, %v4220
    %v4222 = vpop.f32.mrb[0].mxu0
    %v4223 = vpop.f32.mrb[0].mxu0
    %v4224 = vpop.f32.mrb[0].mxu0
    %4225 = vdwg.mxu0
    %4226 = vst [vmem:[#allocation13] sm:$0xff] %v4221
    // Predicated region
    $region50: #{logic_transformer_forward.1} parent=1 // pred_check
      _
    $region51: #{logic_transformer_forward.1} parent=1 // pred_check_branch
      %4228 = sbr.rel (0) target = $region53
    $region52: #{logic_transformer_forward.1} parent=1 // pred_region
      %s4230 = ssub.s32 128, 128
      %4231 = vsyncadd [#allocation4], %s4230
      %s4233 = sshll.u32 [#allocation13], 4
      %s4234 = int_to_ptr.vmem [resolvable:$true] %s4233
      %4236 = dma.vmem_to_hbm [thread:$0]  %s4234, 128, %s6, [#allocation4]
    $region53: #{logic_transformer_forward.1} parent=1 // pred_fallthru
      _
    // Predicated region
    $region54: #{logic_transformer_forward.1} parent=1 // pred_check
      _
    $region55: #{logic_transformer_forward.1} parent=1 // pred_check_branch
      %4238 = sbr.rel (0) target = $region57
    $region56: #{logic_transformer_forward.1} parent=1 // pred_region
      %4239 = dma.done [#allocation4], 128
    $region57: #{logic_transformer_forward.1} parent=1 // pred_fallthru
      _
    %4240 = vsyncpa [#allocation3], 1
    %4241 = vsyncpa [#allocation6], 1
    %4242 = vsyncpa [#allocation9], 1
    %4243 = vsyncpa [#allocation12], 1
    %4244 = vsyncpa [#allocation4], 1

</llo_original>
